<compile_context>
chip_gen: v6e
topology: v6e:2x2x1
jax: 0.10.0
libtpu: 0.0.40
codegen_flags: <defaults>
</compile_context>

<pallas_src>
import functools

import jax
import jax.numpy as jnp
import numpy as np
from jax.experimental import pallas as pl
from jax.experimental.pallas import tpu as pltpu


# ----------------------------------------------------------------------------
# Constant one-hot matrices (host-built with numpy -> baked as jit constants).
# ----------------------------------------------------------------------------
def _pool_select_matrix(H, W):
    """(H*W, H*W//4): column (qy,qx) selects flat row p = (2*qy)*W + 2*qx."""
    Ho, Wo = H // 2, W // 2
    p = np.arange(H * W)
    py, px = p // W, p % W
    q_of_p = (py // 2) * Wo + (px // 2)
    is_topleft = ((py % 2) == 0) & ((px % 2) == 0)
    mat = (q_of_p[:, None] == np.arange(Ho * Wo)[None, :]) & is_topleft[:, None]
    return jnp.asarray(mat, dtype=jnp.float32)


def _upsample_matrix(h, w):
    """(h*w, 4*h*w): nearest-neighbour 2x upsample as a one-hot matmul."""
    H, W = 2 * h, 2 * w
    p = np.arange(H * W)
    py, px = p // W, p % W
    q_of_p = (py // 2) * w + (px // 2)
    mat = np.arange(h * w)[:, None] == q_of_p[None, :]
    return jnp.asarray(mat, dtype=jnp.float32)


# ----------------------------------------------------------------------------
# In-kernel building blocks. All values stay in the lane-dense (C, H*W) layout.
# ----------------------------------------------------------------------------
def _col_masks(H, W):
    """Lane masks that kill the wrapped column for the dx=-1 / dx=+1 taps."""
    col = jax.lax.broadcasted_iota(jnp.int32, (1, H * W), 1) % W
    not_left = (col != 0).astype(jnp.float32)
    not_right = (col != W - 1).astype(jnp.float32)
    return not_left, not_right


def _conv3x3_flat(x, w_ref, b_ref, *, H, W, relu, not_left, not_right):
    """3x3 'same' conv on a (Cin, H*W) activation.

    x:      (Cin, H*W)        f32
    w_ref:  (9, Cout, Cin)    f32, tap index = dy*3 + dx (HWIO tap order)
    b_ref:  (Cout, 1)         f32
    returns (Cout, H*W)       f32
    """
    Cin, HW = x.shape
    Cout = w_ref.shape[1]

    # Flattened zero rows above/below the image: W+1 zero lanes on each side
    # make every tap a static, in-range, lane-shifted slice.
    zpad = jnp.zeros((Cin, W + 1), jnp.float32)
    xp = jnp.concatenate([zpad, x, zpad], axis=1)        # (Cin, H*W + 2W + 2)

    acc = jnp.zeros((Cout, HW), jnp.float32)
    for dy in range(3):
        for dx in range(3):
            start = dy * W + dx                          # out[p] <- in[p+off]
            xt = xp[:, start:start + HW]
            if dx == 0:                                  # dx_off = -1
                xt = xt * not_left
            elif dx == 2:                                # dx_off = +1
                xt = xt * not_right
            acc = acc + jnp.dot(w_ref[dy * 3 + dx], xt,
                                preferred_element_type=jnp.float32)
    acc = acc + b_ref[...]                               # (Cout,1) lane bcast
    if relu:
        acc = jnp.maximum(acc, 0.0)
    return acc


def _maxpool2x2_flat(x, sel, *, H, W):
    """2x2 / stride-2 max pool: 3 lane-shift maxes + one one-hot select matmul."""
    C, HW = x.shape
    zpad = jnp.zeros((C, W + 1), jnp.float32)
    xp = jnp.concatenate([x, zpad], axis=1)              # guard for the p+W+1 slice
    m = jnp.maximum(jnp.maximum(xp[:, 0:HW], xp[:, 1:1 + HW]),
                    jnp.maximum(xp[:, W:W + HW], xp[:, W + 1:W + 1 + HW]))
    # Non-window-top-left columns of m hold junk; `sel` drops them.
    return jnp.dot(m, sel, preferred_element_type=jnp.float32)   # (C, HW//4)


def _upsample2x_flat(x, up):
    """Nearest 2x upsample as a single one-hot matmul: (C, h*w) -> (C, 4*h*w)."""
    return jnp.dot(x, up, preferred_element_type=jnp.float32)


# ----------------------------------------------------------------------------
# Fused forward kernel: one batch sample per grid step, everything in VMEM.
# ----------------------------------------------------------------------------
def _unet_kernel(x_ref, w1_ref, b1_ref, w2_ref, b2_ref, w3_ref, b3_ref,
                 w4_ref, b4_ref, sel_ref, up_ref, o_ref, *, H, W):
    x = x_ref[0]                                         # (Cin, H*W)
    h, w = H // 2, W // 2
    nl_hi, nr_hi = _col_masks(H, W)
    nl_lo, nr_lo = _col_masks(h, w)

    # Encoder
    t = _conv3x3_flat(x, w1_ref, b1_ref, H=H, W=W, relu=True,
                      not_left=nl_hi, not_right=nr_hi)           # ( 8, 256)
    t = _maxpool2x2_flat(t, sel_ref[...], H=H, W=W)              # ( 8,  64)
    t = _conv3x3_flat(t, w2_ref, b2_ref, H=h, W=w, relu=True,
                      not_left=nl_lo, not_right=nr_lo)           # (16,  64)

    # Decoder
    t = _upsample2x_flat(t, up_ref[...])                          # (16, 256)
    t = _conv3x3_flat(t, w3_ref, b3_ref, H=H, W=W, relu=True,
                      not_left=nl_hi, not_right=nr_hi)           # ( 8, 256)
    t = _conv3x3_flat(t, w4_ref, b4_ref, H=H, W=W, relu=False,
                      not_left=nl_hi, not_right=nr_hi)           # ( 4, 256)

    o_ref[0] = t                                         # lane-dense (Cout, H*W)


# ----------------------------------------------------------------------------
# Wrapper: NCHW API, no transposes, single pallas_call over a batch grid.
# ----------------------------------------------------------------------------
def unet_forward(params, x_nchw):
    N, Cin, H, W = x_nchw.shape
    assert H % 2 == 0 and W % 2 == 0, "pool/upsample assume even H, W"
    x = x_nchw.reshape(N, Cin, H * W).astype(jnp.float32)    # free NCHW view

    def taps(wh):       # HWIO (3,3,Cin,Cout) -> (9, Cout, Cin), tap = dy*3+dx
        cin, cout = wh.shape[2], wh.shape[3]
        return jnp.transpose(wh.reshape(9, cin, cout), (0, 2, 1)).astype(jnp.float32)

    def col_bias(b):
        return b.reshape(-1, 1).astype(jnp.float32)

    w1, b1 = params["enc1"]
    w2, b2 = params["enc2"]
    w3, b3 = params["dec1"]
    w4, b4 = params["dec2"]
    Cout = w4.shape[-1]

    sel = _pool_select_matrix(H, W)            # (H*W, H*W//4)
    up = _upsample_matrix(H // 2, W // 2)      # (H*W//4, H*W)

    args = (x,
            taps(w1), col_bias(b1), taps(w2), col_bias(b2),
            taps(w3), col_bias(b3), taps(w4), col_bias(b4),
            sel, up)

    def resident(a):    # full-block, constant-index: stays resident in VMEM
        nd = a.ndim
        return pl.BlockSpec(a.shape, lambda n: (0,) * nd)

    in_specs = [pl.BlockSpec((1, Cin, H * W), lambda n: (n, 0, 0))]
    in_specs += [resident(a) for a in args[1:]]

    kernel = functools.partial(_unet_kernel, H=H, W=W)

    out = pl.pallas_call(
        kernel,
        out_shape=jax.ShapeDtypeStruct((N, Cout, H * W), jnp.float32),
        grid=(N,),
        in_specs=in_specs,
        out_specs=pl.BlockSpec((1, Cout, H * W), lambda n: (n, 0, 0)),
        compiler_params=pltpu.CompilerParams(
            dimension_semantics=("parallel",)),
    )(*args)

    return out.reshape(N, Cout, H, W)          # free contiguous reshape to NCHW


# ----------------------------------------------------------------------------
# Pure-JAX reference (correctness sanity check).
# ----------------------------------------------------------------------------
def unet_reference(params, x_nchw):
    x = jnp.transpose(x_nchw, (0, 2, 3, 1)).astype(jnp.float32)

    def conv(h, w, b, relu):
        y = jax.lax.conv_general_dilated(
            h, w, window_strides=(1, 1), padding="SAME",
            dimension_numbers=("NHWC", "HWIO", "NHWC"))
        y = y + b.reshape(1, 1, 1, -1)
        return jnp.maximum(y, 0.0) if relu else y

    h = conv(x, *params["enc1"], True)
    h = jax.lax.reduce_window(h, -jnp.inf, jax.lax.max,
                              (1, 2, 2, 1), (1, 2, 2, 1), "VALID")
    h = conv(h, *params["enc2"], True)
    h = jnp.repeat(jnp.repeat(h, 2, axis=1), 2, axis=2)
    h = conv(h, *params["dec1"], True)
    h = conv(h, *params["dec2"], False)
    return jnp.transpose(h, (0, 3, 1, 2))


# ----------------------------------------------------------------------------
# Parameters (deterministic synthetic init).
# ----------------------------------------------------------------------------
def init_params(key):
    def conv_params(k, cin, cout):
        kw, kb = jax.random.split(k)
        w = 0.1 * jax.random.normal(kw, (3, 3, cin, cout), jnp.float32)
        b = 0.1 * jax.random.normal(kb, (cout,), jnp.float32)
        return w, b

    k1, k2, k3, k4 = jax.random.split(key, 4)
    return {
        "enc1": conv_params(k1, 4, 8),
        "enc2": conv_params(k2, 8, 16),
        "dec1": conv_params(k3, 16, 8),
        "dec2": conv_params(k4, 8, 4),
    }


if __name__ == "__main__":
    key = jax.random.PRNGKey(0)
    k_param, k_input = jax.random.split(key)

    params = init_params(k_param)
    x = jax.random.normal(k_input, (2, 4, 16, 16), jnp.float32)   # NCHW

    y = jax.jit(unet_forward)(params, x)
    y = jax.block_until_ready(y)

    assert y.shape == (2, 4, 16, 16), y.shape
    assert bool(jnp.all(jnp.isfinite(y)))

    y_ref = jax.jit(unet_reference)(params, x)
    err = float(jnp.max(jnp.abs(y - y_ref)))
    assert err < 1e-4, err

    print("KERNEL_OK")
</pallas_src>

<mosaic_0001>
module attributes {stable_mosaic.version = 11 : i64} {
  func.func @_unet_kernel(%arg0: i32, %arg1: memref<1x4x256xf32, #tpu.memory_space<vmem>>, %arg2: memref<9x8x4xf32, #tpu.memory_space<vmem>>, %arg3: memref<8x1xf32, #tpu.memory_space<vmem>>, %arg4: memref<9x16x8xf32, #tpu.memory_space<vmem>>, %arg5: memref<16x1xf32, #tpu.memory_space<vmem>>, %arg6: memref<9x8x16xf32, #tpu.memory_space<vmem>>, %arg7: memref<8x1xf32, #tpu.memory_space<vmem>>, %arg8: memref<9x4x8xf32, #tpu.memory_space<vmem>>, %arg9: memref<4x1xf32, #tpu.memory_space<vmem>>, %arg10: memref<256x64xf32, #tpu.memory_space<vmem>>, %arg11: memref<64x256xf32, #tpu.memory_space<vmem>>, %arg12: memref<1x4x256xf32, #tpu.memory_space<vmem>>) attributes {dimension_semantics = [#tpu.dimension_semantics<parallel>], iteration_bounds = array<i64: 2>, scalar_prefetch = 0 : i64, scratch_operands = 0 : i64, tpu.core_type = #tpu.core_type<tc>, window_params = [{transform_indices = @transform_0, window_bounds = array<i64: 1, 4, 256>}, {pipeline_mode = #tpu.pipeline_mode<synchronous>, transform_indices = @transform_1, window_bounds = array<i64: 9, 8, 4>}, {pipeline_mode = #tpu.pipeline_mode<synchronous>, transform_indices = @transform_2, window_bounds = array<i64: 8, 1>}, {pipeline_mode = #tpu.pipeline_mode<synchronous>, transform_indices = @transform_3, window_bounds = array<i64: 9, 16, 8>}, {pipeline_mode = #tpu.pipeline_mode<synchronous>, transform_indices = @transform_4, window_bounds = array<i64: 16, 1>}, {pipeline_mode = #tpu.pipeline_mode<synchronous>, transform_indices = @transform_5, window_bounds = array<i64: 9, 8, 16>}, {pipeline_mode = #tpu.pipeline_mode<synchronous>, transform_indices = @transform_6, window_bounds = array<i64: 8, 1>}, {pipeline_mode = #tpu.pipeline_mode<synchronous>, transform_indices = @transform_7, window_bounds = array<i64: 9, 4, 8>}, {pipeline_mode = #tpu.pipeline_mode<synchronous>, transform_indices = @transform_8, window_bounds = array<i64: 4, 1>}, {pipeline_mode = #tpu.pipeline_mode<synchronous>, transform_indices = @transform_9, window_bounds = array<i64: 256, 64>}, {pipeline_mode = #tpu.pipeline_mode<synchronous>, transform_indices = @transform_10, window_bounds = array<i64: 64, 256>}, {transform_indices = @transform_11, window_bounds = array<i64: 1, 4, 256>}]} {
    %c0 = arith.constant 0 : index
    %c0_0 = arith.constant 0 : index
    %c0_1 = arith.constant 0 : index
    %0 = vector.load %arg1[%c0, %c0_0, %c0_1] : memref<1x4x256xf32, #tpu.memory_space<vmem>>, vector<1x4x256xf32>
    %1 = vector.shape_cast %0 : vector<1x4x256xf32> to vector<4x256xf32>
    %2 = tpu.iota {dimensions = array<i32: 1>} : vector<1x256xi32>
    %c16_i32 = arith.constant 16 : i32
    %c0_i32 = arith.constant 0 : i32
    %3 = arith.cmpi eq, %c16_i32, %c0_i32 : i32
    %c1_i32 = arith.constant 1 : i32
    %4 = arith.select %3, %c1_i32, %c16_i32 : i32
    %5 = vector.broadcast %4 : i32 to vector<1x256xi32>
    %6 = arith.remsi %2, %5 : vector<1x256xi32>
    %c0_i32_2 = arith.constant 0 : i32
    %7 = vector.broadcast %c0_i32_2 : i32 to vector<1x256xi32>
    %8 = arith.cmpi ne, %6, %7 : vector<1x256xi32>
    %c0_i32_3 = arith.constant 0 : i32
    %9 = vector.broadcast %c0_i32_3 : i32 to vector<1x256xi32>
    %10 = arith.cmpi slt, %6, %9 : vector<1x256xi32>
    %c0_i32_4 = arith.constant 0 : i32
    %11 = arith.cmpi slt, %4, %c0_i32_4 : i32
    %12 = vector.broadcast %11 : i1 to vector<1x256xi1>
    %13 = vector.broadcast %12 : vector<1x256xi1> to vector<1x256xi1>
    %14 = arith.xori %10, %13 : vector<1x256xi1>
    %15 = arith.andi %14, %8 : vector<1x256xi1>
    %16 = vector.broadcast %4 : i32 to vector<1x256xi32>
    %17 = arith.addi %6, %16 : vector<1x256xi32>
    %18 = arith.select %15, %17, %6 : vector<1x256xi1>, vector<1x256xi32>
    %c0_i32_5 = arith.constant 0 : i32
    %19 = vector.broadcast %c0_i32_5 : i32 to vector<1x256xi32>
    %20 = arith.cmpi ne, %18, %19 : vector<1x256xi32>
    %21 = arith.extui %20 : vector<1x256xi1> to vector<1x256xi32>
    %22 = arith.sitofp %21 : vector<1x256xi32> to vector<1x256xf32>
    %c15_i32 = arith.constant 15 : i32
    %23 = vector.broadcast %c15_i32 : i32 to vector<1x256xi32>
    %24 = arith.cmpi ne, %18, %23 : vector<1x256xi32>
    %25 = arith.extui %24 : vector<1x256xi1> to vector<1x256xi32>
    %26 = arith.sitofp %25 : vector<1x256xi32> to vector<1x256xf32>
    %27 = tpu.iota {dimensions = array<i32: 1>} : vector<1x64xi32>
    %c8_i32 = arith.constant 8 : i32
    %c0_i32_6 = arith.constant 0 : i32
    %28 = arith.cmpi eq, %c8_i32, %c0_i32_6 : i32
    %c1_i32_7 = arith.constant 1 : i32
    %29 = arith.select %28, %c1_i32_7, %c8_i32 : i32
    %30 = vector.broadcast %29 : i32 to vector<1x64xi32>
    %31 = arith.remsi %27, %30 : vector<1x64xi32>
    %c0_i32_8 = arith.constant 0 : i32
    %32 = vector.broadcast %c0_i32_8 : i32 to vector<1x64xi32>
    %33 = arith.cmpi ne, %31, %32 : vector<1x64xi32>
    %c0_i32_9 = arith.constant 0 : i32
    %34 = vector.broadcast %c0_i32_9 : i32 to vector<1x64xi32>
    %35 = arith.cmpi slt, %31, %34 : vector<1x64xi32>
    %c0_i32_10 = arith.constant 0 : i32
    %36 = arith.cmpi slt, %29, %c0_i32_10 : i32
    %37 = vector.broadcast %36 : i1 to vector<1x64xi1>
    %38 = vector.broadcast %37 : vector<1x64xi1> to vector<1x64xi1>
    %39 = arith.xori %35, %38 : vector<1x64xi1>
    %40 = arith.andi %39, %33 : vector<1x64xi1>
    %41 = vector.broadcast %29 : i32 to vector<1x64xi32>
    %42 = arith.addi %31, %41 : vector<1x64xi32>
    %43 = arith.select %40, %42, %31 : vector<1x64xi1>, vector<1x64xi32>
    %c0_i32_11 = arith.constant 0 : i32
    %44 = vector.broadcast %c0_i32_11 : i32 to vector<1x64xi32>
    %45 = arith.cmpi ne, %43, %44 : vector<1x64xi32>
    %46 = arith.extui %45 : vector<1x64xi1> to vector<1x64xi32>
    %47 = arith.sitofp %46 : vector<1x64xi32> to vector<1x64xf32>
    %c7_i32 = arith.constant 7 : i32
    %48 = vector.broadcast %c7_i32 : i32 to vector<1x64xi32>
    %49 = arith.cmpi ne, %43, %48 : vector<1x64xi32>
    %50 = arith.extui %49 : vector<1x64xi1> to vector<1x64xi32>
    %51 = arith.sitofp %50 : vector<1x64xi32> to vector<1x64xf32>
    %cst = arith.constant 0.000000e+00 : f32
    %52 = vector.broadcast %cst : f32 to vector<4x17xf32>
    %53 = tpu.concatenate %52, %1, %52 in 1 : vector<4x17xf32>, vector<4x256xf32>, vector<4x17xf32> -> vector<4x290xf32>
    %cst_12 = arith.constant 0.000000e+00 : f32
    %54 = vector.broadcast %cst_12 : f32 to vector<8x256xf32>
    %55 = vector.extract_strided_slice %53 {offsets = [0, 0], sizes = [4, 256], strides = [1, 1]} : vector<4x290xf32> to vector<4x256xf32>
    %56 = vector.broadcast %22 : vector<1x256xf32> to vector<4x256xf32>
    %57 = arith.mulf %55, %56 : vector<4x256xf32>
    %c0_13 = arith.constant 0 : index
    %c0_14 = arith.constant 0 : index
    %c0_15 = arith.constant 0 : index
    %58 = vector.load %arg2[%c0_13, %c0_14, %c0_15] : memref<9x8x4xf32, #tpu.memory_space<vmem>>, vector<1x8x4xf32>
    %59 = vector.shape_cast %58 : vector<1x8x4xf32> to vector<8x4xf32>
    %cst_16 = arith.constant dense<0.000000e+00> : vector<8x256xf32>
    %60 = tpu.matmul %59, %57, %cst_16 {dimension_numbers = #tpu.dot_dimension_numbers<[1], [0], [0], [1], [0, 0, 1, 1], [], []>} : vector<8x4xf32>, vector<4x256xf32>, vector<8x256xf32> -> vector<8x256xf32>
    %61 = arith.addf %54, %60 : vector<8x256xf32>
    %62 = vector.extract_strided_slice %53 {offsets = [0, 1], sizes = [4, 256], strides = [1, 1]} : vector<4x290xf32> to vector<4x256xf32>
    %c1 = arith.constant 1 : index
    %c0_17 = arith.constant 0 : index
    %c0_18 = arith.constant 0 : index
    %63 = vector.load %arg2[%c1, %c0_17, %c0_18] : memref<9x8x4xf32, #tpu.memory_space<vmem>>, vector<1x8x4xf32>
    %64 = vector.shape_cast %63 : vector<1x8x4xf32> to vector<8x4xf32>
    %cst_19 = arith.constant dense<0.000000e+00> : vector<8x256xf32>
    %65 = tpu.matmul %64, %62, %cst_19 {dimension_numbers = #tpu.dot_dimension_numbers<[1], [0], [0], [1], [0, 0, 1, 1], [], []>} : vector<8x4xf32>, vector<4x256xf32>, vector<8x256xf32> -> vector<8x256xf32>
    %66 = arith.addf %61, %65 : vector<8x256xf32>
    %67 = vector.extract_strided_slice %53 {offsets = [0, 2], sizes = [4, 256], strides = [1, 1]} : vector<4x290xf32> to vector<4x256xf32>
    %68 = vector.broadcast %26 : vector<1x256xf32> to vector<4x256xf32>
    %69 = arith.mulf %67, %68 : vector<4x256xf32>
    %c2 = arith.constant 2 : index
    %c0_20 = arith.constant 0 : index
    %c0_21 = arith.constant 0 : index
    %70 = vector.load %arg2[%c2, %c0_20, %c0_21] : memref<9x8x4xf32, #tpu.memory_space<vmem>>, vector<1x8x4xf32>
    %71 = vector.shape_cast %70 : vector<1x8x4xf32> to vector<8x4xf32>
    %cst_22 = arith.constant dense<0.000000e+00> : vector<8x256xf32>
    %72 = tpu.matmul %71, %69, %cst_22 {dimension_numbers = #tpu.dot_dimension_numbers<[1], [0], [0], [1], [0, 0, 1, 1], [], []>} : vector<8x4xf32>, vector<4x256xf32>, vector<8x256xf32> -> vector<8x256xf32>
    %73 = arith.addf %66, %72 : vector<8x256xf32>
    %74 = vector.extract_strided_slice %53 {offsets = [0, 16], sizes = [4, 256], strides = [1, 1]} : vector<4x290xf32> to vector<4x256xf32>
    %75 = vector.broadcast %22 : vector<1x256xf32> to vector<4x256xf32>
    %76 = arith.mulf %74, %75 : vector<4x256xf32>
    %c3 = arith.constant 3 : index
    %c0_23 = arith.constant 0 : index
    %c0_24 = arith.constant 0 : index
    %77 = vector.load %arg2[%c3, %c0_23, %c0_24] : memref<9x8x4xf32, #tpu.memory_space<vmem>>, vector<1x8x4xf32>
    %78 = vector.shape_cast %77 : vector<1x8x4xf32> to vector<8x4xf32>
    %cst_25 = arith.constant dense<0.000000e+00> : vector<8x256xf32>
    %79 = tpu.matmul %78, %76, %cst_25 {dimension_numbers = #tpu.dot_dimension_numbers<[1], [0], [0], [1], [0, 0, 1, 1], [], []>} : vector<8x4xf32>, vector<4x256xf32>, vector<8x256xf32> -> vector<8x256xf32>
    %80 = arith.addf %73, %79 : vector<8x256xf32>
    %81 = vector.extract_strided_slice %53 {offsets = [0, 17], sizes = [4, 256], strides = [1, 1]} : vector<4x290xf32> to vector<4x256xf32>
    %c4 = arith.constant 4 : index
    %c0_26 = arith.constant 0 : index
    %c0_27 = arith.constant 0 : index
    %82 = vector.load %arg2[%c4, %c0_26, %c0_27] : memref<9x8x4xf32, #tpu.memory_space<vmem>>, vector<1x8x4xf32>
    %83 = vector.shape_cast %82 : vector<1x8x4xf32> to vector<8x4xf32>
    %cst_28 = arith.constant dense<0.000000e+00> : vector<8x256xf32>
    %84 = tpu.matmul %83, %81, %cst_28 {dimension_numbers = #tpu.dot_dimension_numbers<[1], [0], [0], [1], [0, 0, 1, 1], [], []>} : vector<8x4xf32>, vector<4x256xf32>, vector<8x256xf32> -> vector<8x256xf32>
    %85 = arith.addf %80, %84 : vector<8x256xf32>
    %86 = vector.extract_strided_slice %53 {offsets = [0, 18], sizes = [4, 256], strides = [1, 1]} : vector<4x290xf32> to vector<4x256xf32>
    %87 = vector.broadcast %26 : vector<1x256xf32> to vector<4x256xf32>
    %88 = arith.mulf %86, %87 : vector<4x256xf32>
    %c5 = arith.constant 5 : index
    %c0_29 = arith.constant 0 : index
    %c0_30 = arith.constant 0 : index
    %89 = vector.load %arg2[%c5, %c0_29, %c0_30] : memref<9x8x4xf32, #tpu.memory_space<vmem>>, vector<1x8x4xf32>
    %90 = vector.shape_cast %89 : vector<1x8x4xf32> to vector<8x4xf32>
    %cst_31 = arith.constant dense<0.000000e+00> : vector<8x256xf32>
    %91 = tpu.matmul %90, %88, %cst_31 {dimension_numbers = #tpu.dot_dimension_numbers<[1], [0], [0], [1], [0, 0, 1, 1], [], []>} : vector<8x4xf32>, vector<4x256xf32>, vector<8x256xf32> -> vector<8x256xf32>
    %92 = arith.addf %85, %91 : vector<8x256xf32>
    %93 = vector.extract_strided_slice %53 {offsets = [0, 32], sizes = [4, 256], strides = [1, 1]} : vector<4x290xf32> to vector<4x256xf32>
    %94 = vector.broadcast %22 : vector<1x256xf32> to vector<4x256xf32>
    %95 = arith.mulf %93, %94 : vector<4x256xf32>
    %c6 = arith.constant 6 : index
    %c0_32 = arith.constant 0 : index
    %c0_33 = arith.constant 0 : index
    %96 = vector.load %arg2[%c6, %c0_32, %c0_33] : memref<9x8x4xf32, #tpu.memory_space<vmem>>, vector<1x8x4xf32>
    %97 = vector.shape_cast %96 : vector<1x8x4xf32> to vector<8x4xf32>
    %cst_34 = arith.constant dense<0.000000e+00> : vector<8x256xf32>
    %98 = tpu.matmul %97, %95, %cst_34 {dimension_numbers = #tpu.dot_dimension_numbers<[1], [0], [0], [1], [0, 0, 1, 1], [], []>} : vector<8x4xf32>, vector<4x256xf32>, vector<8x256xf32> -> vector<8x256xf32>
    %99 = arith.addf %92, %98 : vector<8x256xf32>
    %100 = vector.extract_strided_slice %53 {offsets = [0, 33], sizes = [4, 256], strides = [1, 1]} : vector<4x290xf32> to vector<4x256xf32>
    %c7 = arith.constant 7 : index
    %c0_35 = arith.constant 0 : index
    %c0_36 = arith.constant 0 : index
    %101 = vector.load %arg2[%c7, %c0_35, %c0_36] : memref<9x8x4xf32, #tpu.memory_space<vmem>>, vector<1x8x4xf32>
    %102 = vector.shape_cast %101 : vector<1x8x4xf32> to vector<8x4xf32>
    %cst_37 = arith.constant dense<0.000000e+00> : vector<8x256xf32>
    %103 = tpu.matmul %102, %100, %cst_37 {dimension_numbers = #tpu.dot_dimension_numbers<[1], [0], [0], [1], [0, 0, 1, 1], [], []>} : vector<8x4xf32>, vector<4x256xf32>, vector<8x256xf32> -> vector<8x256xf32>
    %104 = arith.addf %99, %103 : vector<8x256xf32>
    %105 = vector.extract_strided_slice %53 {offsets = [0, 34], sizes = [4, 256], strides = [1, 1]} : vector<4x290xf32> to vector<4x256xf32>
    %106 = vector.broadcast %26 : vector<1x256xf32> to vector<4x256xf32>
    %107 = arith.mulf %105, %106 : vector<4x256xf32>
    %c8 = arith.constant 8 : index
    %c0_38 = arith.constant 0 : index
    %c0_39 = arith.constant 0 : index
    %108 = vector.load %arg2[%c8, %c0_38, %c0_39] : memref<9x8x4xf32, #tpu.memory_space<vmem>>, vector<1x8x4xf32>
    %109 = vector.shape_cast %108 : vector<1x8x4xf32> to vector<8x4xf32>
    %cst_40 = arith.constant dense<0.000000e+00> : vector<8x256xf32>
    %110 = tpu.matmul %109, %107, %cst_40 {dimension_numbers = #tpu.dot_dimension_numbers<[1], [0], [0], [1], [0, 0, 1, 1], [], []>} : vector<8x4xf32>, vector<4x256xf32>, vector<8x256xf32> -> vector<8x256xf32>
    %111 = arith.addf %104, %110 : vector<8x256xf32>
    %c0_41 = arith.constant 0 : index
    %c0_42 = arith.constant 0 : index
    %112 = vector.load %arg3[%c0_41, %c0_42] : memref<8x1xf32, #tpu.memory_space<vmem>>, vector<8x1xf32>
    %113 = vector.broadcast %112 : vector<8x1xf32> to vector<8x256xf32>
    %114 = arith.addf %111, %113 : vector<8x256xf32>
    %cst_43 = arith.constant 0.000000e+00 : f32
    %115 = vector.broadcast %cst_43 : f32 to vector<8x256xf32>
    %116 = arith.maximumf %114, %115 : vector<8x256xf32>
    %c0_44 = arith.constant 0 : index
    %c0_45 = arith.constant 0 : index
    %117 = vector.load %arg10[%c0_44, %c0_45] : memref<256x64xf32, #tpu.memory_space<vmem>>, vector<256x64xf32>
    %cst_46 = arith.constant 0.000000e+00 : f32
    %118 = vector.broadcast %cst_46 : f32 to vector<8x17xf32>
    %119 = tpu.concatenate %116, %118 in 1 : vector<8x256xf32>, vector<8x17xf32> -> vector<8x273xf32>
    %120 = vector.extract_strided_slice %119 {offsets = [0, 0], sizes = [8, 256], strides = [1, 1]} : vector<8x273xf32> to vector<8x256xf32>
    %121 = vector.extract_strided_slice %119 {offsets = [0, 1], sizes = [8, 256], strides = [1, 1]} : vector<8x273xf32> to vector<8x256xf32>
    %122 = arith.maximumf %120, %121 : vector<8x256xf32>
    %123 = vector.extract_strided_slice %119 {offsets = [0, 16], sizes = [8, 256], strides = [1, 1]} : vector<8x273xf32> to vector<8x256xf32>
    %124 = vector.extract_strided_slice %119 {offsets = [0, 17], sizes = [8, 256], strides = [1, 1]} : vector<8x273xf32> to vector<8x256xf32>
    %125 = arith.maximumf %123, %124 : vector<8x256xf32>
    %126 = arith.maximumf %122, %125 : vector<8x256xf32>
    %cst_47 = arith.constant dense<0.000000e+00> : vector<8x64xf32>
    %127 = tpu.matmul %126, %117, %cst_47 {dimension_numbers = #tpu.dot_dimension_numbers<[1], [0], [0], [1], [0, 0, 1, 1], [], []>} : vector<8x256xf32>, vector<256x64xf32>, vector<8x64xf32> -> vector<8x64xf32>
    %cst_48 = arith.constant 0.000000e+00 : f32
    %128 = vector.broadcast %cst_48 : f32 to vector<8x9xf32>
    %129 = tpu.concatenate %128, %127, %128 in 1 : vector<8x9xf32>, vector<8x64xf32>, vector<8x9xf32> -> vector<8x82xf32>
    %cst_49 = arith.constant 0.000000e+00 : f32
    %130 = vector.broadcast %cst_49 : f32 to vector<16x64xf32>
    %131 = vector.extract_strided_slice %129 {offsets = [0, 0], sizes = [8, 64], strides = [1, 1]} : vector<8x82xf32> to vector<8x64xf32>
    %132 = vector.broadcast %47 : vector<1x64xf32> to vector<8x64xf32>
    %133 = arith.mulf %131, %132 : vector<8x64xf32>
    %c0_50 = arith.constant 0 : index
    %c0_51 = arith.constant 0 : index
    %c0_52 = arith.constant 0 : index
    %134 = vector.load %arg4[%c0_50, %c0_51, %c0_52] : memref<9x16x8xf32, #tpu.memory_space<vmem>>, vector<1x16x8xf32>
    %135 = vector.shape_cast %134 : vector<1x16x8xf32> to vector<16x8xf32>
    %cst_53 = arith.constant dense<0.000000e+00> : vector<16x64xf32>
    %136 = tpu.matmul %135, %133, %cst_53 {dimension_numbers = #tpu.dot_dimension_numbers<[1], [0], [0], [1], [0, 0, 1, 1], [], []>} : vector<16x8xf32>, vector<8x64xf32>, vector<16x64xf32> -> vector<16x64xf32>
    %137 = arith.addf %130, %136 : vector<16x64xf32>
    %138 = vector.extract_strided_slice %129 {offsets = [0, 1], sizes = [8, 64], strides = [1, 1]} : vector<8x82xf32> to vector<8x64xf32>
    %c1_54 = arith.constant 1 : index
    %c0_55 = arith.constant 0 : index
    %c0_56 = arith.constant 0 : index
    %139 = vector.load %arg4[%c1_54, %c0_55, %c0_56] : memref<9x16x8xf32, #tpu.memory_space<vmem>>, vector<1x16x8xf32>
    %140 = vector.shape_cast %139 : vector<1x16x8xf32> to vector<16x8xf32>
    %cst_57 = arith.constant dense<0.000000e+00> : vector<16x64xf32>
    %141 = tpu.matmul %140, %138, %cst_57 {dimension_numbers = #tpu.dot_dimension_numbers<[1], [0], [0], [1], [0, 0, 1, 1], [], []>} : vector<16x8xf32>, vector<8x64xf32>, vector<16x64xf32> -> vector<16x64xf32>
    %142 = arith.addf %137, %141 : vector<16x64xf32>
    %143 = vector.extract_strided_slice %129 {offsets = [0, 2], sizes = [8, 64], strides = [1, 1]} : vector<8x82xf32> to vector<8x64xf32>
    %144 = vector.broadcast %51 : vector<1x64xf32> to vector<8x64xf32>
    %145 = arith.mulf %143, %144 : vector<8x64xf32>
    %c2_58 = arith.constant 2 : index
    %c0_59 = arith.constant 0 : index
    %c0_60 = arith.constant 0 : index
    %146 = vector.load %arg4[%c2_58, %c0_59, %c0_60] : memref<9x16x8xf32, #tpu.memory_space<vmem>>, vector<1x16x8xf32>
    %147 = vector.shape_cast %146 : vector<1x16x8xf32> to vector<16x8xf32>
    %cst_61 = arith.constant dense<0.000000e+00> : vector<16x64xf32>
    %148 = tpu.matmul %147, %145, %cst_61 {dimension_numbers = #tpu.dot_dimension_numbers<[1], [0], [0], [1], [0, 0, 1, 1], [], []>} : vector<16x8xf32>, vector<8x64xf32>, vector<16x64xf32> -> vector<16x64xf32>
    %149 = arith.addf %142, %148 : vector<16x64xf32>
    %150 = vector.extract_strided_slice %129 {offsets = [0, 8], sizes = [8, 64], strides = [1, 1]} : vector<8x82xf32> to vector<8x64xf32>
    %151 = vector.broadcast %47 : vector<1x64xf32> to vector<8x64xf32>
    %152 = arith.mulf %150, %151 : vector<8x64xf32>
    %c3_62 = arith.constant 3 : index
    %c0_63 = arith.constant 0 : index
    %c0_64 = arith.constant 0 : index
    %153 = vector.load %arg4[%c3_62, %c0_63, %c0_64] : memref<9x16x8xf32, #tpu.memory_space<vmem>>, vector<1x16x8xf32>
    %154 = vector.shape_cast %153 : vector<1x16x8xf32> to vector<16x8xf32>
    %cst_65 = arith.constant dense<0.000000e+00> : vector<16x64xf32>
    %155 = tpu.matmul %154, %152, %cst_65 {dimension_numbers = #tpu.dot_dimension_numbers<[1], [0], [0], [1], [0, 0, 1, 1], [], []>} : vector<16x8xf32>, vector<8x64xf32>, vector<16x64xf32> -> vector<16x64xf32>
    %156 = arith.addf %149, %155 : vector<16x64xf32>
    %157 = vector.extract_strided_slice %129 {offsets = [0, 9], sizes = [8, 64], strides = [1, 1]} : vector<8x82xf32> to vector<8x64xf32>
    %c4_66 = arith.constant 4 : index
    %c0_67 = arith.constant 0 : index
    %c0_68 = arith.constant 0 : index
    %158 = vector.load %arg4[%c4_66, %c0_67, %c0_68] : memref<9x16x8xf32, #tpu.memory_space<vmem>>, vector<1x16x8xf32>
    %159 = vector.shape_cast %158 : vector<1x16x8xf32> to vector<16x8xf32>
    %cst_69 = arith.constant dense<0.000000e+00> : vector<16x64xf32>
    %160 = tpu.matmul %159, %157, %cst_69 {dimension_numbers = #tpu.dot_dimension_numbers<[1], [0], [0], [1], [0, 0, 1, 1], [], []>} : vector<16x8xf32>, vector<8x64xf32>, vector<16x64xf32> -> vector<16x64xf32>
    %161 = arith.addf %156, %160 : vector<16x64xf32>
    %162 = vector.extract_strided_slice %129 {offsets = [0, 10], sizes = [8, 64], strides = [1, 1]} : vector<8x82xf32> to vector<8x64xf32>
    %163 = vector.broadcast %51 : vector<1x64xf32> to vector<8x64xf32>
    %164 = arith.mulf %162, %163 : vector<8x64xf32>
    %c5_70 = arith.constant 5 : index
    %c0_71 = arith.constant 0 : index
    %c0_72 = arith.constant 0 : index
    %165 = vector.load %arg4[%c5_70, %c0_71, %c0_72] : memref<9x16x8xf32, #tpu.memory_space<vmem>>, vector<1x16x8xf32>
    %166 = vector.shape_cast %165 : vector<1x16x8xf32> to vector<16x8xf32>
    %cst_73 = arith.constant dense<0.000000e+00> : vector<16x64xf32>
    %167 = tpu.matmul %166, %164, %cst_73 {dimension_numbers = #tpu.dot_dimension_numbers<[1], [0], [0], [1], [0, 0, 1, 1], [], []>} : vector<16x8xf32>, vector<8x64xf32>, vector<16x64xf32> -> vector<16x64xf32>
    %168 = arith.addf %161, %167 : vector<16x64xf32>
    %169 = vector.extract_strided_slice %129 {offsets = [0, 16], sizes = [8, 64], strides = [1, 1]} : vector<8x82xf32> to vector<8x64xf32>
    %170 = vector.broadcast %47 : vector<1x64xf32> to vector<8x64xf32>
    %171 = arith.mulf %169, %170 : vector<8x64xf32>
    %c6_74 = arith.constant 6 : index
    %c0_75 = arith.constant 0 : index
    %c0_76 = arith.constant 0 : index
    %172 = vector.load %arg4[%c6_74, %c0_75, %c0_76] : memref<9x16x8xf32, #tpu.memory_space<vmem>>, vector<1x16x8xf32>
    %173 = vector.shape_cast %172 : vector<1x16x8xf32> to vector<16x8xf32>
    %cst_77 = arith.constant dense<0.000000e+00> : vector<16x64xf32>
    %174 = tpu.matmul %173, %171, %cst_77 {dimension_numbers = #tpu.dot_dimension_numbers<[1], [0], [0], [1], [0, 0, 1, 1], [], []>} : vector<16x8xf32>, vector<8x64xf32>, vector<16x64xf32> -> vector<16x64xf32>
    %175 = arith.addf %168, %174 : vector<16x64xf32>
    %176 = vector.extract_strided_slice %129 {offsets = [0, 17], sizes = [8, 64], strides = [1, 1]} : vector<8x82xf32> to vector<8x64xf32>
    %c7_78 = arith.constant 7 : index
    %c0_79 = arith.constant 0 : index
    %c0_80 = arith.constant 0 : index
    %177 = vector.load %arg4[%c7_78, %c0_79, %c0_80] : memref<9x16x8xf32, #tpu.memory_space<vmem>>, vector<1x16x8xf32>
    %178 = vector.shape_cast %177 : vector<1x16x8xf32> to vector<16x8xf32>
    %cst_81 = arith.constant dense<0.000000e+00> : vector<16x64xf32>
    %179 = tpu.matmul %178, %176, %cst_81 {dimension_numbers = #tpu.dot_dimension_numbers<[1], [0], [0], [1], [0, 0, 1, 1], [], []>} : vector<16x8xf32>, vector<8x64xf32>, vector<16x64xf32> -> vector<16x64xf32>
    %180 = arith.addf %175, %179 : vector<16x64xf32>
    %181 = vector.extract_strided_slice %129 {offsets = [0, 18], sizes = [8, 64], strides = [1, 1]} : vector<8x82xf32> to vector<8x64xf32>
    %182 = vector.broadcast %51 : vector<1x64xf32> to vector<8x64xf32>
    %183 = arith.mulf %181, %182 : vector<8x64xf32>
    %c8_82 = arith.constant 8 : index
    %c0_83 = arith.constant 0 : index
    %c0_84 = arith.constant 0 : index
    %184 = vector.load %arg4[%c8_82, %c0_83, %c0_84] : memref<9x16x8xf32, #tpu.memory_space<vmem>>, vector<1x16x8xf32>
    %185 = vector.shape_cast %184 : vector<1x16x8xf32> to vector<16x8xf32>
    %cst_85 = arith.constant dense<0.000000e+00> : vector<16x64xf32>
    %186 = tpu.matmul %185, %183, %cst_85 {dimension_numbers = #tpu.dot_dimension_numbers<[1], [0], [0], [1], [0, 0, 1, 1], [], []>} : vector<16x8xf32>, vector<8x64xf32>, vector<16x64xf32> -> vector<16x64xf32>
    %187 = arith.addf %180, %186 : vector<16x64xf32>
    %c0_86 = arith.constant 0 : index
    %c0_87 = arith.constant 0 : index
    %188 = vector.load %arg5[%c0_86, %c0_87] : memref<16x1xf32, #tpu.memory_space<vmem>>, vector<16x1xf32>
    %189 = vector.broadcast %188 : vector<16x1xf32> to vector<16x64xf32>
    %190 = arith.addf %187, %189 : vector<16x64xf32>
    %cst_88 = arith.constant 0.000000e+00 : f32
    %191 = vector.broadcast %cst_88 : f32 to vector<16x64xf32>
    %192 = arith.maximumf %190, %191 : vector<16x64xf32>
    %c0_89 = arith.constant 0 : index
    %c0_90 = arith.constant 0 : index
    %193 = vector.load %arg11[%c0_89, %c0_90] : memref<64x256xf32, #tpu.memory_space<vmem>>, vector<64x256xf32>
    %cst_91 = arith.constant dense<0.000000e+00> : vector<16x256xf32>
    %194 = tpu.matmul %192, %193, %cst_91 {dimension_numbers = #tpu.dot_dimension_numbers<[1], [0], [0], [1], [0, 0, 1, 1], [], []>} : vector<16x64xf32>, vector<64x256xf32>, vector<16x256xf32> -> vector<16x256xf32>
    %cst_92 = arith.constant 0.000000e+00 : f32
    %195 = vector.broadcast %cst_92 : f32 to vector<16x17xf32>
    %196 = tpu.concatenate %195, %194, %195 in 1 : vector<16x17xf32>, vector<16x256xf32>, vector<16x17xf32> -> vector<16x290xf32>
    %cst_93 = arith.constant 0.000000e+00 : f32
    %197 = vector.broadcast %cst_93 : f32 to vector<8x256xf32>
    %198 = vector.extract_strided_slice %196 {offsets = [0, 0], sizes = [16, 256], strides = [1, 1]} : vector<16x290xf32> to vector<16x256xf32>
    %199 = vector.broadcast %22 : vector<1x256xf32> to vector<16x256xf32>
    %200 = arith.mulf %198, %199 : vector<16x256xf32>
    %c0_94 = arith.constant 0 : index
    %c0_95 = arith.constant 0 : index
    %c0_96 = arith.constant 0 : index
    %201 = vector.load %arg6[%c0_94, %c0_95, %c0_96] : memref<9x8x16xf32, #tpu.memory_space<vmem>>, vector<1x8x16xf32>
    %202 = vector.shape_cast %201 : vector<1x8x16xf32> to vector<8x16xf32>
    %cst_97 = arith.constant dense<0.000000e+00> : vector<8x256xf32>
    %203 = tpu.matmul %202, %200, %cst_97 {dimension_numbers = #tpu.dot_dimension_numbers<[1], [0], [0], [1], [0, 0, 1, 1], [], []>} : vector<8x16xf32>, vector<16x256xf32>, vector<8x256xf32> -> vector<8x256xf32>
    %204 = arith.addf %197, %203 : vector<8x256xf32>
    %205 = vector.extract_strided_slice %196 {offsets = [0, 1], sizes = [16, 256], strides = [1, 1]} : vector<16x290xf32> to vector<16x256xf32>
    %c1_98 = arith.constant 1 : index
    %c0_99 = arith.constant 0 : index
    %c0_100 = arith.constant 0 : index
    %206 = vector.load %arg6[%c1_98, %c0_99, %c0_100] : memref<9x8x16xf32, #tpu.memory_space<vmem>>, vector<1x8x16xf32>
    %207 = vector.shape_cast %206 : vector<1x8x16xf32> to vector<8x16xf32>
    %cst_101 = arith.constant dense<0.000000e+00> : vector<8x256xf32>
    %208 = tpu.matmul %207, %205, %cst_101 {dimension_numbers = #tpu.dot_dimension_numbers<[1], [0], [0], [1], [0, 0, 1, 1], [], []>} : vector<8x16xf32>, vector<16x256xf32>, vector<8x256xf32> -> vector<8x256xf32>
    %209 = arith.addf %204, %208 : vector<8x256xf32>
    %210 = vector.extract_strided_slice %196 {offsets = [0, 2], sizes = [16, 256], strides = [1, 1]} : vector<16x290xf32> to vector<16x256xf32>
    %211 = vector.broadcast %26 : vector<1x256xf32> to vector<16x256xf32>
    %212 = arith.mulf %210, %211 : vector<16x256xf32>
    %c2_102 = arith.constant 2 : index
    %c0_103 = arith.constant 0 : index
    %c0_104 = arith.constant 0 : index
    %213 = vector.load %arg6[%c2_102, %c0_103, %c0_104] : memref<9x8x16xf32, #tpu.memory_space<vmem>>, vector<1x8x16xf32>
    %214 = vector.shape_cast %213 : vector<1x8x16xf32> to vector<8x16xf32>
    %cst_105 = arith.constant dense<0.000000e+00> : vector<8x256xf32>
    %215 = tpu.matmul %214, %212, %cst_105 {dimension_numbers = #tpu.dot_dimension_numbers<[1], [0], [0], [1], [0, 0, 1, 1], [], []>} : vector<8x16xf32>, vector<16x256xf32>, vector<8x256xf32> -> vector<8x256xf32>
    %216 = arith.addf %209, %215 : vector<8x256xf32>
    %217 = vector.extract_strided_slice %196 {offsets = [0, 16], sizes = [16, 256], strides = [1, 1]} : vector<16x290xf32> to vector<16x256xf32>
    %218 = vector.broadcast %22 : vector<1x256xf32> to vector<16x256xf32>
    %219 = arith.mulf %217, %218 : vector<16x256xf32>
    %c3_106 = arith.constant 3 : index
    %c0_107 = arith.constant 0 : index
    %c0_108 = arith.constant 0 : index
    %220 = vector.load %arg6[%c3_106, %c0_107, %c0_108] : memref<9x8x16xf32, #tpu.memory_space<vmem>>, vector<1x8x16xf32>
    %221 = vector.shape_cast %220 : vector<1x8x16xf32> to vector<8x16xf32>
    %cst_109 = arith.constant dense<0.000000e+00> : vector<8x256xf32>
    %222 = tpu.matmul %221, %219, %cst_109 {dimension_numbers = #tpu.dot_dimension_numbers<[1], [0], [0], [1], [0, 0, 1, 1], [], []>} : vector<8x16xf32>, vector<16x256xf32>, vector<8x256xf32> -> vector<8x256xf32>
    %223 = arith.addf %216, %222 : vector<8x256xf32>
    %224 = vector.extract_strided_slice %196 {offsets = [0, 17], sizes = [16, 256], strides = [1, 1]} : vector<16x290xf32> to vector<16x256xf32>
    %c4_110 = arith.constant 4 : index
    %c0_111 = arith.constant 0 : index
    %c0_112 = arith.constant 0 : index
    %225 = vector.load %arg6[%c4_110, %c0_111, %c0_112] : memref<9x8x16xf32, #tpu.memory_space<vmem>>, vector<1x8x16xf32>
    %226 = vector.shape_cast %225 : vector<1x8x16xf32> to vector<8x16xf32>
    %cst_113 = arith.constant dense<0.000000e+00> : vector<8x256xf32>
    %227 = tpu.matmul %226, %224, %cst_113 {dimension_numbers = #tpu.dot_dimension_numbers<[1], [0], [0], [1], [0, 0, 1, 1], [], []>} : vector<8x16xf32>, vector<16x256xf32>, vector<8x256xf32> -> vector<8x256xf32>
    %228 = arith.addf %223, %227 : vector<8x256xf32>
    %229 = vector.extract_strided_slice %196 {offsets = [0, 18], sizes = [16, 256], strides = [1, 1]} : vector<16x290xf32> to vector<16x256xf32>
    %230 = vector.broadcast %26 : vector<1x256xf32> to vector<16x256xf32>
    %231 = arith.mulf %229, %230 : vector<16x256xf32>
    %c5_114 = arith.constant 5 : index
    %c0_115 = arith.constant 0 : index
    %c0_116 = arith.constant 0 : index
    %232 = vector.load %arg6[%c5_114, %c0_115, %c0_116] : memref<9x8x16xf32, #tpu.memory_space<vmem>>, vector<1x8x16xf32>
    %233 = vector.shape_cast %232 : vector<1x8x16xf32> to vector<8x16xf32>
    %cst_117 = arith.constant dense<0.000000e+00> : vector<8x256xf32>
    %234 = tpu.matmul %233, %231, %cst_117 {dimension_numbers = #tpu.dot_dimension_numbers<[1], [0], [0], [1], [0, 0, 1, 1], [], []>} : vector<8x16xf32>, vector<16x256xf32>, vector<8x256xf32> -> vector<8x256xf32>
    %235 = arith.addf %228, %234 : vector<8x256xf32>
    %236 = vector.extract_strided_slice %196 {offsets = [0, 32], sizes = [16, 256], strides = [1, 1]} : vector<16x290xf32> to vector<16x256xf32>
    %237 = vector.broadcast %22 : vector<1x256xf32> to vector<16x256xf32>
    %238 = arith.mulf %236, %237 : vector<16x256xf32>
    %c6_118 = arith.constant 6 : index
    %c0_119 = arith.constant 0 : index
    %c0_120 = arith.constant 0 : index
    %239 = vector.load %arg6[%c6_118, %c0_119, %c0_120] : memref<9x8x16xf32, #tpu.memory_space<vmem>>, vector<1x8x16xf32>
    %240 = vector.shape_cast %239 : vector<1x8x16xf32> to vector<8x16xf32>
    %cst_121 = arith.constant dense<0.000000e+00> : vector<8x256xf32>
    %241 = tpu.matmul %240, %238, %cst_121 {dimension_numbers = #tpu.dot_dimension_numbers<[1], [0], [0], [1], [0, 0, 1, 1], [], []>} : vector<8x16xf32>, vector<16x256xf32>, vector<8x256xf32> -> vector<8x256xf32>
    %242 = arith.addf %235, %241 : vector<8x256xf32>
    %243 = vector.extract_strided_slice %196 {offsets = [0, 33], sizes = [16, 256], strides = [1, 1]} : vector<16x290xf32> to vector<16x256xf32>
    %c7_122 = arith.constant 7 : index
    %c0_123 = arith.constant 0 : index
    %c0_124 = arith.constant 0 : index
    %244 = vector.load %arg6[%c7_122, %c0_123, %c0_124] : memref<9x8x16xf32, #tpu.memory_space<vmem>>, vector<1x8x16xf32>
    %245 = vector.shape_cast %244 : vector<1x8x16xf32> to vector<8x16xf32>
    %cst_125 = arith.constant dense<0.000000e+00> : vector<8x256xf32>
    %246 = tpu.matmul %245, %243, %cst_125 {dimension_numbers = #tpu.dot_dimension_numbers<[1], [0], [0], [1], [0, 0, 1, 1], [], []>} : vector<8x16xf32>, vector<16x256xf32>, vector<8x256xf32> -> vector<8x256xf32>
    %247 = arith.addf %242, %246 : vector<8x256xf32>
    %248 = vector.extract_strided_slice %196 {offsets = [0, 34], sizes = [16, 256], strides = [1, 1]} : vector<16x290xf32> to vector<16x256xf32>
    %249 = vector.broadcast %26 : vector<1x256xf32> to vector<16x256xf32>
    %250 = arith.mulf %248, %249 : vector<16x256xf32>
    %c8_126 = arith.constant 8 : index
    %c0_127 = arith.constant 0 : index
    %c0_128 = arith.constant 0 : index
    %251 = vector.load %arg6[%c8_126, %c0_127, %c0_128] : memref<9x8x16xf32, #tpu.memory_space<vmem>>, vector<1x8x16xf32>
    %252 = vector.shape_cast %251 : vector<1x8x16xf32> to vector<8x16xf32>
    %cst_129 = arith.constant dense<0.000000e+00> : vector<8x256xf32>
    %253 = tpu.matmul %252, %250, %cst_129 {dimension_numbers = #tpu.dot_dimension_numbers<[1], [0], [0], [1], [0, 0, 1, 1], [], []>} : vector<8x16xf32>, vector<16x256xf32>, vector<8x256xf32> -> vector<8x256xf32>
    %254 = arith.addf %247, %253 : vector<8x256xf32>
    %c0_130 = arith.constant 0 : index
    %c0_131 = arith.constant 0 : index
    %255 = vector.load %arg7[%c0_130, %c0_131] : memref<8x1xf32, #tpu.memory_space<vmem>>, vector<8x1xf32>
    %256 = vector.broadcast %255 : vector<8x1xf32> to vector<8x256xf32>
    %257 = arith.addf %254, %256 : vector<8x256xf32>
    %cst_132 = arith.constant 0.000000e+00 : f32
    %258 = vector.broadcast %cst_132 : f32 to vector<8x256xf32>
    %259 = arith.maximumf %257, %258 : vector<8x256xf32>
    %cst_133 = arith.constant 0.000000e+00 : f32
    %260 = vector.broadcast %cst_133 : f32 to vector<8x17xf32>
    %261 = tpu.concatenate %260, %259, %260 in 1 : vector<8x17xf32>, vector<8x256xf32>, vector<8x17xf32> -> vector<8x290xf32>
    %cst_134 = arith.constant 0.000000e+00 : f32
    %262 = vector.broadcast %cst_134 : f32 to vector<4x256xf32>
    %263 = vector.extract_strided_slice %261 {offsets = [0, 0], sizes = [8, 256], strides = [1, 1]} : vector<8x290xf32> to vector<8x256xf32>
    %264 = vector.broadcast %22 : vector<1x256xf32> to vector<8x256xf32>
    %265 = arith.mulf %263, %264 : vector<8x256xf32>
    %c0_135 = arith.constant 0 : index
    %c0_136 = arith.constant 0 : index
    %c0_137 = arith.constant 0 : index
    %266 = vector.load %arg8[%c0_135, %c0_136, %c0_137] : memref<9x4x8xf32, #tpu.memory_space<vmem>>, vector<1x4x8xf32>
    %267 = vector.shape_cast %266 : vector<1x4x8xf32> to vector<4x8xf32>
    %cst_138 = arith.constant dense<0.000000e+00> : vector<4x256xf32>
    %268 = tpu.matmul %267, %265, %cst_138 {dimension_numbers = #tpu.dot_dimension_numbers<[1], [0], [0], [1], [0, 0, 1, 1], [], []>} : vector<4x8xf32>, vector<8x256xf32>, vector<4x256xf32> -> vector<4x256xf32>
    %269 = arith.addf %262, %268 : vector<4x256xf32>
    %270 = vector.extract_strided_slice %261 {offsets = [0, 1], sizes = [8, 256], strides = [1, 1]} : vector<8x290xf32> to vector<8x256xf32>
    %c1_139 = arith.constant 1 : index
    %c0_140 = arith.constant 0 : index
    %c0_141 = arith.constant 0 : index
    %271 = vector.load %arg8[%c1_139, %c0_140, %c0_141] : memref<9x4x8xf32, #tpu.memory_space<vmem>>, vector<1x4x8xf32>
    %272 = vector.shape_cast %271 : vector<1x4x8xf32> to vector<4x8xf32>
    %cst_142 = arith.constant dense<0.000000e+00> : vector<4x256xf32>
    %273 = tpu.matmul %272, %270, %cst_142 {dimension_numbers = #tpu.dot_dimension_numbers<[1], [0], [0], [1], [0, 0, 1, 1], [], []>} : vector<4x8xf32>, vector<8x256xf32>, vector<4x256xf32> -> vector<4x256xf32>
    %274 = arith.addf %269, %273 : vector<4x256xf32>
    %275 = vector.extract_strided_slice %261 {offsets = [0, 2], sizes = [8, 256], strides = [1, 1]} : vector<8x290xf32> to vector<8x256xf32>
    %276 = vector.broadcast %26 : vector<1x256xf32> to vector<8x256xf32>
    %277 = arith.mulf %275, %276 : vector<8x256xf32>
    %c2_143 = arith.constant 2 : index
    %c0_144 = arith.constant 0 : index
    %c0_145 = arith.constant 0 : index
    %278 = vector.load %arg8[%c2_143, %c0_144, %c0_145] : memref<9x4x8xf32, #tpu.memory_space<vmem>>, vector<1x4x8xf32>
    %279 = vector.shape_cast %278 : vector<1x4x8xf32> to vector<4x8xf32>
    %cst_146 = arith.constant dense<0.000000e+00> : vector<4x256xf32>
    %280 = tpu.matmul %279, %277, %cst_146 {dimension_numbers = #tpu.dot_dimension_numbers<[1], [0], [0], [1], [0, 0, 1, 1], [], []>} : vector<4x8xf32>, vector<8x256xf32>, vector<4x256xf32> -> vector<4x256xf32>
    %281 = arith.addf %274, %280 : vector<4x256xf32>
    %282 = vector.extract_strided_slice %261 {offsets = [0, 16], sizes = [8, 256], strides = [1, 1]} : vector<8x290xf32> to vector<8x256xf32>
    %283 = vector.broadcast %22 : vector<1x256xf32> to vector<8x256xf32>
    %284 = arith.mulf %282, %283 : vector<8x256xf32>
    %c3_147 = arith.constant 3 : index
    %c0_148 = arith.constant 0 : index
    %c0_149 = arith.constant 0 : index
    %285 = vector.load %arg8[%c3_147, %c0_148, %c0_149] : memref<9x4x8xf32, #tpu.memory_space<vmem>>, vector<1x4x8xf32>
    %286 = vector.shape_cast %285 : vector<1x4x8xf32> to vector<4x8xf32>
    %cst_150 = arith.constant dense<0.000000e+00> : vector<4x256xf32>
    %287 = tpu.matmul %286, %284, %cst_150 {dimension_numbers = #tpu.dot_dimension_numbers<[1], [0], [0], [1], [0, 0, 1, 1], [], []>} : vector<4x8xf32>, vector<8x256xf32>, vector<4x256xf32> -> vector<4x256xf32>
    %288 = arith.addf %281, %287 : vector<4x256xf32>
    %289 = vector.extract_strided_slice %261 {offsets = [0, 17], sizes = [8, 256], strides = [1, 1]} : vector<8x290xf32> to vector<8x256xf32>
    %c4_151 = arith.constant 4 : index
    %c0_152 = arith.constant 0 : index
    %c0_153 = arith.constant 0 : index
    %290 = vector.load %arg8[%c4_151, %c0_152, %c0_153] : memref<9x4x8xf32, #tpu.memory_space<vmem>>, vector<1x4x8xf32>
    %291 = vector.shape_cast %290 : vector<1x4x8xf32> to vector<4x8xf32>
    %cst_154 = arith.constant dense<0.000000e+00> : vector<4x256xf32>
    %292 = tpu.matmul %291, %289, %cst_154 {dimension_numbers = #tpu.dot_dimension_numbers<[1], [0], [0], [1], [0, 0, 1, 1], [], []>} : vector<4x8xf32>, vector<8x256xf32>, vector<4x256xf32> -> vector<4x256xf32>
    %293 = arith.addf %288, %292 : vector<4x256xf32>
    %294 = vector.extract_strided_slice %261 {offsets = [0, 18], sizes = [8, 256], strides = [1, 1]} : vector<8x290xf32> to vector<8x256xf32>
    %295 = vector.broadcast %26 : vector<1x256xf32> to vector<8x256xf32>
    %296 = arith.mulf %294, %295 : vector<8x256xf32>
    %c5_155 = arith.constant 5 : index
    %c0_156 = arith.constant 0 : index
    %c0_157 = arith.constant 0 : index
    %297 = vector.load %arg8[%c5_155, %c0_156, %c0_157] : memref<9x4x8xf32, #tpu.memory_space<vmem>>, vector<1x4x8xf32>
    %298 = vector.shape_cast %297 : vector<1x4x8xf32> to vector<4x8xf32>
    %cst_158 = arith.constant dense<0.000000e+00> : vector<4x256xf32>
    %299 = tpu.matmul %298, %296, %cst_158 {dimension_numbers = #tpu.dot_dimension_numbers<[1], [0], [0], [1], [0, 0, 1, 1], [], []>} : vector<4x8xf32>, vector<8x256xf32>, vector<4x256xf32> -> vector<4x256xf32>
    %300 = arith.addf %293, %299 : vector<4x256xf32>
    %301 = vector.extract_strided_slice %261 {offsets = [0, 32], sizes = [8, 256], strides = [1, 1]} : vector<8x290xf32> to vector<8x256xf32>
    %302 = vector.broadcast %22 : vector<1x256xf32> to vector<8x256xf32>
    %303 = arith.mulf %301, %302 : vector<8x256xf32>
    %c6_159 = arith.constant 6 : index
    %c0_160 = arith.constant 0 : index
    %c0_161 = arith.constant 0 : index
    %304 = vector.load %arg8[%c6_159, %c0_160, %c0_161] : memref<9x4x8xf32, #tpu.memory_space<vmem>>, vector<1x4x8xf32>
    %305 = vector.shape_cast %304 : vector<1x4x8xf32> to vector<4x8xf32>
    %cst_162 = arith.constant dense<0.000000e+00> : vector<4x256xf32>
    %306 = tpu.matmul %305, %303, %cst_162 {dimension_numbers = #tpu.dot_dimension_numbers<[1], [0], [0], [1], [0, 0, 1, 1], [], []>} : vector<4x8xf32>, vector<8x256xf32>, vector<4x256xf32> -> vector<4x256xf32>
    %307 = arith.addf %300, %306 : vector<4x256xf32>
    %308 = vector.extract_strided_slice %261 {offsets = [0, 33], sizes = [8, 256], strides = [1, 1]} : vector<8x290xf32> to vector<8x256xf32>
    %c7_163 = arith.constant 7 : index
    %c0_164 = arith.constant 0 : index
    %c0_165 = arith.constant 0 : index
    %309 = vector.load %arg8[%c7_163, %c0_164, %c0_165] : memref<9x4x8xf32, #tpu.memory_space<vmem>>, vector<1x4x8xf32>
    %310 = vector.shape_cast %309 : vector<1x4x8xf32> to vector<4x8xf32>
    %cst_166 = arith.constant dense<0.000000e+00> : vector<4x256xf32>
    %311 = tpu.matmul %310, %308, %cst_166 {dimension_numbers = #tpu.dot_dimension_numbers<[1], [0], [0], [1], [0, 0, 1, 1], [], []>} : vector<4x8xf32>, vector<8x256xf32>, vector<4x256xf32> -> vector<4x256xf32>
    %312 = arith.addf %307, %311 : vector<4x256xf32>
    %313 = vector.extract_strided_slice %261 {offsets = [0, 34], sizes = [8, 256], strides = [1, 1]} : vector<8x290xf32> to vector<8x256xf32>
    %314 = vector.broadcast %26 : vector<1x256xf32> to vector<8x256xf32>
    %315 = arith.mulf %313, %314 : vector<8x256xf32>
    %c8_167 = arith.constant 8 : index
    %c0_168 = arith.constant 0 : index
    %c0_169 = arith.constant 0 : index
    %316 = vector.load %arg8[%c8_167, %c0_168, %c0_169] : memref<9x4x8xf32, #tpu.memory_space<vmem>>, vector<1x4x8xf32>
    %317 = vector.shape_cast %316 : vector<1x4x8xf32> to vector<4x8xf32>
    %cst_170 = arith.constant dense<0.000000e+00> : vector<4x256xf32>
    %318 = tpu.matmul %317, %315, %cst_170 {dimension_numbers = #tpu.dot_dimension_numbers<[1], [0], [0], [1], [0, 0, 1, 1], [], []>} : vector<4x8xf32>, vector<8x256xf32>, vector<4x256xf32> -> vector<4x256xf32>
    %319 = arith.addf %312, %318 : vector<4x256xf32>
    %c0_171 = arith.constant 0 : index
    %c0_172 = arith.constant 0 : index
    %320 = vector.load %arg9[%c0_171, %c0_172] : memref<4x1xf32, #tpu.memory_space<vmem>>, vector<4x1xf32>
    %321 = vector.broadcast %320 : vector<4x1xf32> to vector<4x256xf32>
    %322 = arith.addf %319, %321 : vector<4x256xf32>
    %c0_173 = arith.constant 0 : index
    %c0_174 = arith.constant 0 : index
    %c0_175 = arith.constant 0 : index
    %323 = vector.load %arg12[%c0_173, %c0_174, %c0_175] : memref<1x4x256xf32, #tpu.memory_space<vmem>>, vector<1x4x256xf32>
    %324 = vector.shape_cast %323 : vector<1x4x256xf32> to vector<4x256xf32>
    %325 = vector.shape_cast %322 : vector<4x256xf32> to vector<1x4x256xf32>
    tpu.vector_store %arg12[%c0_173, %c0_174, %c0_175], %325 {strides = array<i32>} : memref<1x4x256xf32, #tpu.memory_space<vmem>>, vector<1x4x256xf32>,
    return
  }
  func.func @transform_0(%arg0: i32) -> (i32, i32, i32) {
    %c0_i32 = arith.constant 0 : i32
    %c0_i32_0 = arith.constant 0 : i32
    %c0_i32_1 = arith.constant 0 : i32
    return %arg0, %c0_i32, %c0_i32_0 : i32, i32, i32
  }
  func.func @transform_1(%arg0: i32) -> (i32, i32, i32) {
    %c0_i32 = arith.constant 0 : i32
    %c0_i32_0 = arith.constant 0 : i32
    %c0_i32_1 = arith.constant 0 : i32
    %c0_i32_2 = arith.constant 0 : i32
    return %c0_i32, %c0_i32_0, %c0_i32_1 : i32, i32, i32
  }
  func.func @transform_2(%arg0: i32) -> (i32, i32) {
    %c0_i32 = arith.constant 0 : i32
    %c0_i32_0 = arith.constant 0 : i32
    %c0_i32_1 = arith.constant 0 : i32
    return %c0_i32, %c0_i32_0 : i32, i32
  }
  func.func @transform_3(%arg0: i32) -> (i32, i32, i32) {
    %c0_i32 = arith.constant 0 : i32
    %c0_i32_0 = arith.constant 0 : i32
    %c0_i32_1 = arith.constant 0 : i32
    %c0_i32_2 = arith.constant 0 : i32
    return %c0_i32, %c0_i32_0, %c0_i32_1 : i32, i32, i32
  }
  func.func @transform_4(%arg0: i32) -> (i32, i32) {
    %c0_i32 = arith.constant 0 : i32
    %c0_i32_0 = arith.constant 0 : i32
    %c0_i32_1 = arith.constant 0 : i32
    return %c0_i32, %c0_i32_0 : i32, i32
  }
  func.func @transform_5(%arg0: i32) -> (i32, i32, i32) {
    %c0_i32 = arith.constant 0 : i32
    %c0_i32_0 = arith.constant 0 : i32
    %c0_i32_1 = arith.constant 0 : i32
    %c0_i32_2 = arith.constant 0 : i32
    return %c0_i32, %c0_i32_0, %c0_i32_1 : i32, i32, i32
  }
  func.func @transform_6(%arg0: i32) -> (i32, i32) {
    %c0_i32 = arith.constant 0 : i32
    %c0_i32_0 = arith.constant 0 : i32
    %c0_i32_1 = arith.constant 0 : i32
    return %c0_i32, %c0_i32_0 : i32, i32
  }
  func.func @transform_7(%arg0: i32) -> (i32, i32, i32) {
    %c0_i32 = arith.constant 0 : i32
    %c0_i32_0 = arith.constant 0 : i32
    %c0_i32_1 = arith.constant 0 : i32
    %c0_i32_2 = arith.constant 0 : i32
    return %c0_i32, %c0_i32_0, %c0_i32_1 : i32, i32, i32
  }
  func.func @transform_8(%arg0: i32) -> (i32, i32) {
    %c0_i32 = arith.constant 0 : i32
    %c0_i32_0 = arith.constant 0 : i32
    %c0_i32_1 = arith.constant 0 : i32
    return %c0_i32, %c0_i32_0 : i32, i32
  }
  func.func @transform_9(%arg0: i32) -> (i32, i32) {
    %c0_i32 = arith.constant 0 : i32
    %c0_i32_0 = arith.constant 0 : i32
    %c0_i32_1 = arith.constant 0 : i32
    return %c0_i32, %c0_i32_0 : i32, i32
  }
  func.func @transform_10(%arg0: i32) -> (i32, i32) {
    %c0_i32 = arith.constant 0 : i32
    %c0_i32_0 = arith.constant 0 : i32
    %c0_i32_1 = arith.constant 0 : i32
    return %c0_i32, %c0_i32_0 : i32, i32
  }
  func.func @transform_11(%arg0: i32) -> (i32, i32, i32) {
    %c0_i32 = arith.constant 0 : i32
    %c0_i32_0 = arith.constant 0 : i32
    %c0_i32_1 = arith.constant 0 : i32
    return %arg0, %c0_i32, %c0_i32_0 : i32, i32, i32
  }
}

</mosaic_0001>

<llo_original>
// kernel: unet_forward.1
$region0: #{unet_forward.1}
  #allocation0 [shape = 'u32[]', space=smem, size = 0x4, offset = 0x4, fixed_abs, tag = 'smem constant byte address 0x4 - core index']
  #allocation1 [shape = 'u32[144,128]{1,0:T(1,128)}', space=vmem, size = 0x12000, scoped, tag = 'internal scratch']
  %s0 = inlined_call_operand.vmem [shape: f32[2,4,256], index: 0, kind: input, shape index: {}]
  %s1 = inlined_call_operand.vmem [shape: f32[9,8,4], index: 1, kind: input, shape index: {}]
  %s2 = inlined_call_operand.vmem [shape: f32[8,1], index: 2, kind: input, shape index: {}]
  %s3 = inlined_call_operand.vmem [shape: f32[9,16,8], index: 3, kind: input, shape index: {}]
  %s4 = inlined_call_operand.vmem [shape: f32[16,1], index: 4, kind: input, shape index: {}]
  %s5 = inlined_call_operand.vmem [shape: f32[9,8,16], index: 5, kind: input, shape index: {}]
  %s6 = inlined_call_operand.vmem [shape: f32[8,1], index: 6, kind: input, shape index: {}]
  %s7 = inlined_call_operand.hbm [shape: f32[9,4,8], index: 7, kind: input, shape index: {}]
  %s8 = inlined_call_operand.vmem [shape: f32[4,1], index: 8, kind: input, shape index: {}]
  %s9 = inlined_call_operand.vmem [shape: f32[256,64], index: 9, kind: input, shape index: {}]
  %s10 = inlined_call_operand.vmem [shape: f32[64,256], index: 10, kind: input, shape index: {}]
  %s11 = inlined_call_operand.vmem [shape: f32[2,4,256], index: 11, kind: output, shape index: {}]
  %s12 = sld [smem:[#allocation0]]
  $region81: #{unet_forward.1} parent=0
    _
  %s14 = ssub.s32 1, %s12
  %s15 = scalar_select 0, %s14, %s12
  $region1: #{unet_forward.1} parent=0
    #allocation2 [shape = 'u8[18432]{0}', space=vmem, size = 0x4800, scoped, tag = 'input window, operand 7, single buffered']
    #allocation3 [shape = 's32[2]{0}', space=sflag, size = 0x8, scoped, tag = 'scoped memory for unet_forward.1']
    %16 = vsyncpa [#allocation3], 0
    loop: start=0, step=1, limit=4
    $region2: #{unet_forward.1} parent=1 // loop_pre_header
      _
    $region3: #{unet_forward.1} parent=1 // loop_header
      %s18 = sphi 0, %s22
      %p19 = scmp.ge.s32.totalorder %s18, 4
      %s28 = sphi 0, %s30
      %s31 = sphi 0, %s28
      %s32 = sphi 0, %s31
      %s48 = sphi 0, %s32
      %s52 = sphi 0, %s52
      %s54 = sphi 0, %s52
      %s55 = sphi 0, %s54
      %s69 = sphi 0, %s55
      %s73 = sphi 0, %s73
      %s75 = sphi 0, %s73
      %s76 = sphi 0, %s75
      %s90 = sphi 0, %s76
      %s94 = sphi 0, %s94
      %s96 = sphi 0, %s94
      %s97 = sphi 0, %s96
      %s111 = sphi 0, %s97
      %s115 = sphi 0, %s115
      %s117 = sphi 0, %s115
      %s118 = sphi 0, %s117
      %s132 = sphi 0, %s118
      %s136 = sphi 0, %s136
      %s138 = sphi 0, %s136
      %s139 = sphi 0, %s138
      %s153 = sphi 0, %s139
      %s157 = sphi 0, %s157
      %s159 = sphi 0, %s157
      %s160 = sphi 0, %s159
      %s174 = sphi 0, %s160
      %s178 = sphi 0, %s178
      %s180 = sphi 0, %s178
      %s181 = sphi 0, %s180
      %s195 = sphi 0, %s181
      %s199 = sphi 0, %s199
      %s201 = sphi 0, %s199
      %s202 = sphi 0, %s201
      %s216 = sphi 0, %s202
      %s220 = sphi 0, %s220
      %s222 = sphi 0, %s220
      %s223 = sphi 0, %s222
      %s237 = sphi 0, %s223
      %s241 = sphi 0, %s241
      %s243 = sphi 0, %s241
      %s244 = sphi 0, %s243
      %s258 = sphi 0, %s244
      %s264 = sphi 0, %s266
      %s267 = sphi 0, %s264
      %s268 = sphi 0, %s267
      %s284 = sphi 0, %s268
    $region4: #{unet_forward.1} parent=1 // loop_header_branch
      %21 = sbr.rel (%p19) target = $region8
    $region5: #{unet_forward.1} parent=1 // loop_body
      %s23 = ssub.s32 %s18, 1
      %s24 = ssub.s32 %s18, 2
      %s25 = sadd.s32 %s18, 1
      %s26 = ssub.s32 %s18, %s25
      %p27 = scmp.eq.s32.totalorder %s26, 0
      %s29 = sadd.s32 %s28, 1
      %s30 = scalar_select %p27, %s28, %s29
      %p33 = pneg %p27
      %p34 = scmp.eq.s32.totalorder %s18, 1
      %p35 = por %p33, %p34
      %p36 = scmp.ne.s32.totalorder %s28, %s31
      %p37 = scmp.eq.s32.totalorder %s18, 0
      %p38 = por %p36, %p37
      %p39 = scmp.ne.s32.totalorder %s28, %s31
      %p40 = scmp.eq.s32.totalorder %s23, 1
      %p41 = por %p39, %p40
      %p42 = scmp.ne.s32.totalorder %s31, %s32
      %p43 = scmp.eq.s32.totalorder %s23, 0
      %p44 = por %p42, %p43
      %p45 = scmp.ne.s32.totalorder %s31, %s32
      %p46 = scmp.eq.s32.totalorder %s24, 1
      %p47 = por %p45, %p46
      %p49 = scmp.ne.s32.totalorder %s32, %s48
      %p50 = scmp.eq.s32.totalorder %s24, 0
      %p51 = por %p49, %p50
      %s53 = sadd.s32 %s52, 1
      %p56 = scmp.eq.s32.totalorder %s18, 1
      %p57 = scmp.ne.s32.totalorder %s52, %s54
      %p58 = scmp.eq.s32.totalorder %s18, 0
      %p59 = por %p57, %p58
      %p60 = scmp.ne.s32.totalorder %s52, %s54
      %p61 = scmp.eq.s32.totalorder %s23, 1
      %p62 = por %p60, %p61
      %p63 = scmp.ne.s32.totalorder %s54, %s55
      %p64 = scmp.eq.s32.totalorder %s23, 0
      %p65 = por %p63, %p64
      %p66 = scmp.ne.s32.totalorder %s54, %s55
      %p67 = scmp.eq.s32.totalorder %s24, 1
      %p68 = por %p66, %p67
      %p70 = scmp.ne.s32.totalorder %s55, %s69
      %p71 = scmp.eq.s32.totalorder %s24, 0
      %p72 = por %p70, %p71
      %s74 = sadd.s32 %s73, 1
      %p77 = scmp.eq.s32.totalorder %s18, 1
      %p78 = scmp.ne.s32.totalorder %s73, %s75
      %p79 = scmp.eq.s32.totalorder %s18, 0
      %p80 = por %p78, %p79
      %p81 = scmp.ne.s32.totalorder %s73, %s75
      %p82 = scmp.eq.s32.totalorder %s23, 1
      %p83 = por %p81, %p82
      %p84 = scmp.ne.s32.totalorder %s75, %s76
      %p85 = scmp.eq.s32.totalorder %s23, 0
      %p86 = por %p84, %p85
      %p87 = scmp.ne.s32.totalorder %s75, %s76
      %p88 = scmp.eq.s32.totalorder %s24, 1
      %p89 = por %p87, %p88
      %p91 = scmp.ne.s32.totalorder %s76, %s90
      %p92 = scmp.eq.s32.totalorder %s24, 0
      %p93 = por %p91, %p92
      %s95 = sadd.s32 %s94, 1
      %p98 = scmp.eq.s32.totalorder %s18, 1
      %p99 = scmp.ne.s32.totalorder %s94, %s96
      %p100 = scmp.eq.s32.totalorder %s18, 0
      %p101 = por %p99, %p100
      %p102 = scmp.ne.s32.totalorder %s94, %s96
      %p103 = scmp.eq.s32.totalorder %s23, 1
      %p104 = por %p102, %p103
      %p105 = scmp.ne.s32.totalorder %s96, %s97
      %p106 = scmp.eq.s32.totalorder %s23, 0
      %p107 = por %p105, %p106
      %p108 = scmp.ne.s32.totalorder %s96, %s97
      %p109 = scmp.eq.s32.totalorder %s24, 1
      %p110 = por %p108, %p109
      %p112 = scmp.ne.s32.totalorder %s97, %s111
      %p113 = scmp.eq.s32.totalorder %s24, 0
      %p114 = por %p112, %p113
      %s116 = sadd.s32 %s115, 1
      %p119 = scmp.eq.s32.totalorder %s18, 1
      %p120 = scmp.ne.s32.totalorder %s115, %s117
      %p121 = scmp.eq.s32.totalorder %s18, 0
      %p122 = por %p120, %p121
      %p123 = scmp.ne.s32.totalorder %s115, %s117
      %p124 = scmp.eq.s32.totalorder %s23, 1
      %p125 = por %p123, %p124
      %p126 = scmp.ne.s32.totalorder %s117, %s118
      %p127 = scmp.eq.s32.totalorder %s23, 0
      %p128 = por %p126, %p127
      %p129 = scmp.ne.s32.totalorder %s117, %s118
      %p130 = scmp.eq.s32.totalorder %s24, 1
      %p131 = por %p129, %p130
      %p133 = scmp.ne.s32.totalorder %s118, %s132
      %p134 = scmp.eq.s32.totalorder %s24, 0
      %p135 = por %p133, %p134
      %s137 = sadd.s32 %s136, 1
      %p140 = scmp.eq.s32.totalorder %s18, 1
      %p141 = scmp.ne.s32.totalorder %s136, %s138
      %p142 = scmp.eq.s32.totalorder %s18, 0
      %p143 = por %p141, %p142
      %p144 = scmp.ne.s32.totalorder %s136, %s138
      %p145 = scmp.eq.s32.totalorder %s23, 1
      %p146 = por %p144, %p145
      %p147 = scmp.ne.s32.totalorder %s138, %s139
      %p148 = scmp.eq.s32.totalorder %s23, 0
      %p149 = por %p147, %p148
      %p150 = scmp.ne.s32.totalorder %s138, %s139
      %p151 = scmp.eq.s32.totalorder %s24, 1
      %p152 = por %p150, %p151
      %p154 = scmp.ne.s32.totalorder %s139, %s153
      %p155 = scmp.eq.s32.totalorder %s24, 0
      %p156 = por %p154, %p155
      %s158 = sadd.s32 %s157, 1
      %p161 = scmp.eq.s32.totalorder %s18, 1
      %p162 = scmp.ne.s32.totalorder %s157, %s159
      %p163 = scmp.eq.s32.totalorder %s18, 0
      %p164 = por %p162, %p163
      %p165 = scmp.ne.s32.totalorder %s157, %s159
      %p166 = scmp.eq.s32.totalorder %s23, 1
      %p167 = por %p165, %p166
      %p168 = scmp.ne.s32.totalorder %s159, %s160
      %p169 = scmp.eq.s32.totalorder %s23, 0
      %p170 = por %p168, %p169
      %p171 = scmp.ne.s32.totalorder %s159, %s160
      %p172 = scmp.eq.s32.totalorder %s24, 1
      %p173 = por %p171, %p172
      %p175 = scmp.ne.s32.totalorder %s160, %s174
      %p176 = scmp.eq.s32.totalorder %s24, 0
      %p177 = por %p175, %p176
      %s179 = sadd.s32 %s178, 1
      %p182 = scmp.eq.s32.totalorder %s18, 1
      %p183 = scmp.ne.s32.totalorder %s178, %s180
      %p184 = scmp.eq.s32.totalorder %s18, 0
      %p185 = por %p183, %p184
      %p186 = scmp.ne.s32.totalorder %s178, %s180
      %p187 = scmp.eq.s32.totalorder %s23, 1
      %p188 = por %p186, %p187
      %p189 = scmp.ne.s32.totalorder %s180, %s181
      %p190 = scmp.eq.s32.totalorder %s23, 0
      %p191 = por %p189, %p190
      %p192 = scmp.ne.s32.totalorder %s180, %s181
      %p193 = scmp.eq.s32.totalorder %s24, 1
      %p194 = por %p192, %p193
      %p196 = scmp.ne.s32.totalorder %s181, %s195
      %p197 = scmp.eq.s32.totalorder %s24, 0
      %p198 = por %p196, %p197
      %s200 = sadd.s32 %s199, 1
      %p203 = scmp.eq.s32.totalorder %s18, 1
      %p204 = scmp.ne.s32.totalorder %s199, %s201
      %p205 = scmp.eq.s32.totalorder %s18, 0
      %p206 = por %p204, %p205
      %p207 = scmp.ne.s32.totalorder %s199, %s201
      %p208 = scmp.eq.s32.totalorder %s23, 1
      %p209 = por %p207, %p208
      %p210 = scmp.ne.s32.totalorder %s201, %s202
      %p211 = scmp.eq.s32.totalorder %s23, 0
      %p212 = por %p210, %p211
      %p213 = scmp.ne.s32.totalorder %s201, %s202
      %p214 = scmp.eq.s32.totalorder %s24, 1
      %p215 = por %p213, %p214
      %p217 = scmp.ne.s32.totalorder %s202, %s216
      %p218 = scmp.eq.s32.totalorder %s24, 0
      %p219 = por %p217, %p218
      %s221 = sadd.s32 %s220, 1
      %p224 = scmp.eq.s32.totalorder %s18, 1
      %p225 = scmp.ne.s32.totalorder %s220, %s222
      %p226 = scmp.eq.s32.totalorder %s18, 0
      %p227 = por %p225, %p226
      %p228 = scmp.ne.s32.totalorder %s220, %s222
      %p229 = scmp.eq.s32.totalorder %s23, 1
      %p230 = por %p228, %p229
      %p231 = scmp.ne.s32.totalorder %s222, %s223
      %p232 = scmp.eq.s32.totalorder %s23, 0
      %p233 = por %p231, %p232
      %p234 = scmp.ne.s32.totalorder %s222, %s223
      %p235 = scmp.eq.s32.totalorder %s24, 1
      %p236 = por %p234, %p235
      %p238 = scmp.ne.s32.totalorder %s223, %s237
      %p239 = scmp.eq.s32.totalorder %s24, 0
      %p240 = por %p238, %p239
      %s242 = sadd.s32 %s241, 1
      %p245 = scmp.eq.s32.totalorder %s18, 1
      %p246 = scmp.ne.s32.totalorder %s241, %s243
      %p247 = scmp.eq.s32.totalorder %s18, 0
      %p248 = por %p246, %p247
      %p249 = scmp.ne.s32.totalorder %s241, %s243
      %p250 = scmp.eq.s32.totalorder %s23, 1
      %p251 = por %p249, %p250
      %p252 = scmp.ne.s32.totalorder %s243, %s244
      %p253 = scmp.eq.s32.totalorder %s23, 0
      %p254 = por %p252, %p253
      %p255 = scmp.ne.s32.totalorder %s243, %s244
      %p256 = scmp.eq.s32.totalorder %s24, 1
      %p257 = por %p255, %p256
      %p259 = scmp.ne.s32.totalorder %s244, %s258
      %p260 = scmp.eq.s32.totalorder %s24, 0
      %p261 = por %p259, %p260
      %s262 = ssub.s32 %s18, %s25
      %p263 = scmp.eq.s32.totalorder %s262, 0
      %s265 = sadd.s32 %s264, 1
      %s266 = scalar_select %p263, %s264, %s265
      %p269 = pneg %p263
      %p270 = scmp.eq.s32.totalorder %s18, 1
      %p271 = por %p269, %p270
      %p272 = scmp.ne.s32.totalorder %s264, %s267
      %p273 = scmp.eq.s32.totalorder %s18, 0
      %p274 = por %p272, %p273
      %p275 = scmp.ne.s32.totalorder %s264, %s267
      %p276 = scmp.eq.s32.totalorder %s23, 1
      %p277 = por %p275, %p276
      %p278 = scmp.ne.s32.totalorder %s267, %s268
      %p279 = scmp.eq.s32.totalorder %s23, 0
      %p280 = por %p278, %p279
      %p281 = scmp.ne.s32.totalorder %s267, %s268
      %p282 = scmp.eq.s32.totalorder %s24, 1
      %p283 = por %p281, %p282
      %p285 = scmp.ne.s32.totalorder %s268, %s284
      %p286 = scmp.eq.s32.totalorder %s24, 0
      %p287 = por %p285, %p286
      %p288 = scmp.le.s32.totalorder 1, %s18
      %p289 = scmp.lt.s32.totalorder %s18, 3
      %p290 = pnand %p288, %p289
      %p291 = pneg %p290
      // Predicated region
      $region9: #{unet_forward.1} parent=5 // pred_check
        _
      $region10: #{unet_forward.1} parent=5 // pred_check_branch
        %293 = sbr.rel (%p290) target = $region12
      $region11: #{unet_forward.1} parent=5 // pred_region
        %s294 = ssub.s32 %s18, 1
        // Predicated region
        $region13: #{unet_forward.1} parent=11 // pred_check
          %p295 = pneg %p65
        $region14: #{unet_forward.1} parent=11 // pred_check_branch
          %297 = sbr.rel (%p295) target = $region16
        $region15: #{unet_forward.1} parent=11 // pred_region
          _
        $region16: #{unet_forward.1} parent=11 // pred_fallthru
          _
        // Predicated region
        $region17: #{unet_forward.1} parent=11 // pred_check
          %p298 = pneg %p86
        $region18: #{unet_forward.1} parent=11 // pred_check_branch
          %300 = sbr.rel (%p298) target = $region20
        $region19: #{unet_forward.1} parent=11 // pred_region
          _
        $region20: #{unet_forward.1} parent=11 // pred_fallthru
          _
        // Predicated region
        $region21: #{unet_forward.1} parent=11 // pred_check
          %p301 = pneg %p107
        $region22: #{unet_forward.1} parent=11 // pred_check_branch
          %303 = sbr.rel (%p301) target = $region24
        $region23: #{unet_forward.1} parent=11 // pred_region
          _
        $region24: #{unet_forward.1} parent=11 // pred_fallthru
          _
        // Predicated region
        $region25: #{unet_forward.1} parent=11 // pred_check
          %p304 = pneg %p128
        $region26: #{unet_forward.1} parent=11 // pred_check_branch
          %306 = sbr.rel (%p304) target = $region28
        $region27: #{unet_forward.1} parent=11 // pred_region
          _
        $region28: #{unet_forward.1} parent=11 // pred_fallthru
          _
        // Predicated region
        $region29: #{unet_forward.1} parent=11 // pred_check
          %p307 = pneg %p149
        $region30: #{unet_forward.1} parent=11 // pred_check_branch
          %309 = sbr.rel (%p307) target = $region32
        $region31: #{unet_forward.1} parent=11 // pred_region
          _
        $region32: #{unet_forward.1} parent=11 // pred_fallthru
          _
        // Predicated region
        $region33: #{unet_forward.1} parent=11 // pred_check
          %p310 = pneg %p170
        $region34: #{unet_forward.1} parent=11 // pred_check_branch
          %312 = sbr.rel (%p310) target = $region36
        $region35: #{unet_forward.1} parent=11 // pred_region
          _
        $region36: #{unet_forward.1} parent=11 // pred_fallthru
          _
        // Predicated region
        $region37: #{unet_forward.1} parent=11 // pred_check
          %p313 = pneg %p191
        $region38: #{unet_forward.1} parent=11 // pred_check_branch
          %315 = sbr.rel (%p313) target = $region40
        $region39: #{unet_forward.1} parent=11 // pred_region
          %s317 = ssub.s32 576, 576
          %318 = vsyncadd [#allocation3], %s317
          %s319 = sshll.u32 [#allocation2], 4
          %s320 = int_to_ptr.vmem [resolvable:$true] %s319
          %325 = dma.hbm_to_vmem [thread:$0]  %s7, 576, %s320, [#allocation3], 64, 64, 4
        $region40: #{unet_forward.1} parent=11 // pred_fallthru
          _
        // Predicated region
        $region41: #{unet_forward.1} parent=11 // pred_check
          %p326 = pneg %p212
        $region42: #{unet_forward.1} parent=11 // pred_check_branch
          %328 = sbr.rel (%p326) target = $region44
        $region43: #{unet_forward.1} parent=11 // pred_region
          _
        $region44: #{unet_forward.1} parent=11 // pred_fallthru
          _
        // Predicated region
        $region45: #{unet_forward.1} parent=11 // pred_check
          %p329 = pneg %p233
        $region46: #{unet_forward.1} parent=11 // pred_check_branch
          %331 = sbr.rel (%p329) target = $region48
        $region47: #{unet_forward.1} parent=11 // pred_region
          _
        $region48: #{unet_forward.1} parent=11 // pred_fallthru
          _
        // Predicated region
        $region49: #{unet_forward.1} parent=11 // pred_check
          %p332 = pneg %p254
        $region50: #{unet_forward.1} parent=11 // pred_check_branch
          %334 = sbr.rel (%p332) target = $region52
        $region51: #{unet_forward.1} parent=11 // pred_region
          _
        $region52: #{unet_forward.1} parent=11 // pred_fallthru
          _
      $region12: #{unet_forward.1} parent=5 // pred_fallthru
        _
      %p335 = scmp.lt.s32.totalorder %s18, 2
      // Predicated region
      $region53: #{unet_forward.1} parent=5 // pred_check
        %p336 = pneg %p335
      $region54: #{unet_forward.1} parent=5 // pred_check_branch
        %338 = sbr.rel (%p336) target = $region56
      $region55: #{unet_forward.1} parent=5 // pred_region
        // Predicated region
        $region57: #{unet_forward.1} parent=55 // pred_check
          %p339 = pneg %p38
        $region58: #{unet_forward.1} parent=55 // pred_check_branch
          %341 = sbr.rel (%p339) target = $region60
        $region59: #{unet_forward.1} parent=55 // pred_region
          %p342 = scmp.lt.s32.totalorder %s18, 1
          %s343 = scalar_select %p342, %s18, 1
          %s344 = smul.addr %s343, 2
          %s345 = smul.addr %s344, 4
          %s346 = scalar_lea.vmem %s0, %s345
        $region60: #{unet_forward.1} parent=55 // pred_fallthru
          _
      $region56: #{unet_forward.1} parent=5 // pred_fallthru
        _
      %p347 = scmp.le.s32.totalorder 1, %s18
      %p348 = scmp.lt.s32.totalorder %s18, 3
      %p349 = pnand %p347, %p348
      %p350 = pneg %p349
      // Predicated region
      $region61: #{unet_forward.1} parent=5 // pred_check
        _
      $region62: #{unet_forward.1} parent=5 // pred_check_branch
        %352 = sbr.rel (%p349) target = $region64
      $region63: #{unet_forward.1} parent=5 // pred_region
        %s353 = ssub.s32 %s18, 1
        // Predicated region
        $region65: #{unet_forward.1} parent=63 // pred_check
          %p354 = pneg %p191
        $region66: #{unet_forward.1} parent=63 // pred_check_branch
          %356 = sbr.rel (%p354) target = $region68
        $region67: #{unet_forward.1} parent=63 // pred_region
          %357 = dma.done [#allocation3], 576
        $region68: #{unet_forward.1} parent=63 // pred_fallthru
          _
        %p358 = scmp.lt.s32.totalorder %s23, 1
        %s359 = scalar_select %p358, %s23, 1
        %s360 = smul.addr %s359, 2
        %s361 = smul.addr %s360, 4
        %s362 = scalar_lea.vmem %s0, %s361
        %p363 = pneg %p44
        %p364 = pneg %p41
        %p365 = pneg %p65
        %p366 = pneg %p62
        %p367 = pneg %p86
        %p368 = pneg %p83
        %p369 = pneg %p107
        %p370 = pneg %p104
        %p371 = pneg %p128
        %p372 = pneg %p125
        %p373 = pneg %p149
        %p374 = pneg %p146
        %p375 = pneg %p170
        %p376 = pneg %p167
        %p377 = pneg %p191
        %p378 = pneg %p188
        %p379 = pneg %p212
        %p380 = pneg %p209
        %p381 = pneg %p233
        %p382 = pneg %p230
        %p383 = pneg %p254
        %p384 = pneg %p251
        %p385 = pneg %p280
        %p386 = pneg %p277
        %p387 = scmp.lt.s32.totalorder %s23, 1
        %s388 = scalar_select %p387, %s23, 1
        %s389 = smul.addr %s388, 2
        %s390 = smul.addr %s389, 4
        %s391 = scalar_lea.vmem %s11, %s390
        %p392 = scmp.lt.s32.totalorder %s23, 1
        %s393 = scalar_select %p392, %s23, 1
        %s394 = smul.addr %s393, 2
        %s395 = smul.addr %s394, 4
        %s396 = scalar_lea.vmem %s0, %s395
        %p397 = scmp.lt.s32.totalorder %s23, 1
        %s398 = scalar_select %p397, %s23, 1
        %s399 = smul.addr %s398, 2
        %s400 = smul.addr %s399, 4
        %s401 = scalar_lea.vmem %s11, %s400
        %v402 = vld [vmem:[%s396] sm:$0xff]
        %v403 = vlaneseq
        %v404 = vand.u32 %v403, 127
        %v405 = vadd.s32 %v404, 128
        %vm406 = vcmp.lt.s32.totalorder %v404, 0
        %v407 = vsub.s32 0, %v404
        %v408 = vsel %vm406, %v407, %v404
        %v409 = vshrl.u32 %v408, 4
        %v410 = vand.u32 %v408, 15
        %v411 = vsub.s32 0, %v410
        %v412 = vsel %vm406, %v411, %v410
        %vm413 = vcmp.lt.s32.totalorder %v405, 0
        %v414 = vsub.s32 0, %v405
        %v415 = vsel %vm413, %v414, %v405
        %v416 = vshrl.u32 %v415, 4
        %v417 = vand.u32 %v415, 15
        %v418 = vsub.s32 0, %v417
        %v419 = vsel %vm413, %v418, %v417
        %vm420 = vcmp.ne.s32.totalorder %v412, 0
        %vm421 = vcmp.ne.s32.totalorder %v419, 0
        %vm422 = vcmp.lt.s32.totalorder %v412, 0
        %vm423 = vcmp.lt.s32.totalorder %v419, 0
        %vm424 = vmand %vm422, %vm420
        %vm425 = vmand %vm423, %vm421
        %v426 = vadd.s32 %v412, 16
        %v427 = vadd.s32 %v419, 16
        %v428 = vsel %vm424, %v426, %v412
        %v429 = vsel %vm425, %v427, %v419
        %vm430 = vcmp.ne.s32.totalorder %v428, 0
        %vm431 = vcmp.ne.s32.totalorder %v429, 0
        %v432 = vsel %vm430, 1, 0
        %v433 = vsel %vm431, 1, 0
        %v434 = vcvt.s32.f32 %v432
        %v435 = vcvt.s32.f32 %v433
        %vm436 = vcmp.ne.s32.totalorder %v428, 15
        %vm437 = vcmp.ne.s32.totalorder %v429, 15
        %v438 = vsel %vm436, 1, 0
        %v439 = vsel %vm437, 1, 0
        %v440 = vcvt.s32.f32 %v438
        %v441 = vcvt.s32.f32 %v439
        %vm442 = vcmp.lt.s32.totalorder %v404, 0
        %v443 = vsub.s32 0, %v404
        %v444 = vsel %vm442, %v443, %v404
        %v445 = vshrl.u32 %v444, 3
        %v446 = vand.u32 %v444, 7
        %v447 = vsub.s32 0, %v446
        %v448 = vsel %vm442, %v447, %v446
        %vm449 = vcmp.ne.s32.totalorder %v448, 0
        %vm450 = vcmp.lt.s32.totalorder %v448, 0
        %vm451 = vmand %vm450, %vm449
        %v452 = vadd.s32 %v448, 8
        %v453 = vsel %vm451, %v452, %v448
        %vm454 = vcmp.ne.s32.totalorder %v453, 0
        %v455 = vsel %vm454, 1, 0
        %v456 = vcvt.s32.f32 %v455
        %vm457 = vcmp.ne.s32.totalorder %v453, 7
        %v458 = vsel %vm457, 1, 0
        %v459 = vcvt.s32.f32 %v458
        %v461 = vcombine.high %v402, %v402
        %462 = vrot.lane.b32.xlu0 %v402, 17
        %v463 = vpop.permute.xlu0 %462
        %464 = vrot.lane.b32.xlu0 %v461, 17
        %v465 = vpop.permute.xlu0 %464
        %vm466 = vcmask 138240
        %v467 = vsel %vm466, %v463, %v465
        %v471 = vsel %vm466, 0.0, %v463
        %v472 = vsel %vm466, %v465, 0.0
        %v473 = vmul.f32 %v471, %v434
        %v474 = vmul.f32 %v467, %v435
        %v475 = vld [vmem:[%s1] sm:$0xff]
        %s476 = scalar_lea.vmem %s1, 8
        %v477 = vld [vmem:[%s476] sm:$0xff]
        %480 = vrot.lane.b32.xlu0 %v471, 127
        %v481 = vpop.permute.xlu0 %480
        %482 = vrot.lane.b32.xlu0 %v467, 127
        %v483 = vpop.permute.xlu0 %482
        %484 = vrot.lane.b32.xlu0 %v472, 127
        %v485 = vpop.permute.xlu0 %484
        %vm486 = vcmask 1039360
        %v487 = vsel %vm486, %v481, %v483
        %v488 = vsel %vm486, %v483, %v485
        %vm489 = vcmask 31744
        %v491 = vsel %vm489, %v477, 0
        %vm493 = vcmask 1043456
        %v494 = vsel %vm493, %v487, 0
        %v496 = vsel %vm493, %v488, 0
        %498 = vmatprep.subr.mxu0 0.0
        %499 = vmatpush1.msra.mxu0 0.0
        %500 = vmatprep.subr.mxu0 0.0
        %501 = vmatpush1.msra.mxu0 0.0
        %502 = vmatprep.subr.mxu0 0.0
        %503 = vmatpush1.msra.mxu0 0.0
        %504 = vmatprep.subr.mxu0 0.0
        %505 = vmatpush1.msra.mxu0 0.0
        %506 = vmatprep.subr.mxu0 0.0
        %507 = vmatpush1.msra.mxu0 0.0
        %508 = vmatprep.subr.mxu0 0.0
        %509 = vmatpush1.msra.mxu0 0.0
        %510 = vmatprep.subr.mxu0 0.0
        %511 = vmatpush1.msra.mxu0 0.0
        %512 = vmatprep.subr.mxu0 0.0
        %513 = vmatpush1.msra.mxu0 0.0
        %514 = vmatprep.subr.mxu0 0.0
        %515 = vmatpush1.msra.mxu0 0.0
        %516 = vmatprep.subr.mxu0 0.0
        %517 = vmatpush1.msra.mxu0 0.0
        %518 = vmatprep.subr.mxu0 0.0
        %519 = vmatpush1.msra.mxu0 0.0
        %520 = vmatprep.subr.mxu0 0.0
        %521 = vmatpush1.msra.mxu0 0.0
        %522 = vmatprep.subr.mxu0 0.0
        %523 = vmatpush1.msra.mxu0 0.0
        %524 = vmatprep.subr.mxu0 0.0
        %525 = vmatpush1.msra.mxu0 0.0
        %526 = vmatprep.subr.mxu0 0.0
        %527 = vmatpush1.msra.mxu0 0.0
        %528 = vmatprep.subr.mxu0 %v496
        %529 = vmatpush1.msra.mxu0 %v494
        %530 = vmatprep.subr.mxu0 0.0
        %531 = vmatpush2.msra.mxu0 0.0
        %532 = vmatprep.subr.mxu0 0.0
        %533 = vmatpush2.msra.mxu0 0.0
        %534 = vmatprep.subr.mxu0 0.0
        %535 = vmatpush2.msra.mxu0 0.0
        %536 = vmatprep.subr.mxu0 0.0
        %537 = vmatpush2.msra.mxu0 0.0
        %538 = vmatprep.subr.mxu0 0.0
        %539 = vmatpush2.msra.mxu0 0.0
        %540 = vmatprep.subr.mxu0 0.0
        %541 = vmatpush2.msra.mxu0 0.0
        %542 = vmatprep.subr.mxu0 0.0
        %543 = vmatpush2.msra.mxu0 0.0
        %544 = vmatprep.subr.mxu0 0.0
        %545 = vmatpush2.msra.mxu0 0.0
        %546 = vmatprep.subr.mxu0 0.0
        %547 = vmatpush2.msra.mxu0 0.0
        %548 = vmatprep.subr.mxu0 0.0
        %549 = vmatpush2.msra.mxu0 0.0
        %550 = vmatprep.subr.mxu0 0.0
        %551 = vmatpush2.msra.mxu0 0.0
        %552 = vmatprep.subr.mxu0 0.0
        %553 = vmatpush2.msra.mxu0 0.0
        %554 = vmatprep.subr.mxu0 0.0
        %555 = vmatpush2.msra.mxu0 0.0
        %556 = vmatprep.subr.mxu0 0.0
        %557 = vmatpush2.msra.mxu0 0.0
        %558 = vmatprep.subr.mxu0 0.0
        %559 = vmatpush2.msra.mxu0 0.0
        %560 = vmatprep.subr.mxu0 0.0
        %561 = vmatpush2.msra.mxu0 0.0
        %562 = vmatprep.mubr.f32.mxu0 0.0
        %563 = vmatmul.mubr.f32.gmra.mxu0 %v491
        %v564 = vpop.f32.mrf.mxu0
        %v565 = vadd.f32 0.0, %v564
        %v566 = vpop.f32.mrf.mxu0
        %v567 = vadd.f32 0.0, %v566
        %568 = vdwg.mxu0
        %v570 = vsel %vm489, %v475, 0
        %v573 = vsel %vm493, %v473, 0
        %v576 = vsel %vm493, %v474, 0
        %578 = vmatprep.subr.mxu0 0.0
        %579 = vmatpush1.msra.mxu0 0.0
        %580 = vmatprep.subr.mxu0 0.0
        %581 = vmatpush1.msra.mxu0 0.0
        %582 = vmatprep.subr.mxu0 0.0
        %583 = vmatpush1.msra.mxu0 0.0
        %584 = vmatprep.subr.mxu0 0.0
        %585 = vmatpush1.msra.mxu0 0.0
        %586 = vmatprep.subr.mxu0 0.0
        %587 = vmatpush1.msra.mxu0 0.0
        %588 = vmatprep.subr.mxu0 0.0
        %589 = vmatpush1.msra.mxu0 0.0
        %590 = vmatprep.subr.mxu0 0.0
        %591 = vmatpush1.msra.mxu0 0.0
        %592 = vmatprep.subr.mxu0 0.0
        %593 = vmatpush1.msra.mxu0 0.0
        %594 = vmatprep.subr.mxu0 0.0
        %595 = vmatpush1.msra.mxu0 0.0
        %596 = vmatprep.subr.mxu0 0.0
        %597 = vmatpush1.msra.mxu0 0.0
        %598 = vmatprep.subr.mxu0 0.0
        %599 = vmatpush1.msra.mxu0 0.0
        %600 = vmatprep.subr.mxu0 0.0
        %601 = vmatpush1.msra.mxu0 0.0
        %602 = vmatprep.subr.mxu0 0.0
        %603 = vmatpush1.msra.mxu0 0.0
        %604 = vmatprep.subr.mxu0 0.0
        %605 = vmatpush1.msra.mxu0 0.0
        %606 = vmatprep.subr.mxu0 0.0
        %607 = vmatpush1.msra.mxu0 0.0
        %608 = vmatprep.subr.mxu0 %v576
        %609 = vmatpush1.msra.mxu0 %v573
        %610 = vmatprep.subr.mxu0 0.0
        %611 = vmatpush2.msra.mxu0 0.0
        %612 = vmatprep.subr.mxu0 0.0
        %613 = vmatpush2.msra.mxu0 0.0
        %614 = vmatprep.subr.mxu0 0.0
        %615 = vmatpush2.msra.mxu0 0.0
        %616 = vmatprep.subr.mxu0 0.0
        %617 = vmatpush2.msra.mxu0 0.0
        %618 = vmatprep.subr.mxu0 0.0
        %619 = vmatpush2.msra.mxu0 0.0
        %620 = vmatprep.subr.mxu0 0.0
        %621 = vmatpush2.msra.mxu0 0.0
        %622 = vmatprep.subr.mxu0 0.0
        %623 = vmatpush2.msra.mxu0 0.0
        %624 = vmatprep.subr.mxu0 0.0
        %625 = vmatpush2.msra.mxu0 0.0
        %626 = vmatprep.subr.mxu0 0.0
        %627 = vmatpush2.msra.mxu0 0.0
        %628 = vmatprep.subr.mxu0 0.0
        %629 = vmatpush2.msra.mxu0 0.0
        %630 = vmatprep.subr.mxu0 0.0
        %631 = vmatpush2.msra.mxu0 0.0
        %632 = vmatprep.subr.mxu0 0.0
        %633 = vmatpush2.msra.mxu0 0.0
        %634 = vmatprep.subr.mxu0 0.0
        %635 = vmatpush2.msra.mxu0 0.0
        %636 = vmatprep.subr.mxu0 0.0
        %637 = vmatpush2.msra.mxu0 0.0
        %638 = vmatprep.subr.mxu0 0.0
        %639 = vmatpush2.msra.mxu0 0.0
        %640 = vmatprep.subr.mxu0 0.0
        %641 = vmatpush2.msra.mxu0 0.0
        %642 = vmatprep.mubr.f32.mxu0 0.0
        %643 = vmatmul.mubr.f32.gmra.mxu0 %v570
        %v644 = vpop.f32.mrf.mxu0
        %v645 = vadd.f32 %v565, %v644
        %v646 = vpop.f32.mrf.mxu0
        %v647 = vadd.f32 %v567, %v646
        %648 = vdwg.mxu0
        %651 = vrot.lane.b32.xlu0 %v440, 2
        %v652 = vpop.permute.xlu0 %651
        %653 = vrot.lane.b32.xlu0 %v441, 2
        %v654 = vpop.permute.xlu0 %653
        %vm655 = vcmask 15360
        %v656 = vsel %vm655, %v652, %v654
        %v660 = vmul.f32 %v471, %v652
        %v661 = vmul.f32 %v467, %v656
        %v662 = vmul.f32 %v472, %v654
        %s663 = scalar_lea.vmem %s1, 16
        %v664 = vld [vmem:[%s663] sm:$0xff]
        %668 = vrot.lane.b32.xlu0 %v660, 126
        %v669 = vpop.permute.xlu0 %668
        %670 = vrot.lane.b32.xlu0 %v661, 126
        %v671 = vpop.permute.xlu0 %670
        %672 = vrot.lane.b32.xlu0 %v662, 126
        %v673 = vpop.permute.xlu0 %672
        %vm674 = vcmask 1031168
        %v675 = vsel %vm674, %v669, %v671
        %v676 = vsel %vm674, %v671, %v673
        %v678 = vsel %vm489, %v664, 0
        %v680 = vsel %vm493, %v675, 0
        %v682 = vsel %vm493, %v676, 0
        %684 = vmatprep.subr.mxu0 0.0
        %685 = vmatpush1.msra.mxu0 0.0
        %686 = vmatprep.subr.mxu0 0.0
        %687 = vmatpush1.msra.mxu0 0.0
        %688 = vmatprep.subr.mxu0 0.0
        %689 = vmatpush1.msra.mxu0 0.0
        %690 = vmatprep.subr.mxu0 0.0
        %691 = vmatpush1.msra.mxu0 0.0
        %692 = vmatprep.subr.mxu0 0.0
        %693 = vmatpush1.msra.mxu0 0.0
        %694 = vmatprep.subr.mxu0 0.0
        %695 = vmatpush1.msra.mxu0 0.0
        %696 = vmatprep.subr.mxu0 0.0
        %697 = vmatpush1.msra.mxu0 0.0
        %698 = vmatprep.subr.mxu0 0.0
        %699 = vmatpush1.msra.mxu0 0.0
        %700 = vmatprep.subr.mxu0 0.0
        %701 = vmatpush1.msra.mxu0 0.0
        %702 = vmatprep.subr.mxu0 0.0
        %703 = vmatpush1.msra.mxu0 0.0
        %704 = vmatprep.subr.mxu0 0.0
        %705 = vmatpush1.msra.mxu0 0.0
        %706 = vmatprep.subr.mxu0 0.0
        %707 = vmatpush1.msra.mxu0 0.0
        %708 = vmatprep.subr.mxu0 0.0
        %709 = vmatpush1.msra.mxu0 0.0
        %710 = vmatprep.subr.mxu0 0.0
        %711 = vmatpush1.msra.mxu0 0.0
        %712 = vmatprep.subr.mxu0 0.0
        %713 = vmatpush1.msra.mxu0 0.0
        %714 = vmatprep.subr.mxu0 %v682
        %715 = vmatpush1.msra.mxu0 %v680
        %716 = vmatprep.subr.mxu0 0.0
        %717 = vmatpush2.msra.mxu0 0.0
        %718 = vmatprep.subr.mxu0 0.0
        %719 = vmatpush2.msra.mxu0 0.0
        %720 = vmatprep.subr.mxu0 0.0
        %721 = vmatpush2.msra.mxu0 0.0
        %722 = vmatprep.subr.mxu0 0.0
        %723 = vmatpush2.msra.mxu0 0.0
        %724 = vmatprep.subr.mxu0 0.0
        %725 = vmatpush2.msra.mxu0 0.0
        %726 = vmatprep.subr.mxu0 0.0
        %727 = vmatpush2.msra.mxu0 0.0
        %728 = vmatprep.subr.mxu0 0.0
        %729 = vmatpush2.msra.mxu0 0.0
        %730 = vmatprep.subr.mxu0 0.0
        %731 = vmatpush2.msra.mxu0 0.0
        %732 = vmatprep.subr.mxu0 0.0
        %733 = vmatpush2.msra.mxu0 0.0
        %734 = vmatprep.subr.mxu0 0.0
        %735 = vmatpush2.msra.mxu0 0.0
        %736 = vmatprep.subr.mxu0 0.0
        %737 = vmatpush2.msra.mxu0 0.0
        %738 = vmatprep.subr.mxu0 0.0
        %739 = vmatpush2.msra.mxu0 0.0
        %740 = vmatprep.subr.mxu0 0.0
        %741 = vmatpush2.msra.mxu0 0.0
        %742 = vmatprep.subr.mxu0 0.0
        %743 = vmatpush2.msra.mxu0 0.0
        %744 = vmatprep.subr.mxu0 0.0
        %745 = vmatpush2.msra.mxu0 0.0
        %746 = vmatprep.subr.mxu0 0.0
        %747 = vmatpush2.msra.mxu0 0.0
        %748 = vmatprep.mubr.f32.mxu0 0.0
        %749 = vmatmul.mubr.f32.gmra.mxu0 %v678
        %v750 = vpop.f32.mrf.mxu0
        %v751 = vadd.f32 0.0, %v750
        %v752 = vpop.f32.mrf.mxu0
        %v753 = vadd.f32 0.0, %v752
        %754 = vdwg.mxu0
        %v755 = vadd.f32 %v645, %v751
        %v756 = vadd.f32 %v647, %v753
        %759 = vrot.lane.b32.xlu0 %v434, 16
        %v760 = vpop.permute.xlu0 %759
        %761 = vrot.lane.b32.xlu0 %v435, 16
        %v762 = vpop.permute.xlu0 %761
        %vm763 = vcmask 130048
        %v764 = vsel %vm763, %v760, %v762
        %v768 = vmul.f32 %v471, %v760
        %v769 = vmul.f32 %v467, %v764
        %v770 = vmul.f32 %v472, %v762
        %s771 = scalar_lea.vmem %s1, 24
        %v772 = vld [vmem:[%s771] sm:$0xff]
        %776 = vrot.lane.b32.xlu0 %v768, 112
        %v777 = vpop.permute.xlu0 %776
        %778 = vrot.lane.b32.xlu0 %v769, 112
        %v779 = vpop.permute.xlu0 %778
        %780 = vrot.lane.b32.xlu0 %v770, 112
        %v781 = vpop.permute.xlu0 %780
        %vm782 = vcmask 916480
        %v783 = vsel %vm782, %v777, %v779
        %v784 = vsel %vm782, %v779, %v781
        %v786 = vsel %vm489, %v772, 0
        %v788 = vsel %vm493, %v783, 0
        %v790 = vsel %vm493, %v784, 0
        %792 = vmatprep.subr.mxu0 0.0
        %793 = vmatpush1.msra.mxu0 0.0
        %794 = vmatprep.subr.mxu0 0.0
        %795 = vmatpush1.msra.mxu0 0.0
        %796 = vmatprep.subr.mxu0 0.0
        %797 = vmatpush1.msra.mxu0 0.0
        %798 = vmatprep.subr.mxu0 0.0
        %799 = vmatpush1.msra.mxu0 0.0
        %800 = vmatprep.subr.mxu0 0.0
        %801 = vmatpush1.msra.mxu0 0.0
        %802 = vmatprep.subr.mxu0 0.0
        %803 = vmatpush1.msra.mxu0 0.0
        %804 = vmatprep.subr.mxu0 0.0
        %805 = vmatpush1.msra.mxu0 0.0
        %806 = vmatprep.subr.mxu0 0.0
        %807 = vmatpush1.msra.mxu0 0.0
        %808 = vmatprep.subr.mxu0 0.0
        %809 = vmatpush1.msra.mxu0 0.0
        %810 = vmatprep.subr.mxu0 0.0
        %811 = vmatpush1.msra.mxu0 0.0
        %812 = vmatprep.subr.mxu0 0.0
        %813 = vmatpush1.msra.mxu0 0.0
        %814 = vmatprep.subr.mxu0 0.0
        %815 = vmatpush1.msra.mxu0 0.0
        %816 = vmatprep.subr.mxu0 0.0
        %817 = vmatpush1.msra.mxu0 0.0
        %818 = vmatprep.subr.mxu0 0.0
        %819 = vmatpush1.msra.mxu0 0.0
        %820 = vmatprep.subr.mxu0 0.0
        %821 = vmatpush1.msra.mxu0 0.0
        %822 = vmatprep.subr.mxu0 %v790
        %823 = vmatpush1.msra.mxu0 %v788
        %824 = vmatprep.subr.mxu0 0.0
        %825 = vmatpush2.msra.mxu0 0.0
        %826 = vmatprep.subr.mxu0 0.0
        %827 = vmatpush2.msra.mxu0 0.0
        %828 = vmatprep.subr.mxu0 0.0
        %829 = vmatpush2.msra.mxu0 0.0
        %830 = vmatprep.subr.mxu0 0.0
        %831 = vmatpush2.msra.mxu0 0.0
        %832 = vmatprep.subr.mxu0 0.0
        %833 = vmatpush2.msra.mxu0 0.0
        %834 = vmatprep.subr.mxu0 0.0
        %835 = vmatpush2.msra.mxu0 0.0
        %836 = vmatprep.subr.mxu0 0.0
        %837 = vmatpush2.msra.mxu0 0.0
        %838 = vmatprep.subr.mxu0 0.0
        %839 = vmatpush2.msra.mxu0 0.0
        %840 = vmatprep.subr.mxu0 0.0
        %841 = vmatpush2.msra.mxu0 0.0
        %842 = vmatprep.subr.mxu0 0.0
        %843 = vmatpush2.msra.mxu0 0.0
        %844 = vmatprep.subr.mxu0 0.0
        %845 = vmatpush2.msra.mxu0 0.0
        %846 = vmatprep.subr.mxu0 0.0
        %847 = vmatpush2.msra.mxu0 0.0
        %848 = vmatprep.subr.mxu0 0.0
        %849 = vmatpush2.msra.mxu0 0.0
        %850 = vmatprep.subr.mxu0 0.0
        %851 = vmatpush2.msra.mxu0 0.0
        %852 = vmatprep.subr.mxu0 0.0
        %853 = vmatpush2.msra.mxu0 0.0
        %854 = vmatprep.subr.mxu0 0.0
        %855 = vmatpush2.msra.mxu0 0.0
        %856 = vmatprep.mubr.f32.mxu0 0.0
        %857 = vmatmul.mubr.f32.gmra.mxu0 %v786
        %v858 = vpop.f32.mrf.mxu0
        %v859 = vadd.f32 0.0, %v858
        %v860 = vpop.f32.mrf.mxu0
        %v861 = vadd.f32 0.0, %v860
        %862 = vdwg.mxu0
        %v863 = vadd.f32 %v755, %v859
        %v864 = vadd.f32 %v756, %v861
        %s865 = scalar_lea.vmem %s1, 32
        %v866 = vld [vmem:[%s865] sm:$0xff]
        %867 = vrot.lane.b32.xlu0 %v471, 111
        %v868 = vpop.permute.xlu0 %867
        %869 = vrot.lane.b32.xlu0 %v467, 111
        %v870 = vpop.permute.xlu0 %869
        %871 = vrot.lane.b32.xlu0 %v472, 111
        %v872 = vpop.permute.xlu0 %871
        %vm873 = vcmask 908288
        %v874 = vsel %vm873, %v868, %v870
        %v875 = vsel %vm873, %v870, %v872
        %v877 = vsel %vm489, %v866, 0
        %v879 = vsel %vm493, %v874, 0
        %v881 = vsel %vm493, %v875, 0
        %883 = vmatprep.subr.mxu0 0.0
        %884 = vmatpush1.msra.mxu0 0.0
        %885 = vmatprep.subr.mxu0 0.0
        %886 = vmatpush1.msra.mxu0 0.0
        %887 = vmatprep.subr.mxu0 0.0
        %888 = vmatpush1.msra.mxu0 0.0
        %889 = vmatprep.subr.mxu0 0.0
        %890 = vmatpush1.msra.mxu0 0.0
        %891 = vmatprep.subr.mxu0 0.0
        %892 = vmatpush1.msra.mxu0 0.0
        %893 = vmatprep.subr.mxu0 0.0
        %894 = vmatpush1.msra.mxu0 0.0
        %895 = vmatprep.subr.mxu0 0.0
        %896 = vmatpush1.msra.mxu0 0.0
        %897 = vmatprep.subr.mxu0 0.0
        %898 = vmatpush1.msra.mxu0 0.0
        %899 = vmatprep.subr.mxu0 0.0
        %900 = vmatpush1.msra.mxu0 0.0
        %901 = vmatprep.subr.mxu0 0.0
        %902 = vmatpush1.msra.mxu0 0.0
        %903 = vmatprep.subr.mxu0 0.0
        %904 = vmatpush1.msra.mxu0 0.0
        %905 = vmatprep.subr.mxu0 0.0
        %906 = vmatpush1.msra.mxu0 0.0
        %907 = vmatprep.subr.mxu0 0.0
        %908 = vmatpush1.msra.mxu0 0.0
        %909 = vmatprep.subr.mxu0 0.0
        %910 = vmatpush1.msra.mxu0 0.0
        %911 = vmatprep.subr.mxu0 0.0
        %912 = vmatpush1.msra.mxu0 0.0
        %913 = vmatprep.subr.mxu0 %v881
        %914 = vmatpush1.msra.mxu0 %v879
        %915 = vmatprep.subr.mxu0 0.0
        %916 = vmatpush2.msra.mxu0 0.0
        %917 = vmatprep.subr.mxu0 0.0
        %918 = vmatpush2.msra.mxu0 0.0
        %919 = vmatprep.subr.mxu0 0.0
        %920 = vmatpush2.msra.mxu0 0.0
        %921 = vmatprep.subr.mxu0 0.0
        %922 = vmatpush2.msra.mxu0 0.0
        %923 = vmatprep.subr.mxu0 0.0
        %924 = vmatpush2.msra.mxu0 0.0
        %925 = vmatprep.subr.mxu0 0.0
        %926 = vmatpush2.msra.mxu0 0.0
        %927 = vmatprep.subr.mxu0 0.0
        %928 = vmatpush2.msra.mxu0 0.0
        %929 = vmatprep.subr.mxu0 0.0
        %930 = vmatpush2.msra.mxu0 0.0
        %931 = vmatprep.subr.mxu0 0.0
        %932 = vmatpush2.msra.mxu0 0.0
        %933 = vmatprep.subr.mxu0 0.0
        %934 = vmatpush2.msra.mxu0 0.0
        %935 = vmatprep.subr.mxu0 0.0
        %936 = vmatpush2.msra.mxu0 0.0
        %937 = vmatprep.subr.mxu0 0.0
        %938 = vmatpush2.msra.mxu0 0.0
        %939 = vmatprep.subr.mxu0 0.0
        %940 = vmatpush2.msra.mxu0 0.0
        %941 = vmatprep.subr.mxu0 0.0
        %942 = vmatpush2.msra.mxu0 0.0
        %943 = vmatprep.subr.mxu0 0.0
        %944 = vmatpush2.msra.mxu0 0.0
        %945 = vmatprep.subr.mxu0 0.0
        %946 = vmatpush2.msra.mxu0 0.0
        %947 = vmatprep.mubr.f32.mxu0 0.0
        %948 = vmatmul.mubr.f32.gmra.mxu0 %v877
        %v949 = vpop.f32.mrf.mxu0
        %v950 = vadd.f32 0.0, %v949
        %v951 = vpop.f32.mrf.mxu0
        %v952 = vadd.f32 0.0, %v951
        %953 = vdwg.mxu0
        %v954 = vadd.f32 %v863, %v950
        %v955 = vadd.f32 %v864, %v952
        %956 = vrot.lane.b32.xlu0 %v440, 18
        %v957 = vpop.permute.xlu0 %956
        %958 = vrot.lane.b32.xlu0 %v441, 18
        %v959 = vpop.permute.xlu0 %958
        %vm960 = vcmask 146432
        %v961 = vsel %vm960, %v957, %v959
        %v965 = vmul.f32 %v471, %v957
        %v966 = vmul.f32 %v467, %v961
        %v967 = vmul.f32 %v472, %v959
        %s968 = scalar_lea.vmem %s1, 40
        %v969 = vld [vmem:[%s968] sm:$0xff]
        %973 = vrot.lane.b32.xlu0 %v965, 110
        %v974 = vpop.permute.xlu0 %973
        %975 = vrot.lane.b32.xlu0 %v966, 110
        %v976 = vpop.permute.xlu0 %975
        %977 = vrot.lane.b32.xlu0 %v967, 110
        %v978 = vpop.permute.xlu0 %977
        %vm979 = vcmask 900096
        %v980 = vsel %vm979, %v974, %v976
        %v981 = vsel %vm979, %v976, %v978
        %v983 = vsel %vm489, %v969, 0
        %v985 = vsel %vm493, %v980, 0
        %v987 = vsel %vm493, %v981, 0
        %989 = vmatprep.subr.mxu0 0.0
        %990 = vmatpush1.msra.mxu0 0.0
        %991 = vmatprep.subr.mxu0 0.0
        %992 = vmatpush1.msra.mxu0 0.0
        %993 = vmatprep.subr.mxu0 0.0
        %994 = vmatpush1.msra.mxu0 0.0
        %995 = vmatprep.subr.mxu0 0.0
        %996 = vmatpush1.msra.mxu0 0.0
        %997 = vmatprep.subr.mxu0 0.0
        %998 = vmatpush1.msra.mxu0 0.0
        %999 = vmatprep.subr.mxu0 0.0
        %1000 = vmatpush1.msra.mxu0 0.0
        %1001 = vmatprep.subr.mxu0 0.0
        %1002 = vmatpush1.msra.mxu0 0.0
        %1003 = vmatprep.subr.mxu0 0.0
        %1004 = vmatpush1.msra.mxu0 0.0
        %1005 = vmatprep.subr.mxu0 0.0
        %1006 = vmatpush1.msra.mxu0 0.0
        %1007 = vmatprep.subr.mxu0 0.0
        %1008 = vmatpush1.msra.mxu0 0.0
        %1009 = vmatprep.subr.mxu0 0.0
        %1010 = vmatpush1.msra.mxu0 0.0
        %1011 = vmatprep.subr.mxu0 0.0
        %1012 = vmatpush1.msra.mxu0 0.0
        %1013 = vmatprep.subr.mxu0 0.0
        %1014 = vmatpush1.msra.mxu0 0.0
        %1015 = vmatprep.subr.mxu0 0.0
        %1016 = vmatpush1.msra.mxu0 0.0
        %1017 = vmatprep.subr.mxu0 0.0
        %1018 = vmatpush1.msra.mxu0 0.0
        %1019 = vmatprep.subr.mxu0 %v987
        %1020 = vmatpush1.msra.mxu0 %v985
        %1021 = vmatprep.subr.mxu0 0.0
        %1022 = vmatpush2.msra.mxu0 0.0
        %1023 = vmatprep.subr.mxu0 0.0
        %1024 = vmatpush2.msra.mxu0 0.0
        %1025 = vmatprep.subr.mxu0 0.0
        %1026 = vmatpush2.msra.mxu0 0.0
        %1027 = vmatprep.subr.mxu0 0.0
        %1028 = vmatpush2.msra.mxu0 0.0
        %1029 = vmatprep.subr.mxu0 0.0
        %1030 = vmatpush2.msra.mxu0 0.0
        %1031 = vmatprep.subr.mxu0 0.0
        %1032 = vmatpush2.msra.mxu0 0.0
        %1033 = vmatprep.subr.mxu0 0.0
        %1034 = vmatpush2.msra.mxu0 0.0
        %1035 = vmatprep.subr.mxu0 0.0
        %1036 = vmatpush2.msra.mxu0 0.0
        %1037 = vmatprep.subr.mxu0 0.0
        %1038 = vmatpush2.msra.mxu0 0.0
        %1039 = vmatprep.subr.mxu0 0.0
        %1040 = vmatpush2.msra.mxu0 0.0
        %1041 = vmatprep.subr.mxu0 0.0
        %1042 = vmatpush2.msra.mxu0 0.0
        %1043 = vmatprep.subr.mxu0 0.0
        %1044 = vmatpush2.msra.mxu0 0.0
        %1045 = vmatprep.subr.mxu0 0.0
        %1046 = vmatpush2.msra.mxu0 0.0
        %1047 = vmatprep.subr.mxu0 0.0
        %1048 = vmatpush2.msra.mxu0 0.0
        %1049 = vmatprep.subr.mxu0 0.0
        %1050 = vmatpush2.msra.mxu0 0.0
        %1051 = vmatprep.subr.mxu0 0.0
        %1052 = vmatpush2.msra.mxu0 0.0
        %1053 = vmatprep.mubr.f32.mxu0 0.0
        %1054 = vmatmul.mubr.f32.gmra.mxu0 %v983
        %v1055 = vpop.f32.mrf.mxu0
        %v1056 = vadd.f32 0.0, %v1055
        %v1057 = vpop.f32.mrf.mxu0
        %v1058 = vadd.f32 0.0, %v1057
        %1059 = vdwg.mxu0
        %v1060 = vadd.f32 %v954, %v1056
        %v1061 = vadd.f32 %v955, %v1058
        %1062 = vrot.lane.b32.xlu0 %v434, 32
        %v1063 = vpop.permute.xlu0 %1062
        %1064 = vrot.lane.b32.xlu0 %v435, 32
        %v1065 = vpop.permute.xlu0 %1064
        %vm1066 = vcmask 261120
        %v1067 = vsel %vm1066, %v1063, %v1065
        %v1071 = vmul.f32 %v471, %v1063
        %v1072 = vmul.f32 %v467, %v1067
        %v1073 = vmul.f32 %v472, %v1065
        %s1074 = scalar_lea.vmem %s1, 48
        %v1075 = vld [vmem:[%s1074] sm:$0xff]
        %1079 = vrot.lane.b32.xlu0 %v1071, 96
        %v1080 = vpop.permute.xlu0 %1079
        %1081 = vrot.lane.b32.xlu0 %v1072, 96
        %v1082 = vpop.permute.xlu0 %1081
        %1083 = vrot.lane.b32.xlu0 %v1073, 96
        %v1084 = vpop.permute.xlu0 %1083
        %vm1085 = vcmask 785408
        %v1086 = vsel %vm1085, %v1080, %v1082
        %v1087 = vsel %vm1085, %v1082, %v1084
        %v1089 = vsel %vm489, %v1075, 0
        %v1091 = vsel %vm493, %v1086, 0
        %v1093 = vsel %vm493, %v1087, 0
        %1095 = vmatprep.subr.mxu0 0.0
        %1096 = vmatpush1.msra.mxu0 0.0
        %1097 = vmatprep.subr.mxu0 0.0
        %1098 = vmatpush1.msra.mxu0 0.0
        %1099 = vmatprep.subr.mxu0 0.0
        %1100 = vmatpush1.msra.mxu0 0.0
        %1101 = vmatprep.subr.mxu0 0.0
        %1102 = vmatpush1.msra.mxu0 0.0
        %1103 = vmatprep.subr.mxu0 0.0
        %1104 = vmatpush1.msra.mxu0 0.0
        %1105 = vmatprep.subr.mxu0 0.0
        %1106 = vmatpush1.msra.mxu0 0.0
        %1107 = vmatprep.subr.mxu0 0.0
        %1108 = vmatpush1.msra.mxu0 0.0
        %1109 = vmatprep.subr.mxu0 0.0
        %1110 = vmatpush1.msra.mxu0 0.0
        %1111 = vmatprep.subr.mxu0 0.0
        %1112 = vmatpush1.msra.mxu0 0.0
        %1113 = vmatprep.subr.mxu0 0.0
        %1114 = vmatpush1.msra.mxu0 0.0
        %1115 = vmatprep.subr.mxu0 0.0
        %1116 = vmatpush1.msra.mxu0 0.0
        %1117 = vmatprep.subr.mxu0 0.0
        %1118 = vmatpush1.msra.mxu0 0.0
        %1119 = vmatprep.subr.mxu0 0.0
        %1120 = vmatpush1.msra.mxu0 0.0
        %1121 = vmatprep.subr.mxu0 0.0
        %1122 = vmatpush1.msra.mxu0 0.0
        %1123 = vmatprep.subr.mxu0 0.0
        %1124 = vmatpush1.msra.mxu0 0.0
        %1125 = vmatprep.subr.mxu0 %v1093
        %1126 = vmatpush1.msra.mxu0 %v1091
        %1127 = vmatprep.subr.mxu0 0.0
        %1128 = vmatpush2.msra.mxu0 0.0
        %1129 = vmatprep.subr.mxu0 0.0
        %1130 = vmatpush2.msra.mxu0 0.0
        %1131 = vmatprep.subr.mxu0 0.0
        %1132 = vmatpush2.msra.mxu0 0.0
        %1133 = vmatprep.subr.mxu0 0.0
        %1134 = vmatpush2.msra.mxu0 0.0
        %1135 = vmatprep.subr.mxu0 0.0
        %1136 = vmatpush2.msra.mxu0 0.0
        %1137 = vmatprep.subr.mxu0 0.0
        %1138 = vmatpush2.msra.mxu0 0.0
        %1139 = vmatprep.subr.mxu0 0.0
        %1140 = vmatpush2.msra.mxu0 0.0
        %1141 = vmatprep.subr.mxu0 0.0
        %1142 = vmatpush2.msra.mxu0 0.0
        %1143 = vmatprep.subr.mxu0 0.0
        %1144 = vmatpush2.msra.mxu0 0.0
        %1145 = vmatprep.subr.mxu0 0.0
        %1146 = vmatpush2.msra.mxu0 0.0
        %1147 = vmatprep.subr.mxu0 0.0
        %1148 = vmatpush2.msra.mxu0 0.0
        %1149 = vmatprep.subr.mxu0 0.0
        %1150 = vmatpush2.msra.mxu0 0.0
        %1151 = vmatprep.subr.mxu0 0.0
        %1152 = vmatpush2.msra.mxu0 0.0
        %1153 = vmatprep.subr.mxu0 0.0
        %1154 = vmatpush2.msra.mxu0 0.0
        %1155 = vmatprep.subr.mxu0 0.0
        %1156 = vmatpush2.msra.mxu0 0.0
        %1157 = vmatprep.subr.mxu0 0.0
        %1158 = vmatpush2.msra.mxu0 0.0
        %1159 = vmatprep.mubr.f32.mxu0 0.0
        %1160 = vmatmul.mubr.f32.gmra.mxu0 %v1089
        %v1161 = vpop.f32.mrf.mxu0
        %v1162 = vadd.f32 0.0, %v1161
        %v1163 = vpop.f32.mrf.mxu0
        %v1164 = vadd.f32 0.0, %v1163
        %1165 = vdwg.mxu0
        %v1166 = vadd.f32 %v1060, %v1162
        %v1167 = vadd.f32 %v1061, %v1164
        %s1168 = scalar_lea.vmem %s1, 56
        %v1169 = vld [vmem:[%s1168] sm:$0xff]
        %1170 = vrot.lane.b32.xlu0 %v471, 95
        %v1171 = vpop.permute.xlu0 %1170
        %1172 = vrot.lane.b32.xlu0 %v467, 95
        %v1173 = vpop.permute.xlu0 %1172
        %1174 = vrot.lane.b32.xlu0 %v472, 95
        %v1175 = vpop.permute.xlu0 %1174
        %vm1176 = vcmask 777216
        %v1177 = vsel %vm1176, %v1171, %v1173
        %v1178 = vsel %vm1176, %v1173, %v1175
        %v1180 = vsel %vm489, %v1169, 0
        %v1182 = vsel %vm493, %v1177, 0
        %v1184 = vsel %vm493, %v1178, 0
        %1186 = vmatprep.subr.mxu0 0.0
        %1187 = vmatpush1.msra.mxu0 0.0
        %1188 = vmatprep.subr.mxu0 0.0
        %1189 = vmatpush1.msra.mxu0 0.0
        %1190 = vmatprep.subr.mxu0 0.0
        %1191 = vmatpush1.msra.mxu0 0.0
        %1192 = vmatprep.subr.mxu0 0.0
        %1193 = vmatpush1.msra.mxu0 0.0
        %1194 = vmatprep.subr.mxu0 0.0
        %1195 = vmatpush1.msra.mxu0 0.0
        %1196 = vmatprep.subr.mxu0 0.0
        %1197 = vmatpush1.msra.mxu0 0.0
        %1198 = vmatprep.subr.mxu0 0.0
        %1199 = vmatpush1.msra.mxu0 0.0
        %1200 = vmatprep.subr.mxu0 0.0
        %1201 = vmatpush1.msra.mxu0 0.0
        %1202 = vmatprep.subr.mxu0 0.0
        %1203 = vmatpush1.msra.mxu0 0.0
        %1204 = vmatprep.subr.mxu0 0.0
        %1205 = vmatpush1.msra.mxu0 0.0
        %1206 = vmatprep.subr.mxu0 0.0
        %1207 = vmatpush1.msra.mxu0 0.0
        %1208 = vmatprep.subr.mxu0 0.0
        %1209 = vmatpush1.msra.mxu0 0.0
        %1210 = vmatprep.subr.mxu0 0.0
        %1211 = vmatpush1.msra.mxu0 0.0
        %1212 = vmatprep.subr.mxu0 0.0
        %1213 = vmatpush1.msra.mxu0 0.0
        %1214 = vmatprep.subr.mxu0 0.0
        %1215 = vmatpush1.msra.mxu0 0.0
        %1216 = vmatprep.subr.mxu0 %v1184
        %1217 = vmatpush1.msra.mxu0 %v1182
        %1218 = vmatprep.subr.mxu0 0.0
        %1219 = vmatpush2.msra.mxu0 0.0
        %1220 = vmatprep.subr.mxu0 0.0
        %1221 = vmatpush2.msra.mxu0 0.0
        %1222 = vmatprep.subr.mxu0 0.0
        %1223 = vmatpush2.msra.mxu0 0.0
        %1224 = vmatprep.subr.mxu0 0.0
        %1225 = vmatpush2.msra.mxu0 0.0
        %1226 = vmatprep.subr.mxu0 0.0
        %1227 = vmatpush2.msra.mxu0 0.0
        %1228 = vmatprep.subr.mxu0 0.0
        %1229 = vmatpush2.msra.mxu0 0.0
        %1230 = vmatprep.subr.mxu0 0.0
        %1231 = vmatpush2.msra.mxu0 0.0
        %1232 = vmatprep.subr.mxu0 0.0
        %1233 = vmatpush2.msra.mxu0 0.0
        %1234 = vmatprep.subr.mxu0 0.0
        %1235 = vmatpush2.msra.mxu0 0.0
        %1236 = vmatprep.subr.mxu0 0.0
        %1237 = vmatpush2.msra.mxu0 0.0
        %1238 = vmatprep.subr.mxu0 0.0
        %1239 = vmatpush2.msra.mxu0 0.0
        %1240 = vmatprep.subr.mxu0 0.0
        %1241 = vmatpush2.msra.mxu0 0.0
        %1242 = vmatprep.subr.mxu0 0.0
        %1243 = vmatpush2.msra.mxu0 0.0
        %1244 = vmatprep.subr.mxu0 0.0
        %1245 = vmatpush2.msra.mxu0 0.0
        %1246 = vmatprep.subr.mxu0 0.0
        %1247 = vmatpush2.msra.mxu0 0.0
        %1248 = vmatprep.subr.mxu0 0.0
        %1249 = vmatpush2.msra.mxu0 0.0
        %1250 = vmatprep.mubr.f32.mxu0 0.0
        %1251 = vmatmul.mubr.f32.gmra.mxu0 %v1180
        %v1252 = vpop.f32.mrf.mxu0
        %v1253 = vadd.f32 0.0, %v1252
        %v1254 = vpop.f32.mrf.mxu0
        %v1255 = vadd.f32 0.0, %v1254
        %1256 = vdwg.mxu0
        %v1257 = vadd.f32 %v1166, %v1253
        %v1258 = vadd.f32 %v1167, %v1255
        %1259 = vrot.lane.b32.xlu0 %v440, 34
        %v1260 = vpop.permute.xlu0 %1259
        %1261 = vrot.lane.b32.xlu0 %v441, 34
        %v1262 = vpop.permute.xlu0 %1261
        %vm1263 = vcmask 277504
        %v1264 = vsel %vm1263, %v1260, %v1262
        %v1268 = vmul.f32 %v471, %v1260
        %v1269 = vmul.f32 %v467, %v1264
        %v1270 = vmul.f32 %v472, %v1262
        %s1271 = scalar_lea.vmem %s1, 64
        %v1272 = vld [vmem:[%s1271] sm:$0xff]
        %1276 = vrot.lane.b32.xlu0 %v1268, 94
        %v1277 = vpop.permute.xlu0 %1276
        %1278 = vrot.lane.b32.xlu0 %v1269, 94
        %v1279 = vpop.permute.xlu0 %1278
        %1280 = vrot.lane.b32.xlu0 %v1270, 94
        %v1281 = vpop.permute.xlu0 %1280
        %vm1282 = vcmask 769024
        %v1283 = vsel %vm1282, %v1277, %v1279
        %v1284 = vsel %vm1282, %v1279, %v1281
        %v1286 = vsel %vm489, %v1272, 0
        %v1288 = vsel %vm493, %v1283, 0
        %v1290 = vsel %vm493, %v1284, 0
        %1292 = vmatprep.subr.mxu0 0.0
        %1293 = vmatpush1.msra.mxu0 0.0
        %1294 = vmatprep.subr.mxu0 0.0
        %1295 = vmatpush1.msra.mxu0 0.0
        %1296 = vmatprep.subr.mxu0 0.0
        %1297 = vmatpush1.msra.mxu0 0.0
        %1298 = vmatprep.subr.mxu0 0.0
        %1299 = vmatpush1.msra.mxu0 0.0
        %1300 = vmatprep.subr.mxu0 0.0
        %1301 = vmatpush1.msra.mxu0 0.0
        %1302 = vmatprep.subr.mxu0 0.0
        %1303 = vmatpush1.msra.mxu0 0.0
        %1304 = vmatprep.subr.mxu0 0.0
        %1305 = vmatpush1.msra.mxu0 0.0
        %1306 = vmatprep.subr.mxu0 0.0
        %1307 = vmatpush1.msra.mxu0 0.0
        %1308 = vmatprep.subr.mxu0 0.0
        %1309 = vmatpush1.msra.mxu0 0.0
        %1310 = vmatprep.subr.mxu0 0.0
        %1311 = vmatpush1.msra.mxu0 0.0
        %1312 = vmatprep.subr.mxu0 0.0
        %1313 = vmatpush1.msra.mxu0 0.0
        %1314 = vmatprep.subr.mxu0 0.0
        %1315 = vmatpush1.msra.mxu0 0.0
        %1316 = vmatprep.subr.mxu0 0.0
        %1317 = vmatpush1.msra.mxu0 0.0
        %1318 = vmatprep.subr.mxu0 0.0
        %1319 = vmatpush1.msra.mxu0 0.0
        %1320 = vmatprep.subr.mxu0 0.0
        %1321 = vmatpush1.msra.mxu0 0.0
        %1322 = vmatprep.subr.mxu0 %v1290
        %1323 = vmatpush1.msra.mxu0 %v1288
        %1324 = vmatprep.subr.mxu0 0.0
        %1325 = vmatpush2.msra.mxu0 0.0
        %1326 = vmatprep.subr.mxu0 0.0
        %1327 = vmatpush2.msra.mxu0 0.0
        %1328 = vmatprep.subr.mxu0 0.0
        %1329 = vmatpush2.msra.mxu0 0.0
        %1330 = vmatprep.subr.mxu0 0.0
        %1331 = vmatpush2.msra.mxu0 0.0
        %1332 = vmatprep.subr.mxu0 0.0
        %1333 = vmatpush2.msra.mxu0 0.0
        %1334 = vmatprep.subr.mxu0 0.0
        %1335 = vmatpush2.msra.mxu0 0.0
        %1336 = vmatprep.subr.mxu0 0.0
        %1337 = vmatpush2.msra.mxu0 0.0
        %1338 = vmatprep.subr.mxu0 0.0
        %1339 = vmatpush2.msra.mxu0 0.0
        %1340 = vmatprep.subr.mxu0 0.0
        %1341 = vmatpush2.msra.mxu0 0.0
        %1342 = vmatprep.subr.mxu0 0.0
        %1343 = vmatpush2.msra.mxu0 0.0
        %1344 = vmatprep.subr.mxu0 0.0
        %1345 = vmatpush2.msra.mxu0 0.0
        %1346 = vmatprep.subr.mxu0 0.0
        %1347 = vmatpush2.msra.mxu0 0.0
        %1348 = vmatprep.subr.mxu0 0.0
        %1349 = vmatpush2.msra.mxu0 0.0
        %1350 = vmatprep.subr.mxu0 0.0
        %1351 = vmatpush2.msra.mxu0 0.0
        %1352 = vmatprep.subr.mxu0 0.0
        %1353 = vmatpush2.msra.mxu0 0.0
        %1354 = vmatprep.subr.mxu0 0.0
        %1355 = vmatpush2.msra.mxu0 0.0
        %1356 = vmatprep.mubr.f32.mxu0 0.0
        %1357 = vmatmul.mubr.f32.gmra.mxu0 %v1286
        %v1358 = vpop.f32.mrf.mxu0
        %v1359 = vadd.f32 0.0, %v1358
        %v1360 = vpop.f32.mrf.mxu0
        %v1361 = vadd.f32 0.0, %v1360
        %1362 = vdwg.mxu0
        %v1363 = vadd.f32 %v1257, %v1359
        %v1364 = vadd.f32 %v1258, %v1361
        %v1365 = vld [vmem:[%s2] sm:$0xff]
        %1367 = vset.pattern.permute.xlu0 0
        %1368 = vperm.xlu0 %1367, %v1365
        %v1369 = vpop.permute.xlu0 %1368
        %v1371 = vadd.f32 %v1363, %v1369
        %v1372 = vadd.f32 %v1364, %v1369
        %v1373 = vmax.f32 %v1371, 0.0
        %v1374 = vmax.f32 %v1372, 0.0
        %v1375 = vld [vmem:[%s9] sm:$0xff]
        %v1376 = vld [vmem:[%s9 + $0x8] sm:$0xff]
        %v1377 = vld [vmem:[%s9 + $0x10] sm:$0xff]
        %v1378 = vld [vmem:[%s9 + $0x18] sm:$0xff]
        %v1379 = vld [vmem:[%s9 + $0x20] sm:$0xff]
        %v1380 = vld [vmem:[%s9 + $0x28] sm:$0xff]
        %v1381 = vld [vmem:[%s9 + $0x30] sm:$0xff]
        %v1382 = vld [vmem:[%s9 + $0x38] sm:$0xff]
        %v1383 = vld [vmem:[%s9 + $0x40] sm:$0xff]
        %v1384 = vld [vmem:[%s9 + $0x48] sm:$0xff]
        %v1385 = vld [vmem:[%s9 + $0x50] sm:$0xff]
        %v1386 = vld [vmem:[%s9 + $0x58] sm:$0xff]
        %v1387 = vld [vmem:[%s9 + $0x60] sm:$0xff]
        %v1388 = vld [vmem:[%s9 + $0x68] sm:$0xff]
        %v1389 = vld [vmem:[%s9 + $0x70] sm:$0xff]
        %v1390 = vld [vmem:[%s9 + $0x78] sm:$0xff]
        %v1391 = vld [vmem:[%s9 + $0x80] sm:$0xff]
        %v1392 = vld [vmem:[%s9 + $0x88] sm:$0xff]
        %v1393 = vld [vmem:[%s9 + $0x90] sm:$0xff]
        %v1394 = vld [vmem:[%s9 + $0x98] sm:$0xff]
        %v1395 = vld [vmem:[%s9 + $0xa0] sm:$0xff]
        %v1396 = vld [vmem:[%s9 + $0xa8] sm:$0xff]
        %v1397 = vld [vmem:[%s9 + $0xb0] sm:$0xff]
        %v1398 = vld [vmem:[%s9 + $0xb8] sm:$0xff]
        %v1399 = vld [vmem:[%s9 + $0xc0] sm:$0xff]
        %v1400 = vld [vmem:[%s9 + $0xc8] sm:$0xff]
        %v1401 = vld [vmem:[%s9 + $0xd0] sm:$0xff]
        %v1402 = vld [vmem:[%s9 + $0xd8] sm:$0xff]
        %v1403 = vld [vmem:[%s9 + $0xe0] sm:$0xff]
        %v1404 = vld [vmem:[%s9 + $0xe8] sm:$0xff]
        %v1405 = vld [vmem:[%s9 + $0xf0] sm:$0xff]
        %v1406 = vld [vmem:[%s9 + $0xf8] sm:$0xff]
        %1410 = vrot.lane.b32.xlu0 %v1373, 127
        %v1411 = vpop.permute.xlu0 %1410
        %1412 = vrot.lane.b32.xlu0 %v1374, 127
        %v1413 = vpop.permute.xlu0 %1412
        %1414 = vrot.lane.b32.xlu0 0.0, 127
        %v1415 = vpop.permute.xlu0 %1414
        %v1416 = vsel %vm486, %v1411, %v1413
        %v1417 = vsel %vm486, %v1413, %v1415
        %v1420 = vmax.f32 %v1373, %v1416
        %v1421 = vmax.f32 %v1374, %v1417
        %v1423 = vmax.f32 %v1415, 0.0
        %1427 = vrot.lane.b32.xlu0 %v1420, 112
        %v1428 = vpop.permute.xlu0 %1427
        %1429 = vrot.lane.b32.xlu0 %v1421, 112
        %v1430 = vpop.permute.xlu0 %1429
        %1431 = vrot.lane.b32.xlu0 %v1423, 112
        %v1432 = vpop.permute.xlu0 %1431
        %v1433 = vsel %vm782, %v1428, %v1430
        %v1434 = vsel %vm782, %v1430, %v1432
        %v1437 = vmax.f32 %v1420, %v1433
        %v1438 = vmax.f32 %v1421, %v1434
        %1439 = vmatprep.subr.mxu0 0.0
        %1440 = vmatpush1.msra.mxu0 %v1390
        %1441 = vmatprep.subr.mxu0 0.0
        %1442 = vmatpush1.msra.mxu0 %v1389
        %1443 = vmatprep.subr.mxu0 0.0
        %1444 = vmatpush1.msra.mxu0 %v1388
        %1445 = vmatprep.subr.mxu0 0.0
        %1446 = vmatpush1.msra.mxu0 %v1387
        %1447 = vmatprep.subr.mxu0 0.0
        %1448 = vmatpush1.msra.mxu0 %v1386
        %1449 = vmatprep.subr.mxu0 0.0
        %1450 = vmatpush1.msra.mxu0 %v1385
        %1451 = vmatprep.subr.mxu0 0.0
        %1452 = vmatpush1.msra.mxu0 %v1384
        %1453 = vmatprep.subr.mxu0 0.0
        %1454 = vmatpush1.msra.mxu0 %v1383
        %1455 = vmatprep.subr.mxu0 0.0
        %1456 = vmatpush1.msra.mxu0 %v1382
        %1457 = vmatprep.subr.mxu0 0.0
        %1458 = vmatpush1.msra.mxu0 %v1381
        %1459 = vmatprep.subr.mxu0 0.0
        %1460 = vmatpush1.msra.mxu0 %v1380
        %1461 = vmatprep.subr.mxu0 0.0
        %1462 = vmatpush1.msra.mxu0 %v1379
        %1463 = vmatprep.subr.mxu0 0.0
        %1464 = vmatpush1.msra.mxu0 %v1378
        %1465 = vmatprep.subr.mxu0 0.0
        %1466 = vmatpush1.msra.mxu0 %v1377
        %1467 = vmatprep.subr.mxu0 0.0
        %1468 = vmatpush1.msra.mxu0 %v1376
        %1469 = vmatprep.subr.mxu0 0.0
        %1470 = vmatpush1.msra.mxu0 %v1375
        %1471 = vmatprep.subr.mxu0 0.0
        %1472 = vmatpush2.msra.mxu0 %v1406
        %1473 = vmatprep.subr.mxu0 0.0
        %1474 = vmatpush2.msra.mxu0 %v1405
        %1475 = vmatprep.subr.mxu0 0.0
        %1476 = vmatpush2.msra.mxu0 %v1404
        %1477 = vmatprep.subr.mxu0 0.0
        %1478 = vmatpush2.msra.mxu0 %v1403
        %1479 = vmatprep.subr.mxu0 0.0
        %1480 = vmatpush2.msra.mxu0 %v1402
        %1481 = vmatprep.subr.mxu0 0.0
        %1482 = vmatpush2.msra.mxu0 %v1401
        %1483 = vmatprep.subr.mxu0 0.0
        %1484 = vmatpush2.msra.mxu0 %v1400
        %1485 = vmatprep.subr.mxu0 0.0
        %1486 = vmatpush2.msra.mxu0 %v1399
        %1487 = vmatprep.subr.mxu0 0.0
        %1488 = vmatpush2.msra.mxu0 %v1398
        %1489 = vmatprep.subr.mxu0 0.0
        %1490 = vmatpush2.msra.mxu0 %v1397
        %1491 = vmatprep.subr.mxu0 0.0
        %1492 = vmatpush2.msra.mxu0 %v1396
        %1493 = vmatprep.subr.mxu0 0.0
        %1494 = vmatpush2.msra.mxu0 %v1395
        %1495 = vmatprep.subr.mxu0 0.0
        %1496 = vmatpush2.msra.mxu0 %v1394
        %1497 = vmatprep.subr.mxu0 0.0
        %1498 = vmatpush2.msra.mxu0 %v1393
        %1499 = vmatprep.subr.mxu0 0.0
        %1500 = vmatpush2.msra.mxu0 %v1392
        %1501 = vmatprep.subr.mxu0 0.0
        %1502 = vmatpush2.msra.mxu0 %v1391
        %1503 = vmatprep.mubr.f32.mxu0 %v1438
        %1504 = vmatmul.mubr.f32.gmra.mxu0 %v1437
        %v1505 = vpop.f32.mrf.mxu0
        %v1506 = vadd.f32 0.0, %v1505
        %v1507 = vpop.f32.mrf.mxu0
        %1508 = vdwg.mxu0
        %1510 = vrot.lane.b32.xlu0 %v1506, 9
        %v1511 = vpop.permute.xlu0 %1510
        %vm1513 = vcmask 72704
        %v1514 = vsel %vm1513, 0.0, %v1511
        %vm1515 = vcmask 596992
        %v1516 = vsel %vm1515, %v1514, 0.0
        %v1517 = vmul.f32 %v1516, %v456
        %v1518 = vld [vmem:[%s3] sm:$0xff]
        %v1519 = vld [vmem:[%s3 + $0x8] sm:$0xff]
        %s1520 = scalar_lea.vmem %s3, 16
        %v1521 = vld [vmem:[%s1520] sm:$0xff]
        %v1522 = vld [vmem:[%s1520 + $0x8] sm:$0xff]
        %1524 = vrot.lane.b32.xlu0 %v1516, 127
        %v1525 = vpop.permute.xlu0 %1524
        %vm1527 = vcmask 64512
        %v1529 = vsel %vm1527, %v1521, 0
        %v1532 = vsel %vm1527, %v1522, 0
        %1534 = vmatprep.subr.mxu0 0.0
        %1535 = vmatpush1.msra.mxu0 0.0
        %1536 = vmatprep.subr.mxu0 0.0
        %1537 = vmatpush1.msra.mxu0 0.0
        %1538 = vmatprep.subr.mxu0 0.0
        %1539 = vmatpush1.msra.mxu0 0.0
        %1540 = vmatprep.subr.mxu0 0.0
        %1541 = vmatpush1.msra.mxu0 0.0
        %1542 = vmatprep.subr.mxu0 0.0
        %1543 = vmatpush1.msra.mxu0 0.0
        %1544 = vmatprep.subr.mxu0 0.0
        %1545 = vmatpush1.msra.mxu0 0.0
        %1546 = vmatprep.subr.mxu0 0.0
        %1547 = vmatpush1.msra.mxu0 0.0
        %1548 = vmatprep.subr.mxu0 0.0
        %1549 = vmatpush1.msra.mxu0 0.0
        %1550 = vmatprep.subr.mxu0 0.0
        %1551 = vmatpush1.msra.mxu0 0.0
        %1552 = vmatprep.subr.mxu0 0.0
        %1553 = vmatpush1.msra.mxu0 0.0
        %1554 = vmatprep.subr.mxu0 0.0
        %1555 = vmatpush1.msra.mxu0 0.0
        %1556 = vmatprep.subr.mxu0 0.0
        %1557 = vmatpush1.msra.mxu0 0.0
        %1558 = vmatprep.subr.mxu0 0.0
        %1559 = vmatpush1.msra.mxu0 0.0
        %1560 = vmatprep.subr.mxu0 0.0
        %1561 = vmatpush1.msra.mxu0 0.0
        %1562 = vmatprep.subr.mxu0 0.0
        %1563 = vmatpush1.msra.mxu0 0.0
        %1564 = vmatprep.subr.mxu0 0.0
        %1565 = vmatpush1.msra.mxu0 %v1525
        %1566 = vmatprep.subr.mxu0 0.0
        %1567 = vmatpush2.msra.mxu0 0.0
        %1568 = vmatprep.subr.mxu0 0.0
        %1569 = vmatpush2.msra.mxu0 0.0
        %1570 = vmatprep.subr.mxu0 0.0
        %1571 = vmatpush2.msra.mxu0 0.0
        %1572 = vmatprep.subr.mxu0 0.0
        %1573 = vmatpush2.msra.mxu0 0.0
        %1574 = vmatprep.subr.mxu0 0.0
        %1575 = vmatpush2.msra.mxu0 0.0
        %1576 = vmatprep.subr.mxu0 0.0
        %1577 = vmatpush2.msra.mxu0 0.0
        %1578 = vmatprep.subr.mxu0 0.0
        %1579 = vmatpush2.msra.mxu0 0.0
        %1580 = vmatprep.subr.mxu0 0.0
        %1581 = vmatpush2.msra.mxu0 0.0
        %1582 = vmatprep.subr.mxu0 0.0
        %1583 = vmatpush2.msra.mxu0 0.0
        %1584 = vmatprep.subr.mxu0 0.0
        %1585 = vmatpush2.msra.mxu0 0.0
        %1586 = vmatprep.subr.mxu0 0.0
        %1587 = vmatpush2.msra.mxu0 0.0
        %1588 = vmatprep.subr.mxu0 0.0
        %1589 = vmatpush2.msra.mxu0 0.0
        %1590 = vmatprep.subr.mxu0 0.0
        %1591 = vmatpush2.msra.mxu0 0.0
        %1592 = vmatprep.subr.mxu0 0.0
        %1593 = vmatpush2.msra.mxu0 0.0
        %1594 = vmatprep.subr.mxu0 0.0
        %1595 = vmatpush2.msra.mxu0 0.0
        %1596 = vmatprep.subr.mxu0 0.0
        %1597 = vmatpush2.msra.mxu0 0.0
        %1598 = vmatprep.mubr.f32.mxu0 0.0
        %1599 = vmatmul.mubr.f32.gmra.mxu0 %v1529
        %v1600 = vpop.f32.mrf.mxu0
        %v1601 = vadd.f32 0.0, %v1600
        %v1602 = vpop.f32.mrf.mxu0
        %1603 = vmatprep.mubr.f32.mxu0 0.0
        %1604 = vmatmul.mubr.f32.gmra.mxu0 %v1532
        %v1605 = vpop.f32.mrf.mxu0
        %v1606 = vadd.f32 0.0, %v1605
        %v1607 = vpop.f32.mrf.mxu0
        %1608 = vdwg.mxu0
        %v1610 = vsel %vm1527, %v1518, 0
        %v1613 = vsel %vm1527, %v1519, 0
        %1615 = vmatprep.subr.mxu0 0.0
        %1616 = vmatpush1.msra.mxu0 0.0
        %1617 = vmatprep.subr.mxu0 0.0
        %1618 = vmatpush1.msra.mxu0 0.0
        %1619 = vmatprep.subr.mxu0 0.0
        %1620 = vmatpush1.msra.mxu0 0.0
        %1621 = vmatprep.subr.mxu0 0.0
        %1622 = vmatpush1.msra.mxu0 0.0
        %1623 = vmatprep.subr.mxu0 0.0
        %1624 = vmatpush1.msra.mxu0 0.0
        %1625 = vmatprep.subr.mxu0 0.0
        %1626 = vmatpush1.msra.mxu0 0.0
        %1627 = vmatprep.subr.mxu0 0.0
        %1628 = vmatpush1.msra.mxu0 0.0
        %1629 = vmatprep.subr.mxu0 0.0
        %1630 = vmatpush1.msra.mxu0 0.0
        %1631 = vmatprep.subr.mxu0 0.0
        %1632 = vmatpush1.msra.mxu0 0.0
        %1633 = vmatprep.subr.mxu0 0.0
        %1634 = vmatpush1.msra.mxu0 0.0
        %1635 = vmatprep.subr.mxu0 0.0
        %1636 = vmatpush1.msra.mxu0 0.0
        %1637 = vmatprep.subr.mxu0 0.0
        %1638 = vmatpush1.msra.mxu0 0.0
        %1639 = vmatprep.subr.mxu0 0.0
        %1640 = vmatpush1.msra.mxu0 0.0
        %1641 = vmatprep.subr.mxu0 0.0
        %1642 = vmatpush1.msra.mxu0 0.0
        %1643 = vmatprep.subr.mxu0 0.0
        %1644 = vmatpush1.msra.mxu0 0.0
        %1645 = vmatprep.subr.mxu0 0.0
        %1646 = vmatpush1.msra.mxu0 %v1517
        %1647 = vmatprep.subr.mxu0 0.0
        %1648 = vmatpush2.msra.mxu0 0.0
        %1649 = vmatprep.subr.mxu0 0.0
        %1650 = vmatpush2.msra.mxu0 0.0
        %1651 = vmatprep.subr.mxu0 0.0
        %1652 = vmatpush2.msra.mxu0 0.0
        %1653 = vmatprep.subr.mxu0 0.0
        %1654 = vmatpush2.msra.mxu0 0.0
        %1655 = vmatprep.subr.mxu0 0.0
        %1656 = vmatpush2.msra.mxu0 0.0
        %1657 = vmatprep.subr.mxu0 0.0
        %1658 = vmatpush2.msra.mxu0 0.0
        %1659 = vmatprep.subr.mxu0 0.0
        %1660 = vmatpush2.msra.mxu0 0.0
        %1661 = vmatprep.subr.mxu0 0.0
        %1662 = vmatpush2.msra.mxu0 0.0
        %1663 = vmatprep.subr.mxu0 0.0
        %1664 = vmatpush2.msra.mxu0 0.0
        %1665 = vmatprep.subr.mxu0 0.0
        %1666 = vmatpush2.msra.mxu0 0.0
        %1667 = vmatprep.subr.mxu0 0.0
        %1668 = vmatpush2.msra.mxu0 0.0
        %1669 = vmatprep.subr.mxu0 0.0
        %1670 = vmatpush2.msra.mxu0 0.0
        %1671 = vmatprep.subr.mxu0 0.0
        %1672 = vmatpush2.msra.mxu0 0.0
        %1673 = vmatprep.subr.mxu0 0.0
        %1674 = vmatpush2.msra.mxu0 0.0
        %1675 = vmatprep.subr.mxu0 0.0
        %1676 = vmatpush2.msra.mxu0 0.0
        %1677 = vmatprep.subr.mxu0 0.0
        %1678 = vmatpush2.msra.mxu0 0.0
        %1679 = vmatprep.mubr.f32.mxu0 0.0
        %1680 = vmatmul.mubr.f32.gmra.mxu0 %v1610
        %v1681 = vpop.f32.mrf.mxu0
        %v1682 = vadd.f32 %v1601, %v1681
        %v1683 = vpop.f32.mrf.mxu0
        %1684 = vmatprep.mubr.f32.mxu0 0.0
        %1685 = vmatmul.mubr.f32.gmra.mxu0 %v1613
        %v1686 = vpop.f32.mrf.mxu0
        %v1687 = vadd.f32 %v1606, %v1686
        %v1688 = vpop.f32.mrf.mxu0
        %1689 = vdwg.mxu0
        %1691 = vrot.lane.b32.xlu0 %v459, 2
        %v1692 = vpop.permute.xlu0 %1691
        %v1694 = vmul.f32 %v1516, %v1692
        %s1695 = scalar_lea.vmem %s3, 32
        %v1696 = vld [vmem:[%s1695] sm:$0xff]
        %v1697 = vld [vmem:[%s1695 + $0x8] sm:$0xff]
        %1699 = vrot.lane.b32.xlu0 %v1694, 126
        %v1700 = vpop.permute.xlu0 %1699
        %v1703 = vsel %vm1527, %v1696, 0
        %v1706 = vsel %vm1527, %v1697, 0
        %1708 = vmatprep.subr.mxu0 0.0
        %1709 = vmatpush1.msra.mxu0 0.0
        %1710 = vmatprep.subr.mxu0 0.0
        %1711 = vmatpush1.msra.mxu0 0.0
        %1712 = vmatprep.subr.mxu0 0.0
        %1713 = vmatpush1.msra.mxu0 0.0
        %1714 = vmatprep.subr.mxu0 0.0
        %1715 = vmatpush1.msra.mxu0 0.0
        %1716 = vmatprep.subr.mxu0 0.0
        %1717 = vmatpush1.msra.mxu0 0.0
        %1718 = vmatprep.subr.mxu0 0.0
        %1719 = vmatpush1.msra.mxu0 0.0
        %1720 = vmatprep.subr.mxu0 0.0
        %1721 = vmatpush1.msra.mxu0 0.0
        %1722 = vmatprep.subr.mxu0 0.0
        %1723 = vmatpush1.msra.mxu0 0.0
        %1724 = vmatprep.subr.mxu0 0.0
        %1725 = vmatpush1.msra.mxu0 0.0
        %1726 = vmatprep.subr.mxu0 0.0
        %1727 = vmatpush1.msra.mxu0 0.0
        %1728 = vmatprep.subr.mxu0 0.0
        %1729 = vmatpush1.msra.mxu0 0.0
        %1730 = vmatprep.subr.mxu0 0.0
        %1731 = vmatpush1.msra.mxu0 0.0
        %1732 = vmatprep.subr.mxu0 0.0
        %1733 = vmatpush1.msra.mxu0 0.0
        %1734 = vmatprep.subr.mxu0 0.0
        %1735 = vmatpush1.msra.mxu0 0.0
        %1736 = vmatprep.subr.mxu0 0.0
        %1737 = vmatpush1.msra.mxu0 0.0
        %1738 = vmatprep.subr.mxu0 0.0
        %1739 = vmatpush1.msra.mxu0 %v1700
        %1740 = vmatprep.subr.mxu0 0.0
        %1741 = vmatpush2.msra.mxu0 0.0
        %1742 = vmatprep.subr.mxu0 0.0
        %1743 = vmatpush2.msra.mxu0 0.0
        %1744 = vmatprep.subr.mxu0 0.0
        %1745 = vmatpush2.msra.mxu0 0.0
        %1746 = vmatprep.subr.mxu0 0.0
        %1747 = vmatpush2.msra.mxu0 0.0
        %1748 = vmatprep.subr.mxu0 0.0
        %1749 = vmatpush2.msra.mxu0 0.0
        %1750 = vmatprep.subr.mxu0 0.0
        %1751 = vmatpush2.msra.mxu0 0.0
        %1752 = vmatprep.subr.mxu0 0.0
        %1753 = vmatpush2.msra.mxu0 0.0
        %1754 = vmatprep.subr.mxu0 0.0
        %1755 = vmatpush2.msra.mxu0 0.0
        %1756 = vmatprep.subr.mxu0 0.0
        %1757 = vmatpush2.msra.mxu0 0.0
        %1758 = vmatprep.subr.mxu0 0.0
        %1759 = vmatpush2.msra.mxu0 0.0
        %1760 = vmatprep.subr.mxu0 0.0
        %1761 = vmatpush2.msra.mxu0 0.0
        %1762 = vmatprep.subr.mxu0 0.0
        %1763 = vmatpush2.msra.mxu0 0.0
        %1764 = vmatprep.subr.mxu0 0.0
        %1765 = vmatpush2.msra.mxu0 0.0
        %1766 = vmatprep.subr.mxu0 0.0
        %1767 = vmatpush2.msra.mxu0 0.0
        %1768 = vmatprep.subr.mxu0 0.0
        %1769 = vmatpush2.msra.mxu0 0.0
        %1770 = vmatprep.subr.mxu0 0.0
        %1771 = vmatpush2.msra.mxu0 0.0
        %1772 = vmatprep.mubr.f32.mxu0 0.0
        %1773 = vmatmul.mubr.f32.gmra.mxu0 %v1703
        %v1774 = vpop.f32.mrf.mxu0
        %v1775 = vadd.f32 0.0, %v1774
        %v1776 = vpop.f32.mrf.mxu0
        %1777 = vmatprep.mubr.f32.mxu0 0.0
        %1778 = vmatmul.mubr.f32.gmra.mxu0 %v1706
        %v1779 = vpop.f32.mrf.mxu0
        %v1780 = vadd.f32 0.0, %v1779
        %v1781 = vpop.f32.mrf.mxu0
        %1782 = vdwg.mxu0
        %v1783 = vadd.f32 %v1682, %v1775
        %v1784 = vadd.f32 %v1687, %v1780
        %1786 = vrot.lane.b32.xlu0 %v456, 8
        %v1787 = vpop.permute.xlu0 %1786
        %v1789 = vmul.f32 %v1516, %v1787
        %s1790 = scalar_lea.vmem %s3, 48
        %v1791 = vld [vmem:[%s1790] sm:$0xff]
        %v1792 = vld [vmem:[%s1790 + $0x8] sm:$0xff]
        %1794 = vrot.lane.b32.xlu0 %v1789, 120
        %v1795 = vpop.permute.xlu0 %1794
        %v1798 = vsel %vm1527, %v1791, 0
        %v1801 = vsel %vm1527, %v1792, 0
        %1803 = vmatprep.subr.mxu0 0.0
        %1804 = vmatpush1.msra.mxu0 0.0
        %1805 = vmatprep.subr.mxu0 0.0
        %1806 = vmatpush1.msra.mxu0 0.0
        %1807 = vmatprep.subr.mxu0 0.0
        %1808 = vmatpush1.msra.mxu0 0.0
        %1809 = vmatprep.subr.mxu0 0.0
        %1810 = vmatpush1.msra.mxu0 0.0
        %1811 = vmatprep.subr.mxu0 0.0
        %1812 = vmatpush1.msra.mxu0 0.0
        %1813 = vmatprep.subr.mxu0 0.0
        %1814 = vmatpush1.msra.mxu0 0.0
        %1815 = vmatprep.subr.mxu0 0.0
        %1816 = vmatpush1.msra.mxu0 0.0
        %1817 = vmatprep.subr.mxu0 0.0
        %1818 = vmatpush1.msra.mxu0 0.0
        %1819 = vmatprep.subr.mxu0 0.0
        %1820 = vmatpush1.msra.mxu0 0.0
        %1821 = vmatprep.subr.mxu0 0.0
        %1822 = vmatpush1.msra.mxu0 0.0
        %1823 = vmatprep.subr.mxu0 0.0
        %1824 = vmatpush1.msra.mxu0 0.0
        %1825 = vmatprep.subr.mxu0 0.0
        %1826 = vmatpush1.msra.mxu0 0.0
        %1827 = vmatprep.subr.mxu0 0.0
        %1828 = vmatpush1.msra.mxu0 0.0
        %1829 = vmatprep.subr.mxu0 0.0
        %1830 = vmatpush1.msra.mxu0 0.0
        %1831 = vmatprep.subr.mxu0 0.0
        %1832 = vmatpush1.msra.mxu0 0.0
        %1833 = vmatprep.subr.mxu0 0.0
        %1834 = vmatpush1.msra.mxu0 %v1795
        %1835 = vmatprep.subr.mxu0 0.0
        %1836 = vmatpush2.msra.mxu0 0.0
        %1837 = vmatprep.subr.mxu0 0.0
        %1838 = vmatpush2.msra.mxu0 0.0
        %1839 = vmatprep.subr.mxu0 0.0
        %1840 = vmatpush2.msra.mxu0 0.0
        %1841 = vmatprep.subr.mxu0 0.0
        %1842 = vmatpush2.msra.mxu0 0.0
        %1843 = vmatprep.subr.mxu0 0.0
        %1844 = vmatpush2.msra.mxu0 0.0
        %1845 = vmatprep.subr.mxu0 0.0
        %1846 = vmatpush2.msra.mxu0 0.0
        %1847 = vmatprep.subr.mxu0 0.0
        %1848 = vmatpush2.msra.mxu0 0.0
        %1849 = vmatprep.subr.mxu0 0.0
        %1850 = vmatpush2.msra.mxu0 0.0
        %1851 = vmatprep.subr.mxu0 0.0
        %1852 = vmatpush2.msra.mxu0 0.0
        %1853 = vmatprep.subr.mxu0 0.0
        %1854 = vmatpush2.msra.mxu0 0.0
        %1855 = vmatprep.subr.mxu0 0.0
        %1856 = vmatpush2.msra.mxu0 0.0
        %1857 = vmatprep.subr.mxu0 0.0
        %1858 = vmatpush2.msra.mxu0 0.0
        %1859 = vmatprep.subr.mxu0 0.0
        %1860 = vmatpush2.msra.mxu0 0.0
        %1861 = vmatprep.subr.mxu0 0.0
        %1862 = vmatpush2.msra.mxu0 0.0
        %1863 = vmatprep.subr.mxu0 0.0
        %1864 = vmatpush2.msra.mxu0 0.0
        %1865 = vmatprep.subr.mxu0 0.0
        %1866 = vmatpush2.msra.mxu0 0.0
        %1867 = vmatprep.mubr.f32.mxu0 0.0
        %1868 = vmatmul.mubr.f32.gmra.mxu0 %v1798
        %v1869 = vpop.f32.mrf.mxu0
        %v1870 = vadd.f32 0.0, %v1869
        %v1871 = vpop.f32.mrf.mxu0
        %1872 = vmatprep.mubr.f32.mxu0 0.0
        %1873 = vmatmul.mubr.f32.gmra.mxu0 %v1801
        %v1874 = vpop.f32.mrf.mxu0
        %v1875 = vadd.f32 0.0, %v1874
        %v1876 = vpop.f32.mrf.mxu0
        %1877 = vdwg.mxu0
        %v1878 = vadd.f32 %v1783, %v1870
        %v1879 = vadd.f32 %v1784, %v1875
        %s1880 = scalar_lea.vmem %s3, 64
        %v1881 = vld [vmem:[%s1880] sm:$0xff]
        %v1882 = vld [vmem:[%s1880 + $0x8] sm:$0xff]
        %1883 = vrot.lane.b32.xlu0 %v1516, 119
        %v1884 = vpop.permute.xlu0 %1883
        %v1887 = vsel %vm1527, %v1881, 0
        %v1890 = vsel %vm1527, %v1882, 0
        %1892 = vmatprep.subr.mxu0 0.0
        %1893 = vmatpush1.msra.mxu0 0.0
        %1894 = vmatprep.subr.mxu0 0.0
        %1895 = vmatpush1.msra.mxu0 0.0
        %1896 = vmatprep.subr.mxu0 0.0
        %1897 = vmatpush1.msra.mxu0 0.0
        %1898 = vmatprep.subr.mxu0 0.0
        %1899 = vmatpush1.msra.mxu0 0.0
        %1900 = vmatprep.subr.mxu0 0.0
        %1901 = vmatpush1.msra.mxu0 0.0
        %1902 = vmatprep.subr.mxu0 0.0
        %1903 = vmatpush1.msra.mxu0 0.0
        %1904 = vmatprep.subr.mxu0 0.0
        %1905 = vmatpush1.msra.mxu0 0.0
        %1906 = vmatprep.subr.mxu0 0.0
        %1907 = vmatpush1.msra.mxu0 0.0
        %1908 = vmatprep.subr.mxu0 0.0
        %1909 = vmatpush1.msra.mxu0 0.0
        %1910 = vmatprep.subr.mxu0 0.0
        %1911 = vmatpush1.msra.mxu0 0.0
        %1912 = vmatprep.subr.mxu0 0.0
        %1913 = vmatpush1.msra.mxu0 0.0
        %1914 = vmatprep.subr.mxu0 0.0
        %1915 = vmatpush1.msra.mxu0 0.0
        %1916 = vmatprep.subr.mxu0 0.0
        %1917 = vmatpush1.msra.mxu0 0.0
        %1918 = vmatprep.subr.mxu0 0.0
        %1919 = vmatpush1.msra.mxu0 0.0
        %1920 = vmatprep.subr.mxu0 0.0
        %1921 = vmatpush1.msra.mxu0 0.0
        %1922 = vmatprep.subr.mxu0 0.0
        %1923 = vmatpush1.msra.mxu0 %v1884
        %1924 = vmatprep.subr.mxu0 0.0
        %1925 = vmatpush2.msra.mxu0 0.0
        %1926 = vmatprep.subr.mxu0 0.0
        %1927 = vmatpush2.msra.mxu0 0.0
        %1928 = vmatprep.subr.mxu0 0.0
        %1929 = vmatpush2.msra.mxu0 0.0
        %1930 = vmatprep.subr.mxu0 0.0
        %1931 = vmatpush2.msra.mxu0 0.0
        %1932 = vmatprep.subr.mxu0 0.0
        %1933 = vmatpush2.msra.mxu0 0.0
        %1934 = vmatprep.subr.mxu0 0.0
        %1935 = vmatpush2.msra.mxu0 0.0
        %1936 = vmatprep.subr.mxu0 0.0
        %1937 = vmatpush2.msra.mxu0 0.0
        %1938 = vmatprep.subr.mxu0 0.0
        %1939 = vmatpush2.msra.mxu0 0.0
        %1940 = vmatprep.subr.mxu0 0.0
        %1941 = vmatpush2.msra.mxu0 0.0
        %1942 = vmatprep.subr.mxu0 0.0
        %1943 = vmatpush2.msra.mxu0 0.0
        %1944 = vmatprep.subr.mxu0 0.0
        %1945 = vmatpush2.msra.mxu0 0.0
        %1946 = vmatprep.subr.mxu0 0.0
        %1947 = vmatpush2.msra.mxu0 0.0
        %1948 = vmatprep.subr.mxu0 0.0
        %1949 = vmatpush2.msra.mxu0 0.0
        %1950 = vmatprep.subr.mxu0 0.0
        %1951 = vmatpush2.msra.mxu0 0.0
        %1952 = vmatprep.subr.mxu0 0.0
        %1953 = vmatpush2.msra.mxu0 0.0
        %1954 = vmatprep.subr.mxu0 0.0
        %1955 = vmatpush2.msra.mxu0 0.0
        %1956 = vmatprep.mubr.f32.mxu0 0.0
        %1957 = vmatmul.mubr.f32.gmra.mxu0 %v1887
        %v1958 = vpop.f32.mrf.mxu0
        %v1959 = vadd.f32 0.0, %v1958
        %v1960 = vpop.f32.mrf.mxu0
        %1961 = vmatprep.mubr.f32.mxu0 0.0
        %1962 = vmatmul.mubr.f32.gmra.mxu0 %v1890
        %v1963 = vpop.f32.mrf.mxu0
        %v1964 = vadd.f32 0.0, %v1963
        %v1965 = vpop.f32.mrf.mxu0
        %1966 = vdwg.mxu0
        %v1967 = vadd.f32 %v1878, %v1959
        %v1968 = vadd.f32 %v1879, %v1964
        %1969 = vrot.lane.b32.xlu0 %v459, 10
        %v1970 = vpop.permute.xlu0 %1969
        %v1972 = vmul.f32 %v1516, %v1970
        %s1973 = scalar_lea.vmem %s3, 80
        %v1974 = vld [vmem:[%s1973] sm:$0xff]
        %v1975 = vld [vmem:[%s1973 + $0x8] sm:$0xff]
        %1977 = vrot.lane.b32.xlu0 %v1972, 118
        %v1978 = vpop.permute.xlu0 %1977
        %v1981 = vsel %vm1527, %v1974, 0
        %v1984 = vsel %vm1527, %v1975, 0
        %1986 = vmatprep.subr.mxu0 0.0
        %1987 = vmatpush1.msra.mxu0 0.0
        %1988 = vmatprep.subr.mxu0 0.0
        %1989 = vmatpush1.msra.mxu0 0.0
        %1990 = vmatprep.subr.mxu0 0.0
        %1991 = vmatpush1.msra.mxu0 0.0
        %1992 = vmatprep.subr.mxu0 0.0
        %1993 = vmatpush1.msra.mxu0 0.0
        %1994 = vmatprep.subr.mxu0 0.0
        %1995 = vmatpush1.msra.mxu0 0.0
        %1996 = vmatprep.subr.mxu0 0.0
        %1997 = vmatpush1.msra.mxu0 0.0
        %1998 = vmatprep.subr.mxu0 0.0
        %1999 = vmatpush1.msra.mxu0 0.0
        %2000 = vmatprep.subr.mxu0 0.0
        %2001 = vmatpush1.msra.mxu0 0.0
        %2002 = vmatprep.subr.mxu0 0.0
        %2003 = vmatpush1.msra.mxu0 0.0
        %2004 = vmatprep.subr.mxu0 0.0
        %2005 = vmatpush1.msra.mxu0 0.0
        %2006 = vmatprep.subr.mxu0 0.0
        %2007 = vmatpush1.msra.mxu0 0.0
        %2008 = vmatprep.subr.mxu0 0.0
        %2009 = vmatpush1.msra.mxu0 0.0
        %2010 = vmatprep.subr.mxu0 0.0
        %2011 = vmatpush1.msra.mxu0 0.0
        %2012 = vmatprep.subr.mxu0 0.0
        %2013 = vmatpush1.msra.mxu0 0.0
        %2014 = vmatprep.subr.mxu0 0.0
        %2015 = vmatpush1.msra.mxu0 0.0
        %2016 = vmatprep.subr.mxu0 0.0
        %2017 = vmatpush1.msra.mxu0 %v1978
        %2018 = vmatprep.subr.mxu0 0.0
        %2019 = vmatpush2.msra.mxu0 0.0
        %2020 = vmatprep.subr.mxu0 0.0
        %2021 = vmatpush2.msra.mxu0 0.0
        %2022 = vmatprep.subr.mxu0 0.0
        %2023 = vmatpush2.msra.mxu0 0.0
        %2024 = vmatprep.subr.mxu0 0.0
        %2025 = vmatpush2.msra.mxu0 0.0
        %2026 = vmatprep.subr.mxu0 0.0
        %2027 = vmatpush2.msra.mxu0 0.0
        %2028 = vmatprep.subr.mxu0 0.0
        %2029 = vmatpush2.msra.mxu0 0.0
        %2030 = vmatprep.subr.mxu0 0.0
        %2031 = vmatpush2.msra.mxu0 0.0
        %2032 = vmatprep.subr.mxu0 0.0
        %2033 = vmatpush2.msra.mxu0 0.0
        %2034 = vmatprep.subr.mxu0 0.0
        %2035 = vmatpush2.msra.mxu0 0.0
        %2036 = vmatprep.subr.mxu0 0.0
        %2037 = vmatpush2.msra.mxu0 0.0
        %2038 = vmatprep.subr.mxu0 0.0
        %2039 = vmatpush2.msra.mxu0 0.0
        %2040 = vmatprep.subr.mxu0 0.0
        %2041 = vmatpush2.msra.mxu0 0.0
        %2042 = vmatprep.subr.mxu0 0.0
        %2043 = vmatpush2.msra.mxu0 0.0
        %2044 = vmatprep.subr.mxu0 0.0
        %2045 = vmatpush2.msra.mxu0 0.0
        %2046 = vmatprep.subr.mxu0 0.0
        %2047 = vmatpush2.msra.mxu0 0.0
        %2048 = vmatprep.subr.mxu0 0.0
        %2049 = vmatpush2.msra.mxu0 0.0
        %2050 = vmatprep.mubr.f32.mxu0 0.0
        %2051 = vmatmul.mubr.f32.gmra.mxu0 %v1981
        %v2052 = vpop.f32.mrf.mxu0
        %v2053 = vadd.f32 0.0, %v2052
        %v2054 = vpop.f32.mrf.mxu0
        %2055 = vmatprep.mubr.f32.mxu0 0.0
        %2056 = vmatmul.mubr.f32.gmra.mxu0 %v1984
        %v2057 = vpop.f32.mrf.mxu0
        %v2058 = vadd.f32 0.0, %v2057
        %v2059 = vpop.f32.mrf.mxu0
        %2060 = vdwg.mxu0
        %v2061 = vadd.f32 %v1967, %v2053
        %v2062 = vadd.f32 %v1968, %v2058
        %2063 = vrot.lane.b32.xlu0 %v456, 16
        %v2064 = vpop.permute.xlu0 %2063
        %v2066 = vmul.f32 %v1516, %v2064
        %s2067 = scalar_lea.vmem %s3, 96
        %v2068 = vld [vmem:[%s2067] sm:$0xff]
        %v2069 = vld [vmem:[%s2067 + $0x8] sm:$0xff]
        %2071 = vrot.lane.b32.xlu0 %v2066, 112
        %v2072 = vpop.permute.xlu0 %2071
        %v2075 = vsel %vm1527, %v2068, 0
        %v2078 = vsel %vm1527, %v2069, 0
        %2080 = vmatprep.subr.mxu0 0.0
        %2081 = vmatpush1.msra.mxu0 0.0
        %2082 = vmatprep.subr.mxu0 0.0
        %2083 = vmatpush1.msra.mxu0 0.0
        %2084 = vmatprep.subr.mxu0 0.0
        %2085 = vmatpush1.msra.mxu0 0.0
        %2086 = vmatprep.subr.mxu0 0.0
        %2087 = vmatpush1.msra.mxu0 0.0
        %2088 = vmatprep.subr.mxu0 0.0
        %2089 = vmatpush1.msra.mxu0 0.0
        %2090 = vmatprep.subr.mxu0 0.0
        %2091 = vmatpush1.msra.mxu0 0.0
        %2092 = vmatprep.subr.mxu0 0.0
        %2093 = vmatpush1.msra.mxu0 0.0
        %2094 = vmatprep.subr.mxu0 0.0
        %2095 = vmatpush1.msra.mxu0 0.0
        %2096 = vmatprep.subr.mxu0 0.0
        %2097 = vmatpush1.msra.mxu0 0.0
        %2098 = vmatprep.subr.mxu0 0.0
        %2099 = vmatpush1.msra.mxu0 0.0
        %2100 = vmatprep.subr.mxu0 0.0
        %2101 = vmatpush1.msra.mxu0 0.0
        %2102 = vmatprep.subr.mxu0 0.0
        %2103 = vmatpush1.msra.mxu0 0.0
        %2104 = vmatprep.subr.mxu0 0.0
        %2105 = vmatpush1.msra.mxu0 0.0
        %2106 = vmatprep.subr.mxu0 0.0
        %2107 = vmatpush1.msra.mxu0 0.0
        %2108 = vmatprep.subr.mxu0 0.0
        %2109 = vmatpush1.msra.mxu0 0.0
        %2110 = vmatprep.subr.mxu0 0.0
        %2111 = vmatpush1.msra.mxu0 %v2072
        %2112 = vmatprep.subr.mxu0 0.0
        %2113 = vmatpush2.msra.mxu0 0.0
        %2114 = vmatprep.subr.mxu0 0.0
        %2115 = vmatpush2.msra.mxu0 0.0
        %2116 = vmatprep.subr.mxu0 0.0
        %2117 = vmatpush2.msra.mxu0 0.0
        %2118 = vmatprep.subr.mxu0 0.0
        %2119 = vmatpush2.msra.mxu0 0.0
        %2120 = vmatprep.subr.mxu0 0.0
        %2121 = vmatpush2.msra.mxu0 0.0
        %2122 = vmatprep.subr.mxu0 0.0
        %2123 = vmatpush2.msra.mxu0 0.0
        %2124 = vmatprep.subr.mxu0 0.0
        %2125 = vmatpush2.msra.mxu0 0.0
        %2126 = vmatprep.subr.mxu0 0.0
        %2127 = vmatpush2.msra.mxu0 0.0
        %2128 = vmatprep.subr.mxu0 0.0
        %2129 = vmatpush2.msra.mxu0 0.0
        %2130 = vmatprep.subr.mxu0 0.0
        %2131 = vmatpush2.msra.mxu0 0.0
        %2132 = vmatprep.subr.mxu0 0.0
        %2133 = vmatpush2.msra.mxu0 0.0
        %2134 = vmatprep.subr.mxu0 0.0
        %2135 = vmatpush2.msra.mxu0 0.0
        %2136 = vmatprep.subr.mxu0 0.0
        %2137 = vmatpush2.msra.mxu0 0.0
        %2138 = vmatprep.subr.mxu0 0.0
        %2139 = vmatpush2.msra.mxu0 0.0
        %2140 = vmatprep.subr.mxu0 0.0
        %2141 = vmatpush2.msra.mxu0 0.0
        %2142 = vmatprep.subr.mxu0 0.0
        %2143 = vmatpush2.msra.mxu0 0.0
        %2144 = vmatprep.mubr.f32.mxu0 0.0
        %2145 = vmatmul.mubr.f32.gmra.mxu0 %v2075
        %v2146 = vpop.f32.mrf.mxu0
        %v2147 = vadd.f32 0.0, %v2146
        %v2148 = vpop.f32.mrf.mxu0
        %2149 = vmatprep.mubr.f32.mxu0 0.0
        %2150 = vmatmul.mubr.f32.gmra.mxu0 %v2078
        %v2151 = vpop.f32.mrf.mxu0
        %v2152 = vadd.f32 0.0, %v2151
        %v2153 = vpop.f32.mrf.mxu0
        %2154 = vdwg.mxu0
        %v2155 = vadd.f32 %v2061, %v2147
        %v2156 = vadd.f32 %v2062, %v2152
        %s2157 = scalar_lea.vmem %s3, 112
        %v2158 = vld [vmem:[%s2157] sm:$0xff]
        %v2159 = vld [vmem:[%s2157 + $0x8] sm:$0xff]
        %2160 = vrot.lane.b32.xlu0 %v1516, 111
        %v2161 = vpop.permute.xlu0 %2160
        %v2164 = vsel %vm1527, %v2158, 0
        %v2167 = vsel %vm1527, %v2159, 0
        %2169 = vmatprep.subr.mxu0 0.0
        %2170 = vmatpush1.msra.mxu0 0.0
        %2171 = vmatprep.subr.mxu0 0.0
        %2172 = vmatpush1.msra.mxu0 0.0
        %2173 = vmatprep.subr.mxu0 0.0
        %2174 = vmatpush1.msra.mxu0 0.0
        %2175 = vmatprep.subr.mxu0 0.0
        %2176 = vmatpush1.msra.mxu0 0.0
        %2177 = vmatprep.subr.mxu0 0.0
        %2178 = vmatpush1.msra.mxu0 0.0
        %2179 = vmatprep.subr.mxu0 0.0
        %2180 = vmatpush1.msra.mxu0 0.0
        %2181 = vmatprep.subr.mxu0 0.0
        %2182 = vmatpush1.msra.mxu0 0.0
        %2183 = vmatprep.subr.mxu0 0.0
        %2184 = vmatpush1.msra.mxu0 0.0
        %2185 = vmatprep.subr.mxu0 0.0
        %2186 = vmatpush1.msra.mxu0 0.0
        %2187 = vmatprep.subr.mxu0 0.0
        %2188 = vmatpush1.msra.mxu0 0.0
        %2189 = vmatprep.subr.mxu0 0.0
        %2190 = vmatpush1.msra.mxu0 0.0
        %2191 = vmatprep.subr.mxu0 0.0
        %2192 = vmatpush1.msra.mxu0 0.0
        %2193 = vmatprep.subr.mxu0 0.0
        %2194 = vmatpush1.msra.mxu0 0.0
        %2195 = vmatprep.subr.mxu0 0.0
        %2196 = vmatpush1.msra.mxu0 0.0
        %2197 = vmatprep.subr.mxu0 0.0
        %2198 = vmatpush1.msra.mxu0 0.0
        %2199 = vmatprep.subr.mxu0 0.0
        %2200 = vmatpush1.msra.mxu0 %v2161
        %2201 = vmatprep.subr.mxu0 0.0
        %2202 = vmatpush2.msra.mxu0 0.0
        %2203 = vmatprep.subr.mxu0 0.0
        %2204 = vmatpush2.msra.mxu0 0.0
        %2205 = vmatprep.subr.mxu0 0.0
        %2206 = vmatpush2.msra.mxu0 0.0
        %2207 = vmatprep.subr.mxu0 0.0
        %2208 = vmatpush2.msra.mxu0 0.0
        %2209 = vmatprep.subr.mxu0 0.0
        %2210 = vmatpush2.msra.mxu0 0.0
        %2211 = vmatprep.subr.mxu0 0.0
        %2212 = vmatpush2.msra.mxu0 0.0
        %2213 = vmatprep.subr.mxu0 0.0
        %2214 = vmatpush2.msra.mxu0 0.0
        %2215 = vmatprep.subr.mxu0 0.0
        %2216 = vmatpush2.msra.mxu0 0.0
        %2217 = vmatprep.subr.mxu0 0.0
        %2218 = vmatpush2.msra.mxu0 0.0
        %2219 = vmatprep.subr.mxu0 0.0
        %2220 = vmatpush2.msra.mxu0 0.0
        %2221 = vmatprep.subr.mxu0 0.0
        %2222 = vmatpush2.msra.mxu0 0.0
        %2223 = vmatprep.subr.mxu0 0.0
        %2224 = vmatpush2.msra.mxu0 0.0
        %2225 = vmatprep.subr.mxu0 0.0
        %2226 = vmatpush2.msra.mxu0 0.0
        %2227 = vmatprep.subr.mxu0 0.0
        %2228 = vmatpush2.msra.mxu0 0.0
        %2229 = vmatprep.subr.mxu0 0.0
        %2230 = vmatpush2.msra.mxu0 0.0
        %2231 = vmatprep.subr.mxu0 0.0
        %2232 = vmatpush2.msra.mxu0 0.0
        %2233 = vmatprep.mubr.f32.mxu0 0.0
        %2234 = vmatmul.mubr.f32.gmra.mxu0 %v2164
        %v2235 = vpop.f32.mrf.mxu0
        %v2236 = vadd.f32 0.0, %v2235
        %v2237 = vpop.f32.mrf.mxu0
        %2238 = vmatprep.mubr.f32.mxu0 0.0
        %2239 = vmatmul.mubr.f32.gmra.mxu0 %v2167
        %v2240 = vpop.f32.mrf.mxu0
        %v2241 = vadd.f32 0.0, %v2240
        %v2242 = vpop.f32.mrf.mxu0
        %2243 = vdwg.mxu0
        %v2244 = vadd.f32 %v2155, %v2236
        %v2245 = vadd.f32 %v2156, %v2241
        %2246 = vrot.lane.b32.xlu0 %v459, 18
        %v2247 = vpop.permute.xlu0 %2246
        %v2249 = vmul.f32 %v1516, %v2247
        %s2250 = scalar_lea.vmem %s3, 128
        %v2251 = vld [vmem:[%s2250] sm:$0xff]
        %v2252 = vld [vmem:[%s2250 + $0x8] sm:$0xff]
        %2254 = vrot.lane.b32.xlu0 %v2249, 110
        %v2255 = vpop.permute.xlu0 %2254
        %v2258 = vsel %vm1527, %v2251, 0
        %v2261 = vsel %vm1527, %v2252, 0
        %2263 = vmatprep.subr.mxu0 0.0
        %2264 = vmatpush1.msra.mxu0 0.0
        %2265 = vmatprep.subr.mxu0 0.0
        %2266 = vmatpush1.msra.mxu0 0.0
        %2267 = vmatprep.subr.mxu0 0.0
        %2268 = vmatpush1.msra.mxu0 0.0
        %2269 = vmatprep.subr.mxu0 0.0
        %2270 = vmatpush1.msra.mxu0 0.0
        %2271 = vmatprep.subr.mxu0 0.0
        %2272 = vmatpush1.msra.mxu0 0.0
        %2273 = vmatprep.subr.mxu0 0.0
        %2274 = vmatpush1.msra.mxu0 0.0
        %2275 = vmatprep.subr.mxu0 0.0
        %2276 = vmatpush1.msra.mxu0 0.0
        %2277 = vmatprep.subr.mxu0 0.0
        %2278 = vmatpush1.msra.mxu0 0.0
        %2279 = vmatprep.subr.mxu0 0.0
        %2280 = vmatpush1.msra.mxu0 0.0
        %2281 = vmatprep.subr.mxu0 0.0
        %2282 = vmatpush1.msra.mxu0 0.0
        %2283 = vmatprep.subr.mxu0 0.0
        %2284 = vmatpush1.msra.mxu0 0.0
        %2285 = vmatprep.subr.mxu0 0.0
        %2286 = vmatpush1.msra.mxu0 0.0
        %2287 = vmatprep.subr.mxu0 0.0
        %2288 = vmatpush1.msra.mxu0 0.0
        %2289 = vmatprep.subr.mxu0 0.0
        %2290 = vmatpush1.msra.mxu0 0.0
        %2291 = vmatprep.subr.mxu0 0.0
        %2292 = vmatpush1.msra.mxu0 0.0
        %2293 = vmatprep.subr.mxu0 0.0
        %2294 = vmatpush1.msra.mxu0 %v2255
        %2295 = vmatprep.subr.mxu0 0.0
        %2296 = vmatpush2.msra.mxu0 0.0
        %2297 = vmatprep.subr.mxu0 0.0
        %2298 = vmatpush2.msra.mxu0 0.0
        %2299 = vmatprep.subr.mxu0 0.0
        %2300 = vmatpush2.msra.mxu0 0.0
        %2301 = vmatprep.subr.mxu0 0.0
        %2302 = vmatpush2.msra.mxu0 0.0
        %2303 = vmatprep.subr.mxu0 0.0
        %2304 = vmatpush2.msra.mxu0 0.0
        %2305 = vmatprep.subr.mxu0 0.0
        %2306 = vmatpush2.msra.mxu0 0.0
        %2307 = vmatprep.subr.mxu0 0.0
        %2308 = vmatpush2.msra.mxu0 0.0
        %2309 = vmatprep.subr.mxu0 0.0
        %2310 = vmatpush2.msra.mxu0 0.0
        %2311 = vmatprep.subr.mxu0 0.0
        %2312 = vmatpush2.msra.mxu0 0.0
        %2313 = vmatprep.subr.mxu0 0.0
        %2314 = vmatpush2.msra.mxu0 0.0
        %2315 = vmatprep.subr.mxu0 0.0
        %2316 = vmatpush2.msra.mxu0 0.0
        %2317 = vmatprep.subr.mxu0 0.0
        %2318 = vmatpush2.msra.mxu0 0.0
        %2319 = vmatprep.subr.mxu0 0.0
        %2320 = vmatpush2.msra.mxu0 0.0
        %2321 = vmatprep.subr.mxu0 0.0
        %2322 = vmatpush2.msra.mxu0 0.0
        %2323 = vmatprep.subr.mxu0 0.0
        %2324 = vmatpush2.msra.mxu0 0.0
        %2325 = vmatprep.subr.mxu0 0.0
        %2326 = vmatpush2.msra.mxu0 0.0
        %2327 = vmatprep.mubr.f32.mxu0 0.0
        %2328 = vmatmul.mubr.f32.gmra.mxu0 %v2258
        %v2329 = vpop.f32.mrf.mxu0
        %v2330 = vadd.f32 0.0, %v2329
        %v2331 = vpop.f32.mrf.mxu0
        %2332 = vmatprep.mubr.f32.mxu0 0.0
        %2333 = vmatmul.mubr.f32.gmra.mxu0 %v2261
        %v2334 = vpop.f32.mrf.mxu0
        %v2335 = vadd.f32 0.0, %v2334
        %v2336 = vpop.f32.mrf.mxu0
        %2337 = vdwg.mxu0
        %v2338 = vadd.f32 %v2244, %v2330
        %v2339 = vadd.f32 %v2245, %v2335
        %v2340 = vld [vmem:[%s4] sm:$0xff]
        %v2341 = vld [vmem:[%s4 + $0x8] sm:$0xff]
        %2343 = vset.pattern.permute.xlu0 0
        %2344 = vperm.xlu0 %2343, %v2340
        %v2345 = vpop.permute.xlu0 %2344
        %2348 = vset.pattern.permute.xlu0 0
        %2349 = vperm.xlu0 %2348, %v2341
        %v2350 = vpop.permute.xlu0 %2349
        %v2352 = vadd.f32 %v2338, %v2345
        %v2353 = vadd.f32 %v2339, %v2350
        %v2354 = vmax.f32 %v2352, 0.0
        %v2355 = vmax.f32 %v2353, 0.0
        %v2356 = vld [vmem:[%s10] sm:$0xff]
        %v2357 = vld [vmem:[%s10 + $0x8] sm:$0xff]
        %v2358 = vld [vmem:[%s10 + $0x10] sm:$0xff]
        %v2359 = vld [vmem:[%s10 + $0x18] sm:$0xff]
        %v2360 = vld [vmem:[%s10 + $0x20] sm:$0xff]
        %v2361 = vld [vmem:[%s10 + $0x28] sm:$0xff]
        %v2362 = vld [vmem:[%s10 + $0x30] sm:$0xff]
        %v2363 = vld [vmem:[%s10 + $0x38] sm:$0xff]
        %v2364 = vld [vmem:[%s10 + $0x40] sm:$0xff]
        %v2365 = vld [vmem:[%s10 + $0x48] sm:$0xff]
        %v2366 = vld [vmem:[%s10 + $0x50] sm:$0xff]
        %v2367 = vld [vmem:[%s10 + $0x58] sm:$0xff]
        %v2368 = vld [vmem:[%s10 + $0x60] sm:$0xff]
        %v2369 = vld [vmem:[%s10 + $0x68] sm:$0xff]
        %v2370 = vld [vmem:[%s10 + $0x70] sm:$0xff]
        %v2371 = vld [vmem:[%s10 + $0x78] sm:$0xff]
        %vm2372 = vcmask 523264
        %v2374 = vsel %vm2372, %v2354, 0
        %v2377 = vsel %vm2372, %v2355, 0
        %2379 = vmatprep.subr.mxu0 0.0
        %2380 = vmatpush1.msra.mxu0 0.0
        %2381 = vmatprep.subr.mxu0 0.0
        %2382 = vmatpush1.msra.mxu0 0.0
        %2383 = vmatprep.subr.mxu0 0.0
        %2384 = vmatpush1.msra.mxu0 0.0
        %2385 = vmatprep.subr.mxu0 0.0
        %2386 = vmatpush1.msra.mxu0 0.0
        %2387 = vmatprep.subr.mxu0 0.0
        %2388 = vmatpush1.msra.mxu0 0.0
        %2389 = vmatprep.subr.mxu0 0.0
        %2390 = vmatpush1.msra.mxu0 0.0
        %2391 = vmatprep.subr.mxu0 0.0
        %2392 = vmatpush1.msra.mxu0 0.0
        %2393 = vmatprep.subr.mxu0 0.0
        %2394 = vmatpush1.msra.mxu0 0.0
        %2395 = vmatprep.subr.mxu0 %v2371
        %2396 = vmatpush1.msra.mxu0 %v2370
        %2397 = vmatprep.subr.mxu0 %v2369
        %2398 = vmatpush1.msra.mxu0 %v2368
        %2399 = vmatprep.subr.mxu0 %v2367
        %2400 = vmatpush1.msra.mxu0 %v2366
        %2401 = vmatprep.subr.mxu0 %v2365
        %2402 = vmatpush1.msra.mxu0 %v2364
        %2403 = vmatprep.subr.mxu0 %v2363
        %2404 = vmatpush1.msra.mxu0 %v2362
        %2405 = vmatprep.subr.mxu0 %v2361
        %2406 = vmatpush1.msra.mxu0 %v2360
        %2407 = vmatprep.subr.mxu0 %v2359
        %2408 = vmatpush1.msra.mxu0 %v2358
        %2409 = vmatprep.subr.mxu0 %v2357
        %2410 = vmatpush1.msra.mxu0 %v2356
        %2411 = vmatprep.subr.mxu0 0.0
        %2412 = vmatpush2.msra.mxu0 0.0
        %2413 = vmatprep.subr.mxu0 0.0
        %2414 = vmatpush2.msra.mxu0 0.0
        %2415 = vmatprep.subr.mxu0 0.0
        %2416 = vmatpush2.msra.mxu0 0.0
        %2417 = vmatprep.subr.mxu0 0.0
        %2418 = vmatpush2.msra.mxu0 0.0
        %2419 = vmatprep.subr.mxu0 0.0
        %2420 = vmatpush2.msra.mxu0 0.0
        %2421 = vmatprep.subr.mxu0 0.0
        %2422 = vmatpush2.msra.mxu0 0.0
        %2423 = vmatprep.subr.mxu0 0.0
        %2424 = vmatpush2.msra.mxu0 0.0
        %2425 = vmatprep.subr.mxu0 0.0
        %2426 = vmatpush2.msra.mxu0 0.0
        %2427 = vmatprep.subr.mxu0 0.0
        %2428 = vmatpush2.msra.mxu0 0.0
        %2429 = vmatprep.subr.mxu0 0.0
        %2430 = vmatpush2.msra.mxu0 0.0
        %2431 = vmatprep.subr.mxu0 0.0
        %2432 = vmatpush2.msra.mxu0 0.0
        %2433 = vmatprep.subr.mxu0 0.0
        %2434 = vmatpush2.msra.mxu0 0.0
        %2435 = vmatprep.subr.mxu0 0.0
        %2436 = vmatpush2.msra.mxu0 0.0
        %2437 = vmatprep.subr.mxu0 0.0
        %2438 = vmatpush2.msra.mxu0 0.0
        %2439 = vmatprep.subr.mxu0 0.0
        %2440 = vmatpush2.msra.mxu0 0.0
        %2441 = vmatprep.subr.mxu0 0.0
        %2442 = vmatpush2.msra.mxu0 0.0
        %2443 = vmatprep.mubr.f32.mxu0 0.0
        %2444 = vmatmul.mubr.f32.gmra.mxu0 %v2374
        %v2445 = vpop.f32.mrf.mxu0
        %v2446 = vadd.f32 0.0, %v2445
        %v2447 = vpop.f32.mrf.mxu0
        %v2448 = vadd.f32 0.0, %v2447
        %2449 = vmatprep.mubr.f32.mxu0 0.0
        %2450 = vmatmul.mubr.f32.gmra.mxu0 %v2377
        %v2451 = vpop.f32.mrf.mxu0
        %v2452 = vadd.f32 0.0, %v2451
        %v2453 = vpop.f32.mrf.mxu0
        %v2454 = vadd.f32 0.0, %v2453
        %2455 = vdwg.mxu0
        %2460 = vrot.lane.b32.xlu0 %v2446, 17
        %v2461 = vpop.permute.xlu0 %2460
        %2462 = vrot.lane.b32.xlu0 %v2448, 17
        %v2463 = vpop.permute.xlu0 %2462
        %2464 = vrot.lane.b32.xlu0 %v2452, 17
        %v2465 = vpop.permute.xlu0 %2464
        %2466 = vrot.lane.b32.xlu0 %v2454, 17
        %v2467 = vpop.permute.xlu0 %2466
        %v2468 = vsel %vm466, %v2461, %v2463
        %v2469 = vsel %vm466, %v2465, %v2467
        %v2476 = vsel %vm466, 0.0, %v2461
        %v2477 = vsel %vm466, 0.0, %v2465
        %v2478 = vsel %vm466, %v2463, 0.0
        %v2479 = vsel %vm466, %v2467, 0.0
        %v2480 = vmul.f32 %v2476, %v434
        %v2481 = vmul.f32 %v2468, %v435
        %v2482 = vmul.f32 %v2477, %v434
        %v2483 = vmul.f32 %v2469, %v435
        %v2484 = vld [vmem:[%s5] sm:$0xff]
        %s2485 = scalar_lea.vmem %s5, 8
        %v2486 = vld [vmem:[%s2485] sm:$0xff]
        %2491 = vrot.lane.b32.xlu0 %v2476, 127
        %v2492 = vpop.permute.xlu0 %2491
        %2493 = vrot.lane.b32.xlu0 %v2468, 127
        %v2494 = vpop.permute.xlu0 %2493
        %2495 = vrot.lane.b32.xlu0 %v2478, 127
        %v2496 = vpop.permute.xlu0 %2495
        %2497 = vrot.lane.b32.xlu0 %v2477, 127
        %v2498 = vpop.permute.xlu0 %2497
        %2499 = vrot.lane.b32.xlu0 %v2469, 127
        %v2500 = vpop.permute.xlu0 %2499
        %2501 = vrot.lane.b32.xlu0 %v2479, 127
        %v2502 = vpop.permute.xlu0 %2501
        %v2503 = vsel %vm486, %v2492, %v2494
        %v2504 = vsel %vm486, %v2494, %v2496
        %v2505 = vsel %vm486, %v2498, %v2500
        %v2506 = vsel %vm486, %v2500, %v2502
        %v2512 = vsel %vm763, %v2486, 0
        %2514 = vmatprep.subr.mxu0 0.0
        %2515 = vmatpush1.msra.mxu0 0.0
        %2516 = vmatprep.subr.mxu0 0.0
        %2517 = vmatpush1.msra.mxu0 0.0
        %2518 = vmatprep.subr.mxu0 0.0
        %2519 = vmatpush1.msra.mxu0 0.0
        %2520 = vmatprep.subr.mxu0 0.0
        %2521 = vmatpush1.msra.mxu0 0.0
        %2522 = vmatprep.subr.mxu0 0.0
        %2523 = vmatpush1.msra.mxu0 0.0
        %2524 = vmatprep.subr.mxu0 0.0
        %2525 = vmatpush1.msra.mxu0 0.0
        %2526 = vmatprep.subr.mxu0 0.0
        %2527 = vmatpush1.msra.mxu0 0.0
        %2528 = vmatprep.subr.mxu0 0.0
        %2529 = vmatpush1.msra.mxu0 0.0
        %2530 = vmatprep.subr.mxu0 0.0
        %2531 = vmatpush1.msra.mxu0 0.0
        %2532 = vmatprep.subr.mxu0 0.0
        %2533 = vmatpush1.msra.mxu0 0.0
        %2534 = vmatprep.subr.mxu0 0.0
        %2535 = vmatpush1.msra.mxu0 0.0
        %2536 = vmatprep.subr.mxu0 0.0
        %2537 = vmatpush1.msra.mxu0 0.0
        %2538 = vmatprep.subr.mxu0 0.0
        %2539 = vmatpush1.msra.mxu0 0.0
        %2540 = vmatprep.subr.mxu0 0.0
        %2541 = vmatpush1.msra.mxu0 0.0
        %2542 = vmatprep.subr.mxu0 %v2506
        %2543 = vmatpush1.msra.mxu0 %v2505
        %2544 = vmatprep.subr.mxu0 %v2504
        %2545 = vmatpush1.msra.mxu0 %v2503
        %2546 = vmatprep.subr.mxu0 0.0
        %2547 = vmatpush2.msra.mxu0 0.0
        %2548 = vmatprep.subr.mxu0 0.0
        %2549 = vmatpush2.msra.mxu0 0.0
        %2550 = vmatprep.subr.mxu0 0.0
        %2551 = vmatpush2.msra.mxu0 0.0
        %2552 = vmatprep.subr.mxu0 0.0
        %2553 = vmatpush2.msra.mxu0 0.0
        %2554 = vmatprep.subr.mxu0 0.0
        %2555 = vmatpush2.msra.mxu0 0.0
        %2556 = vmatprep.subr.mxu0 0.0
        %2557 = vmatpush2.msra.mxu0 0.0
        %2558 = vmatprep.subr.mxu0 0.0
        %2559 = vmatpush2.msra.mxu0 0.0
        %2560 = vmatprep.subr.mxu0 0.0
        %2561 = vmatpush2.msra.mxu0 0.0
        %2562 = vmatprep.subr.mxu0 0.0
        %2563 = vmatpush2.msra.mxu0 0.0
        %2564 = vmatprep.subr.mxu0 0.0
        %2565 = vmatpush2.msra.mxu0 0.0
        %2566 = vmatprep.subr.mxu0 0.0
        %2567 = vmatpush2.msra.mxu0 0.0
        %2568 = vmatprep.subr.mxu0 0.0
        %2569 = vmatpush2.msra.mxu0 0.0
        %2570 = vmatprep.subr.mxu0 0.0
        %2571 = vmatpush2.msra.mxu0 0.0
        %2572 = vmatprep.subr.mxu0 0.0
        %2573 = vmatpush2.msra.mxu0 0.0
        %2574 = vmatprep.subr.mxu0 0.0
        %2575 = vmatpush2.msra.mxu0 0.0
        %2576 = vmatprep.subr.mxu0 0.0
        %2577 = vmatpush2.msra.mxu0 0.0
        %2578 = vmatprep.mubr.f32.mxu0 0.0
        %2579 = vmatmul.mubr.f32.gmra.mxu0 %v2512
        %v2580 = vpop.f32.mrf.mxu0
        %v2581 = vadd.f32 0.0, %v2580
        %v2582 = vpop.f32.mrf.mxu0
        %v2583 = vadd.f32 0.0, %v2582
        %2584 = vdwg.mxu0
        %v2586 = vsel %vm763, %v2484, 0
        %2588 = vmatprep.subr.mxu0 0.0
        %2589 = vmatpush1.msra.mxu0 0.0
        %2590 = vmatprep.subr.mxu0 0.0
        %2591 = vmatpush1.msra.mxu0 0.0
        %2592 = vmatprep.subr.mxu0 0.0
        %2593 = vmatpush1.msra.mxu0 0.0
        %2594 = vmatprep.subr.mxu0 0.0
        %2595 = vmatpush1.msra.mxu0 0.0
        %2596 = vmatprep.subr.mxu0 0.0
        %2597 = vmatpush1.msra.mxu0 0.0
        %2598 = vmatprep.subr.mxu0 0.0
        %2599 = vmatpush1.msra.mxu0 0.0
        %2600 = vmatprep.subr.mxu0 0.0
        %2601 = vmatpush1.msra.mxu0 0.0
        %2602 = vmatprep.subr.mxu0 0.0
        %2603 = vmatpush1.msra.mxu0 0.0
        %2604 = vmatprep.subr.mxu0 0.0
        %2605 = vmatpush1.msra.mxu0 0.0
        %2606 = vmatprep.subr.mxu0 0.0
        %2607 = vmatpush1.msra.mxu0 0.0
        %2608 = vmatprep.subr.mxu0 0.0
        %2609 = vmatpush1.msra.mxu0 0.0
        %2610 = vmatprep.subr.mxu0 0.0
        %2611 = vmatpush1.msra.mxu0 0.0
        %2612 = vmatprep.subr.mxu0 0.0
        %2613 = vmatpush1.msra.mxu0 0.0
        %2614 = vmatprep.subr.mxu0 0.0
        %2615 = vmatpush1.msra.mxu0 0.0
        %2616 = vmatprep.subr.mxu0 %v2483
        %2617 = vmatpush1.msra.mxu0 %v2482
        %2618 = vmatprep.subr.mxu0 %v2481
        %2619 = vmatpush1.msra.mxu0 %v2480
        %2620 = vmatprep.subr.mxu0 0.0
        %2621 = vmatpush2.msra.mxu0 0.0
        %2622 = vmatprep.subr.mxu0 0.0
        %2623 = vmatpush2.msra.mxu0 0.0
        %2624 = vmatprep.subr.mxu0 0.0
        %2625 = vmatpush2.msra.mxu0 0.0
        %2626 = vmatprep.subr.mxu0 0.0
        %2627 = vmatpush2.msra.mxu0 0.0
        %2628 = vmatprep.subr.mxu0 0.0
        %2629 = vmatpush2.msra.mxu0 0.0
        %2630 = vmatprep.subr.mxu0 0.0
        %2631 = vmatpush2.msra.mxu0 0.0
        %2632 = vmatprep.subr.mxu0 0.0
        %2633 = vmatpush2.msra.mxu0 0.0
        %2634 = vmatprep.subr.mxu0 0.0
        %2635 = vmatpush2.msra.mxu0 0.0
        %2636 = vmatprep.subr.mxu0 0.0
        %2637 = vmatpush2.msra.mxu0 0.0
        %2638 = vmatprep.subr.mxu0 0.0
        %2639 = vmatpush2.msra.mxu0 0.0
        %2640 = vmatprep.subr.mxu0 0.0
        %2641 = vmatpush2.msra.mxu0 0.0
        %2642 = vmatprep.subr.mxu0 0.0
        %2643 = vmatpush2.msra.mxu0 0.0
        %2644 = vmatprep.subr.mxu0 0.0
        %2645 = vmatpush2.msra.mxu0 0.0
        %2646 = vmatprep.subr.mxu0 0.0
        %2647 = vmatpush2.msra.mxu0 0.0
        %2648 = vmatprep.subr.mxu0 0.0
        %2649 = vmatpush2.msra.mxu0 0.0
        %2650 = vmatprep.subr.mxu0 0.0
        %2651 = vmatpush2.msra.mxu0 0.0
        %2652 = vmatprep.mubr.f32.mxu0 0.0
        %2653 = vmatmul.mubr.f32.gmra.mxu0 %v2586
        %v2654 = vpop.f32.mrf.mxu0
        %v2655 = vadd.f32 %v2581, %v2654
        %v2656 = vpop.f32.mrf.mxu0
        %v2657 = vadd.f32 %v2583, %v2656
        %2658 = vdwg.mxu0
        %v2659 = vmul.f32 %v2476, %v652
        %v2660 = vmul.f32 %v2468, %v656
        %v2661 = vmul.f32 %v2478, %v654
        %v2662 = vmul.f32 %v2477, %v652
        %v2663 = vmul.f32 %v2469, %v656
        %v2664 = vmul.f32 %v2479, %v654
        %s2665 = scalar_lea.vmem %s5, 16
        %v2666 = vld [vmem:[%s2665] sm:$0xff]
        %2673 = vrot.lane.b32.xlu0 %v2659, 126
        %v2674 = vpop.permute.xlu0 %2673
        %2675 = vrot.lane.b32.xlu0 %v2660, 126
        %v2676 = vpop.permute.xlu0 %2675
        %2677 = vrot.lane.b32.xlu0 %v2661, 126
        %v2678 = vpop.permute.xlu0 %2677
        %2679 = vrot.lane.b32.xlu0 %v2662, 126
        %v2680 = vpop.permute.xlu0 %2679
        %2681 = vrot.lane.b32.xlu0 %v2663, 126
        %v2682 = vpop.permute.xlu0 %2681
        %2683 = vrot.lane.b32.xlu0 %v2664, 126
        %v2684 = vpop.permute.xlu0 %2683
        %v2685 = vsel %vm674, %v2674, %v2676
        %v2686 = vsel %vm674, %v2676, %v2678
        %v2687 = vsel %vm674, %v2680, %v2682
        %v2688 = vsel %vm674, %v2682, %v2684
        %v2694 = vsel %vm763, %v2666, 0
        %2696 = vmatprep.subr.mxu0 0.0
        %2697 = vmatpush1.msra.mxu0 0.0
        %2698 = vmatprep.subr.mxu0 0.0
        %2699 = vmatpush1.msra.mxu0 0.0
        %2700 = vmatprep.subr.mxu0 0.0
        %2701 = vmatpush1.msra.mxu0 0.0
        %2702 = vmatprep.subr.mxu0 0.0
        %2703 = vmatpush1.msra.mxu0 0.0
        %2704 = vmatprep.subr.mxu0 0.0
        %2705 = vmatpush1.msra.mxu0 0.0
        %2706 = vmatprep.subr.mxu0 0.0
        %2707 = vmatpush1.msra.mxu0 0.0
        %2708 = vmatprep.subr.mxu0 0.0
        %2709 = vmatpush1.msra.mxu0 0.0
        %2710 = vmatprep.subr.mxu0 0.0
        %2711 = vmatpush1.msra.mxu0 0.0
        %2712 = vmatprep.subr.mxu0 0.0
        %2713 = vmatpush1.msra.mxu0 0.0
        %2714 = vmatprep.subr.mxu0 0.0
        %2715 = vmatpush1.msra.mxu0 0.0
        %2716 = vmatprep.subr.mxu0 0.0
        %2717 = vmatpush1.msra.mxu0 0.0
        %2718 = vmatprep.subr.mxu0 0.0
        %2719 = vmatpush1.msra.mxu0 0.0
        %2720 = vmatprep.subr.mxu0 0.0
        %2721 = vmatpush1.msra.mxu0 0.0
        %2722 = vmatprep.subr.mxu0 0.0
        %2723 = vmatpush1.msra.mxu0 0.0
        %2724 = vmatprep.subr.mxu0 %v2688
        %2725 = vmatpush1.msra.mxu0 %v2687
        %2726 = vmatprep.subr.mxu0 %v2686
        %2727 = vmatpush1.msra.mxu0 %v2685
        %2728 = vmatprep.subr.mxu0 0.0
        %2729 = vmatpush2.msra.mxu0 0.0
        %2730 = vmatprep.subr.mxu0 0.0
        %2731 = vmatpush2.msra.mxu0 0.0
        %2732 = vmatprep.subr.mxu0 0.0
        %2733 = vmatpush2.msra.mxu0 0.0
        %2734 = vmatprep.subr.mxu0 0.0
        %2735 = vmatpush2.msra.mxu0 0.0
        %2736 = vmatprep.subr.mxu0 0.0
        %2737 = vmatpush2.msra.mxu0 0.0
        %2738 = vmatprep.subr.mxu0 0.0
        %2739 = vmatpush2.msra.mxu0 0.0
        %2740 = vmatprep.subr.mxu0 0.0
        %2741 = vmatpush2.msra.mxu0 0.0
        %2742 = vmatprep.subr.mxu0 0.0
        %2743 = vmatpush2.msra.mxu0 0.0
        %2744 = vmatprep.subr.mxu0 0.0
        %2745 = vmatpush2.msra.mxu0 0.0
        %2746 = vmatprep.subr.mxu0 0.0
        %2747 = vmatpush2.msra.mxu0 0.0
        %2748 = vmatprep.subr.mxu0 0.0
        %2749 = vmatpush2.msra.mxu0 0.0
        %2750 = vmatprep.subr.mxu0 0.0
        %2751 = vmatpush2.msra.mxu0 0.0
        %2752 = vmatprep.subr.mxu0 0.0
        %2753 = vmatpush2.msra.mxu0 0.0
        %2754 = vmatprep.subr.mxu0 0.0
        %2755 = vmatpush2.msra.mxu0 0.0
        %2756 = vmatprep.subr.mxu0 0.0
        %2757 = vmatpush2.msra.mxu0 0.0
        %2758 = vmatprep.subr.mxu0 0.0
        %2759 = vmatpush2.msra.mxu0 0.0
        %2760 = vmatprep.mubr.f32.mxu0 0.0
        %2761 = vmatmul.mubr.f32.gmra.mxu0 %v2694
        %v2762 = vpop.f32.mrf.mxu0
        %v2763 = vadd.f32 0.0, %v2762
        %v2764 = vpop.f32.mrf.mxu0
        %v2765 = vadd.f32 0.0, %v2764
        %2766 = vdwg.mxu0
        %v2767 = vadd.f32 %v2655, %v2763
        %v2768 = vadd.f32 %v2657, %v2765
        %v2769 = vmul.f32 %v2476, %v760
        %v2770 = vmul.f32 %v2468, %v764
        %v2771 = vmul.f32 %v2478, %v762
        %v2772 = vmul.f32 %v2477, %v760
        %v2773 = vmul.f32 %v2469, %v764
        %v2774 = vmul.f32 %v2479, %v762
        %s2775 = scalar_lea.vmem %s5, 24
        %v2776 = vld [vmem:[%s2775] sm:$0xff]
        %2783 = vrot.lane.b32.xlu0 %v2769, 112
        %v2784 = vpop.permute.xlu0 %2783
        %2785 = vrot.lane.b32.xlu0 %v2770, 112
        %v2786 = vpop.permute.xlu0 %2785
        %2787 = vrot.lane.b32.xlu0 %v2771, 112
        %v2788 = vpop.permute.xlu0 %2787
        %2789 = vrot.lane.b32.xlu0 %v2772, 112
        %v2790 = vpop.permute.xlu0 %2789
        %2791 = vrot.lane.b32.xlu0 %v2773, 112
        %v2792 = vpop.permute.xlu0 %2791
        %2793 = vrot.lane.b32.xlu0 %v2774, 112
        %v2794 = vpop.permute.xlu0 %2793
        %v2795 = vsel %vm782, %v2784, %v2786
        %v2796 = vsel %vm782, %v2786, %v2788
        %v2797 = vsel %vm782, %v2790, %v2792
        %v2798 = vsel %vm782, %v2792, %v2794
        %v2804 = vsel %vm763, %v2776, 0
        %2806 = vmatprep.subr.mxu0 0.0
        %2807 = vmatpush1.msra.mxu0 0.0
        %2808 = vmatprep.subr.mxu0 0.0
        %2809 = vmatpush1.msra.mxu0 0.0
        %2810 = vmatprep.subr.mxu0 0.0
        %2811 = vmatpush1.msra.mxu0 0.0
        %2812 = vmatprep.subr.mxu0 0.0
        %2813 = vmatpush1.msra.mxu0 0.0
        %2814 = vmatprep.subr.mxu0 0.0
        %2815 = vmatpush1.msra.mxu0 0.0
        %2816 = vmatprep.subr.mxu0 0.0
        %2817 = vmatpush1.msra.mxu0 0.0
        %2818 = vmatprep.subr.mxu0 0.0
        %2819 = vmatpush1.msra.mxu0 0.0
        %2820 = vmatprep.subr.mxu0 0.0
        %2821 = vmatpush1.msra.mxu0 0.0
        %2822 = vmatprep.subr.mxu0 0.0
        %2823 = vmatpush1.msra.mxu0 0.0
        %2824 = vmatprep.subr.mxu0 0.0
        %2825 = vmatpush1.msra.mxu0 0.0
        %2826 = vmatprep.subr.mxu0 0.0
        %2827 = vmatpush1.msra.mxu0 0.0
        %2828 = vmatprep.subr.mxu0 0.0
        %2829 = vmatpush1.msra.mxu0 0.0
        %2830 = vmatprep.subr.mxu0 0.0
        %2831 = vmatpush1.msra.mxu0 0.0
        %2832 = vmatprep.subr.mxu0 0.0
        %2833 = vmatpush1.msra.mxu0 0.0
        %2834 = vmatprep.subr.mxu0 %v2798
        %2835 = vmatpush1.msra.mxu0 %v2797
        %2836 = vmatprep.subr.mxu0 %v2796
        %2837 = vmatpush1.msra.mxu0 %v2795
        %2838 = vmatprep.subr.mxu0 0.0
        %2839 = vmatpush2.msra.mxu0 0.0
        %2840 = vmatprep.subr.mxu0 0.0
        %2841 = vmatpush2.msra.mxu0 0.0
        %2842 = vmatprep.subr.mxu0 0.0
        %2843 = vmatpush2.msra.mxu0 0.0
        %2844 = vmatprep.subr.mxu0 0.0
        %2845 = vmatpush2.msra.mxu0 0.0
        %2846 = vmatprep.subr.mxu0 0.0
        %2847 = vmatpush2.msra.mxu0 0.0
        %2848 = vmatprep.subr.mxu0 0.0
        %2849 = vmatpush2.msra.mxu0 0.0
        %2850 = vmatprep.subr.mxu0 0.0
        %2851 = vmatpush2.msra.mxu0 0.0
        %2852 = vmatprep.subr.mxu0 0.0
        %2853 = vmatpush2.msra.mxu0 0.0
        %2854 = vmatprep.subr.mxu0 0.0
        %2855 = vmatpush2.msra.mxu0 0.0
        %2856 = vmatprep.subr.mxu0 0.0
        %2857 = vmatpush2.msra.mxu0 0.0
        %2858 = vmatprep.subr.mxu0 0.0
        %2859 = vmatpush2.msra.mxu0 0.0
        %2860 = vmatprep.subr.mxu0 0.0
        %2861 = vmatpush2.msra.mxu0 0.0
        %2862 = vmatprep.subr.mxu0 0.0
        %2863 = vmatpush2.msra.mxu0 0.0
        %2864 = vmatprep.subr.mxu0 0.0
        %2865 = vmatpush2.msra.mxu0 0.0
        %2866 = vmatprep.subr.mxu0 0.0
        %2867 = vmatpush2.msra.mxu0 0.0
        %2868 = vmatprep.subr.mxu0 0.0
        %2869 = vmatpush2.msra.mxu0 0.0
        %2870 = vmatprep.mubr.f32.mxu0 0.0
        %2871 = vmatmul.mubr.f32.gmra.mxu0 %v2804
        %v2872 = vpop.f32.mrf.mxu0
        %v2873 = vadd.f32 0.0, %v2872
        %v2874 = vpop.f32.mrf.mxu0
        %v2875 = vadd.f32 0.0, %v2874
        %2876 = vdwg.mxu0
        %v2877 = vadd.f32 %v2767, %v2873
        %v2878 = vadd.f32 %v2768, %v2875
        %s2879 = scalar_lea.vmem %s5, 32
        %v2880 = vld [vmem:[%s2879] sm:$0xff]
        %2881 = vrot.lane.b32.xlu0 %v2476, 111
        %v2882 = vpop.permute.xlu0 %2881
        %2883 = vrot.lane.b32.xlu0 %v2468, 111
        %v2884 = vpop.permute.xlu0 %2883
        %2885 = vrot.lane.b32.xlu0 %v2478, 111
        %v2886 = vpop.permute.xlu0 %2885
        %2887 = vrot.lane.b32.xlu0 %v2477, 111
        %v2888 = vpop.permute.xlu0 %2887
        %2889 = vrot.lane.b32.xlu0 %v2469, 111
        %v2890 = vpop.permute.xlu0 %2889
        %2891 = vrot.lane.b32.xlu0 %v2479, 111
        %v2892 = vpop.permute.xlu0 %2891
        %v2893 = vsel %vm873, %v2882, %v2884
        %v2894 = vsel %vm873, %v2884, %v2886
        %v2895 = vsel %vm873, %v2888, %v2890
        %v2896 = vsel %vm873, %v2890, %v2892
        %v2902 = vsel %vm763, %v2880, 0
        %2904 = vmatprep.subr.mxu0 0.0
        %2905 = vmatpush1.msra.mxu0 0.0
        %2906 = vmatprep.subr.mxu0 0.0
        %2907 = vmatpush1.msra.mxu0 0.0
        %2908 = vmatprep.subr.mxu0 0.0
        %2909 = vmatpush1.msra.mxu0 0.0
        %2910 = vmatprep.subr.mxu0 0.0
        %2911 = vmatpush1.msra.mxu0 0.0
        %2912 = vmatprep.subr.mxu0 0.0
        %2913 = vmatpush1.msra.mxu0 0.0
        %2914 = vmatprep.subr.mxu0 0.0
        %2915 = vmatpush1.msra.mxu0 0.0
        %2916 = vmatprep.subr.mxu0 0.0
        %2917 = vmatpush1.msra.mxu0 0.0
        %2918 = vmatprep.subr.mxu0 0.0
        %2919 = vmatpush1.msra.mxu0 0.0
        %2920 = vmatprep.subr.mxu0 0.0
        %2921 = vmatpush1.msra.mxu0 0.0
        %2922 = vmatprep.subr.mxu0 0.0
        %2923 = vmatpush1.msra.mxu0 0.0
        %2924 = vmatprep.subr.mxu0 0.0
        %2925 = vmatpush1.msra.mxu0 0.0
        %2926 = vmatprep.subr.mxu0 0.0
        %2927 = vmatpush1.msra.mxu0 0.0
        %2928 = vmatprep.subr.mxu0 0.0
        %2929 = vmatpush1.msra.mxu0 0.0
        %2930 = vmatprep.subr.mxu0 0.0
        %2931 = vmatpush1.msra.mxu0 0.0
        %2932 = vmatprep.subr.mxu0 %v2896
        %2933 = vmatpush1.msra.mxu0 %v2895
        %2934 = vmatprep.subr.mxu0 %v2894
        %2935 = vmatpush1.msra.mxu0 %v2893
        %2936 = vmatprep.subr.mxu0 0.0
        %2937 = vmatpush2.msra.mxu0 0.0
        %2938 = vmatprep.subr.mxu0 0.0
        %2939 = vmatpush2.msra.mxu0 0.0
        %2940 = vmatprep.subr.mxu0 0.0
        %2941 = vmatpush2.msra.mxu0 0.0
        %2942 = vmatprep.subr.mxu0 0.0
        %2943 = vmatpush2.msra.mxu0 0.0
        %2944 = vmatprep.subr.mxu0 0.0
        %2945 = vmatpush2.msra.mxu0 0.0
        %2946 = vmatprep.subr.mxu0 0.0
        %2947 = vmatpush2.msra.mxu0 0.0
        %2948 = vmatprep.subr.mxu0 0.0
        %2949 = vmatpush2.msra.mxu0 0.0
        %2950 = vmatprep.subr.mxu0 0.0
        %2951 = vmatpush2.msra.mxu0 0.0
        %2952 = vmatprep.subr.mxu0 0.0
        %2953 = vmatpush2.msra.mxu0 0.0
        %2954 = vmatprep.subr.mxu0 0.0
        %2955 = vmatpush2.msra.mxu0 0.0
        %2956 = vmatprep.subr.mxu0 0.0
        %2957 = vmatpush2.msra.mxu0 0.0
        %2958 = vmatprep.subr.mxu0 0.0
        %2959 = vmatpush2.msra.mxu0 0.0
        %2960 = vmatprep.subr.mxu0 0.0
        %2961 = vmatpush2.msra.mxu0 0.0
        %2962 = vmatprep.subr.mxu0 0.0
        %2963 = vmatpush2.msra.mxu0 0.0
        %2964 = vmatprep.subr.mxu0 0.0
        %2965 = vmatpush2.msra.mxu0 0.0
        %2966 = vmatprep.subr.mxu0 0.0
        %2967 = vmatpush2.msra.mxu0 0.0
        %2968 = vmatprep.mubr.f32.mxu0 0.0
        %2969 = vmatmul.mubr.f32.gmra.mxu0 %v2902
        %v2970 = vpop.f32.mrf.mxu0
        %v2971 = vadd.f32 0.0, %v2970
        %v2972 = vpop.f32.mrf.mxu0
        %v2973 = vadd.f32 0.0, %v2972
        %2974 = vdwg.mxu0
        %v2975 = vadd.f32 %v2877, %v2971
        %v2976 = vadd.f32 %v2878, %v2973
        %v2977 = vmul.f32 %v2476, %v957
        %v2978 = vmul.f32 %v2468, %v961
        %v2979 = vmul.f32 %v2478, %v959
        %v2980 = vmul.f32 %v2477, %v957
        %v2981 = vmul.f32 %v2469, %v961
        %v2982 = vmul.f32 %v2479, %v959
        %s2983 = scalar_lea.vmem %s5, 40
        %v2984 = vld [vmem:[%s2983] sm:$0xff]
        %2991 = vrot.lane.b32.xlu0 %v2977, 110
        %v2992 = vpop.permute.xlu0 %2991
        %2993 = vrot.lane.b32.xlu0 %v2978, 110
        %v2994 = vpop.permute.xlu0 %2993
        %2995 = vrot.lane.b32.xlu0 %v2979, 110
        %v2996 = vpop.permute.xlu0 %2995
        %2997 = vrot.lane.b32.xlu0 %v2980, 110
        %v2998 = vpop.permute.xlu0 %2997
        %2999 = vrot.lane.b32.xlu0 %v2981, 110
        %v3000 = vpop.permute.xlu0 %2999
        %3001 = vrot.lane.b32.xlu0 %v2982, 110
        %v3002 = vpop.permute.xlu0 %3001
        %v3003 = vsel %vm979, %v2992, %v2994
        %v3004 = vsel %vm979, %v2994, %v2996
        %v3005 = vsel %vm979, %v2998, %v3000
        %v3006 = vsel %vm979, %v3000, %v3002
        %v3012 = vsel %vm763, %v2984, 0
        %3014 = vmatprep.subr.mxu0 0.0
        %3015 = vmatpush1.msra.mxu0 0.0
        %3016 = vmatprep.subr.mxu0 0.0
        %3017 = vmatpush1.msra.mxu0 0.0
        %3018 = vmatprep.subr.mxu0 0.0
        %3019 = vmatpush1.msra.mxu0 0.0
        %3020 = vmatprep.subr.mxu0 0.0
        %3021 = vmatpush1.msra.mxu0 0.0
        %3022 = vmatprep.subr.mxu0 0.0
        %3023 = vmatpush1.msra.mxu0 0.0
        %3024 = vmatprep.subr.mxu0 0.0
        %3025 = vmatpush1.msra.mxu0 0.0
        %3026 = vmatprep.subr.mxu0 0.0
        %3027 = vmatpush1.msra.mxu0 0.0
        %3028 = vmatprep.subr.mxu0 0.0
        %3029 = vmatpush1.msra.mxu0 0.0
        %3030 = vmatprep.subr.mxu0 0.0
        %3031 = vmatpush1.msra.mxu0 0.0
        %3032 = vmatprep.subr.mxu0 0.0
        %3033 = vmatpush1.msra.mxu0 0.0
        %3034 = vmatprep.subr.mxu0 0.0
        %3035 = vmatpush1.msra.mxu0 0.0
        %3036 = vmatprep.subr.mxu0 0.0
        %3037 = vmatpush1.msra.mxu0 0.0
        %3038 = vmatprep.subr.mxu0 0.0
        %3039 = vmatpush1.msra.mxu0 0.0
        %3040 = vmatprep.subr.mxu0 0.0
        %3041 = vmatpush1.msra.mxu0 0.0
        %3042 = vmatprep.subr.mxu0 %v3006
        %3043 = vmatpush1.msra.mxu0 %v3005
        %3044 = vmatprep.subr.mxu0 %v3004
        %3045 = vmatpush1.msra.mxu0 %v3003
        %3046 = vmatprep.subr.mxu0 0.0
        %3047 = vmatpush2.msra.mxu0 0.0
        %3048 = vmatprep.subr.mxu0 0.0
        %3049 = vmatpush2.msra.mxu0 0.0
        %3050 = vmatprep.subr.mxu0 0.0
        %3051 = vmatpush2.msra.mxu0 0.0
        %3052 = vmatprep.subr.mxu0 0.0
        %3053 = vmatpush2.msra.mxu0 0.0
        %3054 = vmatprep.subr.mxu0 0.0
        %3055 = vmatpush2.msra.mxu0 0.0
        %3056 = vmatprep.subr.mxu0 0.0
        %3057 = vmatpush2.msra.mxu0 0.0
        %3058 = vmatprep.subr.mxu0 0.0
        %3059 = vmatpush2.msra.mxu0 0.0
        %3060 = vmatprep.subr.mxu0 0.0
        %3061 = vmatpush2.msra.mxu0 0.0
        %3062 = vmatprep.subr.mxu0 0.0
        %3063 = vmatpush2.msra.mxu0 0.0
        %3064 = vmatprep.subr.mxu0 0.0
        %3065 = vmatpush2.msra.mxu0 0.0
        %3066 = vmatprep.subr.mxu0 0.0
        %3067 = vmatpush2.msra.mxu0 0.0
        %3068 = vmatprep.subr.mxu0 0.0
        %3069 = vmatpush2.msra.mxu0 0.0
        %3070 = vmatprep.subr.mxu0 0.0
        %3071 = vmatpush2.msra.mxu0 0.0
        %3072 = vmatprep.subr.mxu0 0.0
        %3073 = vmatpush2.msra.mxu0 0.0
        %3074 = vmatprep.subr.mxu0 0.0
        %3075 = vmatpush2.msra.mxu0 0.0
        %3076 = vmatprep.subr.mxu0 0.0
        %3077 = vmatpush2.msra.mxu0 0.0
        %3078 = vmatprep.mubr.f32.mxu0 0.0
        %3079 = vmatmul.mubr.f32.gmra.mxu0 %v3012
        %v3080 = vpop.f32.mrf.mxu0
        %v3081 = vadd.f32 0.0, %v3080
        %v3082 = vpop.f32.mrf.mxu0
        %v3083 = vadd.f32 0.0, %v3082
        %3084 = vdwg.mxu0
        %v3085 = vadd.f32 %v2975, %v3081
        %v3086 = vadd.f32 %v2976, %v3083
        %v3087 = vmul.f32 %v2476, %v1063
        %v3088 = vmul.f32 %v2468, %v1067
        %v3089 = vmul.f32 %v2478, %v1065
        %v3090 = vmul.f32 %v2477, %v1063
        %v3091 = vmul.f32 %v2469, %v1067
        %v3092 = vmul.f32 %v2479, %v1065
        %s3093 = scalar_lea.vmem %s5, 48
        %v3094 = vld [vmem:[%s3093] sm:$0xff]
        %3101 = vrot.lane.b32.xlu0 %v3087, 96
        %v3102 = vpop.permute.xlu0 %3101
        %3103 = vrot.lane.b32.xlu0 %v3088, 96
        %v3104 = vpop.permute.xlu0 %3103
        %3105 = vrot.lane.b32.xlu0 %v3089, 96
        %v3106 = vpop.permute.xlu0 %3105
        %3107 = vrot.lane.b32.xlu0 %v3090, 96
        %v3108 = vpop.permute.xlu0 %3107
        %3109 = vrot.lane.b32.xlu0 %v3091, 96
        %v3110 = vpop.permute.xlu0 %3109
        %3111 = vrot.lane.b32.xlu0 %v3092, 96
        %v3112 = vpop.permute.xlu0 %3111
        %v3113 = vsel %vm1085, %v3102, %v3104
        %v3114 = vsel %vm1085, %v3104, %v3106
        %v3115 = vsel %vm1085, %v3108, %v3110
        %v3116 = vsel %vm1085, %v3110, %v3112
        %v3122 = vsel %vm763, %v3094, 0
        %3124 = vmatprep.subr.mxu0 0.0
        %3125 = vmatpush1.msra.mxu0 0.0
        %3126 = vmatprep.subr.mxu0 0.0
        %3127 = vmatpush1.msra.mxu0 0.0
        %3128 = vmatprep.subr.mxu0 0.0
        %3129 = vmatpush1.msra.mxu0 0.0
        %3130 = vmatprep.subr.mxu0 0.0
        %3131 = vmatpush1.msra.mxu0 0.0
        %3132 = vmatprep.subr.mxu0 0.0
        %3133 = vmatpush1.msra.mxu0 0.0
        %3134 = vmatprep.subr.mxu0 0.0
        %3135 = vmatpush1.msra.mxu0 0.0
        %3136 = vmatprep.subr.mxu0 0.0
        %3137 = vmatpush1.msra.mxu0 0.0
        %3138 = vmatprep.subr.mxu0 0.0
        %3139 = vmatpush1.msra.mxu0 0.0
        %3140 = vmatprep.subr.mxu0 0.0
        %3141 = vmatpush1.msra.mxu0 0.0
        %3142 = vmatprep.subr.mxu0 0.0
        %3143 = vmatpush1.msra.mxu0 0.0
        %3144 = vmatprep.subr.mxu0 0.0
        %3145 = vmatpush1.msra.mxu0 0.0
        %3146 = vmatprep.subr.mxu0 0.0
        %3147 = vmatpush1.msra.mxu0 0.0
        %3148 = vmatprep.subr.mxu0 0.0
        %3149 = vmatpush1.msra.mxu0 0.0
        %3150 = vmatprep.subr.mxu0 0.0
        %3151 = vmatpush1.msra.mxu0 0.0
        %3152 = vmatprep.subr.mxu0 %v3116
        %3153 = vmatpush1.msra.mxu0 %v3115
        %3154 = vmatprep.subr.mxu0 %v3114
        %3155 = vmatpush1.msra.mxu0 %v3113
        %3156 = vmatprep.subr.mxu0 0.0
        %3157 = vmatpush2.msra.mxu0 0.0
        %3158 = vmatprep.subr.mxu0 0.0
        %3159 = vmatpush2.msra.mxu0 0.0
        %3160 = vmatprep.subr.mxu0 0.0
        %3161 = vmatpush2.msra.mxu0 0.0
        %3162 = vmatprep.subr.mxu0 0.0
        %3163 = vmatpush2.msra.mxu0 0.0
        %3164 = vmatprep.subr.mxu0 0.0
        %3165 = vmatpush2.msra.mxu0 0.0
        %3166 = vmatprep.subr.mxu0 0.0
        %3167 = vmatpush2.msra.mxu0 0.0
        %3168 = vmatprep.subr.mxu0 0.0
        %3169 = vmatpush2.msra.mxu0 0.0
        %3170 = vmatprep.subr.mxu0 0.0
        %3171 = vmatpush2.msra.mxu0 0.0
        %3172 = vmatprep.subr.mxu0 0.0
        %3173 = vmatpush2.msra.mxu0 0.0
        %3174 = vmatprep.subr.mxu0 0.0
        %3175 = vmatpush2.msra.mxu0 0.0
        %3176 = vmatprep.subr.mxu0 0.0
        %3177 = vmatpush2.msra.mxu0 0.0
        %3178 = vmatprep.subr.mxu0 0.0
        %3179 = vmatpush2.msra.mxu0 0.0
        %3180 = vmatprep.subr.mxu0 0.0
        %3181 = vmatpush2.msra.mxu0 0.0
        %3182 = vmatprep.subr.mxu0 0.0
        %3183 = vmatpush2.msra.mxu0 0.0
        %3184 = vmatprep.subr.mxu0 0.0
        %3185 = vmatpush2.msra.mxu0 0.0
        %3186 = vmatprep.subr.mxu0 0.0
        %3187 = vmatpush2.msra.mxu0 0.0
        %3188 = vmatprep.mubr.f32.mxu0 0.0
        %3189 = vmatmul.mubr.f32.gmra.mxu0 %v3122
        %v3190 = vpop.f32.mrf.mxu0
        %v3191 = vadd.f32 0.0, %v3190
        %v3192 = vpop.f32.mrf.mxu0
        %v3193 = vadd.f32 0.0, %v3192
        %3194 = vdwg.mxu0
        %v3195 = vadd.f32 %v3085, %v3191
        %v3196 = vadd.f32 %v3086, %v3193
        %s3197 = scalar_lea.vmem %s5, 56
        %v3198 = vld [vmem:[%s3197] sm:$0xff]
        %3199 = vrot.lane.b32.xlu0 %v2476, 95
        %v3200 = vpop.permute.xlu0 %3199
        %3201 = vrot.lane.b32.xlu0 %v2468, 95
        %v3202 = vpop.permute.xlu0 %3201
        %3203 = vrot.lane.b32.xlu0 %v2478, 95
        %v3204 = vpop.permute.xlu0 %3203
        %3205 = vrot.lane.b32.xlu0 %v2477, 95
        %v3206 = vpop.permute.xlu0 %3205
        %3207 = vrot.lane.b32.xlu0 %v2469, 95
        %v3208 = vpop.permute.xlu0 %3207
        %3209 = vrot.lane.b32.xlu0 %v2479, 95
        %v3210 = vpop.permute.xlu0 %3209
        %v3211 = vsel %vm1176, %v3200, %v3202
        %v3212 = vsel %vm1176, %v3202, %v3204
        %v3213 = vsel %vm1176, %v3206, %v3208
        %v3214 = vsel %vm1176, %v3208, %v3210
        %v3220 = vsel %vm763, %v3198, 0
        %3222 = vmatprep.subr.mxu0 0.0
        %3223 = vmatpush1.msra.mxu0 0.0
        %3224 = vmatprep.subr.mxu0 0.0
        %3225 = vmatpush1.msra.mxu0 0.0
        %3226 = vmatprep.subr.mxu0 0.0
        %3227 = vmatpush1.msra.mxu0 0.0
        %3228 = vmatprep.subr.mxu0 0.0
        %3229 = vmatpush1.msra.mxu0 0.0
        %3230 = vmatprep.subr.mxu0 0.0
        %3231 = vmatpush1.msra.mxu0 0.0
        %3232 = vmatprep.subr.mxu0 0.0
        %3233 = vmatpush1.msra.mxu0 0.0
        %3234 = vmatprep.subr.mxu0 0.0
        %3235 = vmatpush1.msra.mxu0 0.0
        %3236 = vmatprep.subr.mxu0 0.0
        %3237 = vmatpush1.msra.mxu0 0.0
        %3238 = vmatprep.subr.mxu0 0.0
        %3239 = vmatpush1.msra.mxu0 0.0
        %3240 = vmatprep.subr.mxu0 0.0
        %3241 = vmatpush1.msra.mxu0 0.0
        %3242 = vmatprep.subr.mxu0 0.0
        %3243 = vmatpush1.msra.mxu0 0.0
        %3244 = vmatprep.subr.mxu0 0.0
        %3245 = vmatpush1.msra.mxu0 0.0
        %3246 = vmatprep.subr.mxu0 0.0
        %3247 = vmatpush1.msra.mxu0 0.0
        %3248 = vmatprep.subr.mxu0 0.0
        %3249 = vmatpush1.msra.mxu0 0.0
        %3250 = vmatprep.subr.mxu0 %v3214
        %3251 = vmatpush1.msra.mxu0 %v3213
        %3252 = vmatprep.subr.mxu0 %v3212
        %3253 = vmatpush1.msra.mxu0 %v3211
        %3254 = vmatprep.subr.mxu0 0.0
        %3255 = vmatpush2.msra.mxu0 0.0
        %3256 = vmatprep.subr.mxu0 0.0
        %3257 = vmatpush2.msra.mxu0 0.0
        %3258 = vmatprep.subr.mxu0 0.0
        %3259 = vmatpush2.msra.mxu0 0.0
        %3260 = vmatprep.subr.mxu0 0.0
        %3261 = vmatpush2.msra.mxu0 0.0
        %3262 = vmatprep.subr.mxu0 0.0
        %3263 = vmatpush2.msra.mxu0 0.0
        %3264 = vmatprep.subr.mxu0 0.0
        %3265 = vmatpush2.msra.mxu0 0.0
        %3266 = vmatprep.subr.mxu0 0.0
        %3267 = vmatpush2.msra.mxu0 0.0
        %3268 = vmatprep.subr.mxu0 0.0
        %3269 = vmatpush2.msra.mxu0 0.0
        %3270 = vmatprep.subr.mxu0 0.0
        %3271 = vmatpush2.msra.mxu0 0.0
        %3272 = vmatprep.subr.mxu0 0.0
        %3273 = vmatpush2.msra.mxu0 0.0
        %3274 = vmatprep.subr.mxu0 0.0
        %3275 = vmatpush2.msra.mxu0 0.0
        %3276 = vmatprep.subr.mxu0 0.0
        %3277 = vmatpush2.msra.mxu0 0.0
        %3278 = vmatprep.subr.mxu0 0.0
        %3279 = vmatpush2.msra.mxu0 0.0
        %3280 = vmatprep.subr.mxu0 0.0
        %3281 = vmatpush2.msra.mxu0 0.0
        %3282 = vmatprep.subr.mxu0 0.0
        %3283 = vmatpush2.msra.mxu0 0.0
        %3284 = vmatprep.subr.mxu0 0.0
        %3285 = vmatpush2.msra.mxu0 0.0
        %3286 = vmatprep.mubr.f32.mxu0 0.0
        %3287 = vmatmul.mubr.f32.gmra.mxu0 %v3220
        %v3288 = vpop.f32.mrf.mxu0
        %v3289 = vadd.f32 0.0, %v3288
        %v3290 = vpop.f32.mrf.mxu0
        %v3291 = vadd.f32 0.0, %v3290
        %3292 = vdwg.mxu0
        %v3293 = vadd.f32 %v3195, %v3289
        %v3294 = vadd.f32 %v3196, %v3291
        %v3295 = vmul.f32 %v2476, %v1260
        %v3296 = vmul.f32 %v2468, %v1264
        %v3297 = vmul.f32 %v2478, %v1262
        %v3298 = vmul.f32 %v2477, %v1260
        %v3299 = vmul.f32 %v2469, %v1264
        %v3300 = vmul.f32 %v2479, %v1262
        %s3301 = scalar_lea.vmem %s5, 64
        %v3302 = vld [vmem:[%s3301] sm:$0xff]
        %3309 = vrot.lane.b32.xlu0 %v3295, 94
        %v3310 = vpop.permute.xlu0 %3309
        %3311 = vrot.lane.b32.xlu0 %v3296, 94
        %v3312 = vpop.permute.xlu0 %3311
        %3313 = vrot.lane.b32.xlu0 %v3297, 94
        %v3314 = vpop.permute.xlu0 %3313
        %3315 = vrot.lane.b32.xlu0 %v3298, 94
        %v3316 = vpop.permute.xlu0 %3315
        %3317 = vrot.lane.b32.xlu0 %v3299, 94
        %v3318 = vpop.permute.xlu0 %3317
        %3319 = vrot.lane.b32.xlu0 %v3300, 94
        %v3320 = vpop.permute.xlu0 %3319
        %v3321 = vsel %vm1282, %v3310, %v3312
        %v3322 = vsel %vm1282, %v3312, %v3314
        %v3323 = vsel %vm1282, %v3316, %v3318
        %v3324 = vsel %vm1282, %v3318, %v3320
        %v3330 = vsel %vm763, %v3302, 0
        %3332 = vmatprep.subr.mxu0 0.0
        %3333 = vmatpush1.msra.mxu0 0.0
        %3334 = vmatprep.subr.mxu0 0.0
        %3335 = vmatpush1.msra.mxu0 0.0
        %3336 = vmatprep.subr.mxu0 0.0
        %3337 = vmatpush1.msra.mxu0 0.0
        %3338 = vmatprep.subr.mxu0 0.0
        %3339 = vmatpush1.msra.mxu0 0.0
        %3340 = vmatprep.subr.mxu0 0.0
        %3341 = vmatpush1.msra.mxu0 0.0
        %3342 = vmatprep.subr.mxu0 0.0
        %3343 = vmatpush1.msra.mxu0 0.0
        %3344 = vmatprep.subr.mxu0 0.0
        %3345 = vmatpush1.msra.mxu0 0.0
        %3346 = vmatprep.subr.mxu0 0.0
        %3347 = vmatpush1.msra.mxu0 0.0
        %3348 = vmatprep.subr.mxu0 0.0
        %3349 = vmatpush1.msra.mxu0 0.0
        %3350 = vmatprep.subr.mxu0 0.0
        %3351 = vmatpush1.msra.mxu0 0.0
        %3352 = vmatprep.subr.mxu0 0.0
        %3353 = vmatpush1.msra.mxu0 0.0
        %3354 = vmatprep.subr.mxu0 0.0
        %3355 = vmatpush1.msra.mxu0 0.0
        %3356 = vmatprep.subr.mxu0 0.0
        %3357 = vmatpush1.msra.mxu0 0.0
        %3358 = vmatprep.subr.mxu0 0.0
        %3359 = vmatpush1.msra.mxu0 0.0
        %3360 = vmatprep.subr.mxu0 %v3324
        %3361 = vmatpush1.msra.mxu0 %v3323
        %3362 = vmatprep.subr.mxu0 %v3322
        %3363 = vmatpush1.msra.mxu0 %v3321
        %3364 = vmatprep.subr.mxu0 0.0
        %3365 = vmatpush2.msra.mxu0 0.0
        %3366 = vmatprep.subr.mxu0 0.0
        %3367 = vmatpush2.msra.mxu0 0.0
        %3368 = vmatprep.subr.mxu0 0.0
        %3369 = vmatpush2.msra.mxu0 0.0
        %3370 = vmatprep.subr.mxu0 0.0
        %3371 = vmatpush2.msra.mxu0 0.0
        %3372 = vmatprep.subr.mxu0 0.0
        %3373 = vmatpush2.msra.mxu0 0.0
        %3374 = vmatprep.subr.mxu0 0.0
        %3375 = vmatpush2.msra.mxu0 0.0
        %3376 = vmatprep.subr.mxu0 0.0
        %3377 = vmatpush2.msra.mxu0 0.0
        %3378 = vmatprep.subr.mxu0 0.0
        %3379 = vmatpush2.msra.mxu0 0.0
        %3380 = vmatprep.subr.mxu0 0.0
        %3381 = vmatpush2.msra.mxu0 0.0
        %3382 = vmatprep.subr.mxu0 0.0
        %3383 = vmatpush2.msra.mxu0 0.0
        %3384 = vmatprep.subr.mxu0 0.0
        %3385 = vmatpush2.msra.mxu0 0.0
        %3386 = vmatprep.subr.mxu0 0.0
        %3387 = vmatpush2.msra.mxu0 0.0
        %3388 = vmatprep.subr.mxu0 0.0
        %3389 = vmatpush2.msra.mxu0 0.0
        %3390 = vmatprep.subr.mxu0 0.0
        %3391 = vmatpush2.msra.mxu0 0.0
        %3392 = vmatprep.subr.mxu0 0.0
        %3393 = vmatpush2.msra.mxu0 0.0
        %3394 = vmatprep.subr.mxu0 0.0
        %3395 = vmatpush2.msra.mxu0 0.0
        %3396 = vmatprep.mubr.f32.mxu0 0.0
        %3397 = vmatmul.mubr.f32.gmra.mxu0 %v3330
        %v3398 = vpop.f32.mrf.mxu0
        %v3399 = vadd.f32 0.0, %v3398
        %v3400 = vpop.f32.mrf.mxu0
        %v3401 = vadd.f32 0.0, %v3400
        %3402 = vdwg.mxu0
        %v3403 = vadd.f32 %v3293, %v3399
        %v3404 = vadd.f32 %v3294, %v3401
        %v3405 = vld [vmem:[%s6] sm:$0xff]
        %3407 = vset.pattern.permute.xlu0 0
        %3408 = vperm.xlu0 %3407, %v3405
        %v3409 = vpop.permute.xlu0 %3408
        %v3411 = vadd.f32 %v3403, %v3409
        %v3412 = vadd.f32 %v3404, %v3409
        %v3413 = vmax.f32 %v3411, 0.0
        %v3414 = vmax.f32 %v3412, 0.0
        %3417 = vrot.lane.b32.xlu0 %v3413, 17
        %v3418 = vpop.permute.xlu0 %3417
        %3419 = vrot.lane.b32.xlu0 %v3414, 17
        %v3420 = vpop.permute.xlu0 %3419
        %v3421 = vsel %vm466, %v3418, %v3420
        %v3425 = vsel %vm466, 0.0, %v3418
        %v3426 = vsel %vm466, %v3420, 0.0
        %v3427 = vmul.f32 %v3425, %v434
        %v3428 = vmul.f32 %v3421, %v435
        %v3429 = vld [vmem:[#allocation2] sm:$0xf]
        %s3430 = scalar_lea.vmem [#allocation2], 4
        %v3431 = vld [vmem:[%s3430] sm:$0xf]
        %3434 = vrot.lane.b32.xlu0 %v3425, 127
        %v3435 = vpop.permute.xlu0 %3434
        %3436 = vrot.lane.b32.xlu0 %v3421, 127
        %v3437 = vpop.permute.xlu0 %3436
        %3438 = vrot.lane.b32.xlu0 %v3426, 127
        %v3439 = vpop.permute.xlu0 %3438
        %v3440 = vsel %vm486, %v3435, %v3437
        %v3441 = vsel %vm486, %v3437, %v3439
        %v3445 = vsel %vm1527, %v3431, 0
        %3447 = vmatprep.subr.mxu0 0.0
        %3448 = vmatpush1.msra.mxu0 0.0
        %3449 = vmatprep.subr.mxu0 0.0
        %3450 = vmatpush1.msra.mxu0 0.0
        %3451 = vmatprep.subr.mxu0 0.0
        %3452 = vmatpush1.msra.mxu0 0.0
        %3453 = vmatprep.subr.mxu0 0.0
        %3454 = vmatpush1.msra.mxu0 0.0
        %3455 = vmatprep.subr.mxu0 0.0
        %3456 = vmatpush1.msra.mxu0 0.0
        %3457 = vmatprep.subr.mxu0 0.0
        %3458 = vmatpush1.msra.mxu0 0.0
        %3459 = vmatprep.subr.mxu0 0.0
        %3460 = vmatpush1.msra.mxu0 0.0
        %3461 = vmatprep.subr.mxu0 0.0
        %3462 = vmatpush1.msra.mxu0 0.0
        %3463 = vmatprep.subr.mxu0 0.0
        %3464 = vmatpush1.msra.mxu0 0.0
        %3465 = vmatprep.subr.mxu0 0.0
        %3466 = vmatpush1.msra.mxu0 0.0
        %3467 = vmatprep.subr.mxu0 0.0
        %3468 = vmatpush1.msra.mxu0 0.0
        %3469 = vmatprep.subr.mxu0 0.0
        %3470 = vmatpush1.msra.mxu0 0.0
        %3471 = vmatprep.subr.mxu0 0.0
        %3472 = vmatpush1.msra.mxu0 0.0
        %3473 = vmatprep.subr.mxu0 0.0
        %3474 = vmatpush1.msra.mxu0 0.0
        %3475 = vmatprep.subr.mxu0 0.0
        %3476 = vmatpush1.msra.mxu0 0.0
        %3477 = vmatprep.subr.mxu0 %v3441
        %3478 = vmatpush1.msra.mxu0 %v3440
        %3479 = vmatprep.subr.mxu0 0.0
        %3480 = vmatpush2.msra.mxu0 0.0
        %3481 = vmatprep.subr.mxu0 0.0
        %3482 = vmatpush2.msra.mxu0 0.0
        %3483 = vmatprep.subr.mxu0 0.0
        %3484 = vmatpush2.msra.mxu0 0.0
        %3485 = vmatprep.subr.mxu0 0.0
        %3486 = vmatpush2.msra.mxu0 0.0
        %3487 = vmatprep.subr.mxu0 0.0
        %3488 = vmatpush2.msra.mxu0 0.0
        %3489 = vmatprep.subr.mxu0 0.0
        %3490 = vmatpush2.msra.mxu0 0.0
        %3491 = vmatprep.subr.mxu0 0.0
        %3492 = vmatpush2.msra.mxu0 0.0
        %3493 = vmatprep.subr.mxu0 0.0
        %3494 = vmatpush2.msra.mxu0 0.0
        %3495 = vmatprep.subr.mxu0 0.0
        %3496 = vmatpush2.msra.mxu0 0.0
        %3497 = vmatprep.subr.mxu0 0.0
        %3498 = vmatpush2.msra.mxu0 0.0
        %3499 = vmatprep.subr.mxu0 0.0
        %3500 = vmatpush2.msra.mxu0 0.0
        %3501 = vmatprep.subr.mxu0 0.0
        %3502 = vmatpush2.msra.mxu0 0.0
        %3503 = vmatprep.subr.mxu0 0.0
        %3504 = vmatpush2.msra.mxu0 0.0
        %3505 = vmatprep.subr.mxu0 0.0
        %3506 = vmatpush2.msra.mxu0 0.0
        %3507 = vmatprep.subr.mxu0 0.0
        %3508 = vmatpush2.msra.mxu0 0.0
        %3509 = vmatprep.subr.mxu0 0.0
        %3510 = vmatpush2.msra.mxu0 0.0
        %3511 = vmatprep.mubr.f32.mxu0 0.0
        %3512 = vmatmul.mubr.f32.gmra.mxu0 %v3445
        %v3513 = vpop.f32.mrf.mxu0
        %v3514 = vadd.f32 0.0, %v3513
        %v3515 = vpop.f32.mrf.mxu0
        %v3516 = vadd.f32 0.0, %v3515
        %3517 = vdwg.mxu0
        %v3519 = vsel %vm1527, %v3429, 0
        %3521 = vmatprep.subr.mxu0 0.0
        %3522 = vmatpush1.msra.mxu0 0.0
        %3523 = vmatprep.subr.mxu0 0.0
        %3524 = vmatpush1.msra.mxu0 0.0
        %3525 = vmatprep.subr.mxu0 0.0
        %3526 = vmatpush1.msra.mxu0 0.0
        %3527 = vmatprep.subr.mxu0 0.0
        %3528 = vmatpush1.msra.mxu0 0.0
        %3529 = vmatprep.subr.mxu0 0.0
        %3530 = vmatpush1.msra.mxu0 0.0
        %3531 = vmatprep.subr.mxu0 0.0
        %3532 = vmatpush1.msra.mxu0 0.0
        %3533 = vmatprep.subr.mxu0 0.0
        %3534 = vmatpush1.msra.mxu0 0.0
        %3535 = vmatprep.subr.mxu0 0.0
        %3536 = vmatpush1.msra.mxu0 0.0
        %3537 = vmatprep.subr.mxu0 0.0
        %3538 = vmatpush1.msra.mxu0 0.0
        %3539 = vmatprep.subr.mxu0 0.0
        %3540 = vmatpush1.msra.mxu0 0.0
        %3541 = vmatprep.subr.mxu0 0.0
        %3542 = vmatpush1.msra.mxu0 0.0
        %3543 = vmatprep.subr.mxu0 0.0
        %3544 = vmatpush1.msra.mxu0 0.0
        %3545 = vmatprep.subr.mxu0 0.0
        %3546 = vmatpush1.msra.mxu0 0.0
        %3547 = vmatprep.subr.mxu0 0.0
        %3548 = vmatpush1.msra.mxu0 0.0
        %3549 = vmatprep.subr.mxu0 0.0
        %3550 = vmatpush1.msra.mxu0 0.0
        %3551 = vmatprep.subr.mxu0 %v3428
        %3552 = vmatpush1.msra.mxu0 %v3427
        %3553 = vmatprep.subr.mxu0 0.0
        %3554 = vmatpush2.msra.mxu0 0.0
        %3555 = vmatprep.subr.mxu0 0.0
        %3556 = vmatpush2.msra.mxu0 0.0
        %3557 = vmatprep.subr.mxu0 0.0
        %3558 = vmatpush2.msra.mxu0 0.0
        %3559 = vmatprep.subr.mxu0 0.0
        %3560 = vmatpush2.msra.mxu0 0.0
        %3561 = vmatprep.subr.mxu0 0.0
        %3562 = vmatpush2.msra.mxu0 0.0
        %3563 = vmatprep.subr.mxu0 0.0
        %3564 = vmatpush2.msra.mxu0 0.0
        %3565 = vmatprep.subr.mxu0 0.0
        %3566 = vmatpush2.msra.mxu0 0.0
        %3567 = vmatprep.subr.mxu0 0.0
        %3568 = vmatpush2.msra.mxu0 0.0
        %3569 = vmatprep.subr.mxu0 0.0
        %3570 = vmatpush2.msra.mxu0 0.0
        %3571 = vmatprep.subr.mxu0 0.0
        %3572 = vmatpush2.msra.mxu0 0.0
        %3573 = vmatprep.subr.mxu0 0.0
        %3574 = vmatpush2.msra.mxu0 0.0
        %3575 = vmatprep.subr.mxu0 0.0
        %3576 = vmatpush2.msra.mxu0 0.0
        %3577 = vmatprep.subr.mxu0 0.0
        %3578 = vmatpush2.msra.mxu0 0.0
        %3579 = vmatprep.subr.mxu0 0.0
        %3580 = vmatpush2.msra.mxu0 0.0
        %3581 = vmatprep.subr.mxu0 0.0
        %3582 = vmatpush2.msra.mxu0 0.0
        %3583 = vmatprep.subr.mxu0 0.0
        %3584 = vmatpush2.msra.mxu0 0.0
        %3585 = vmatprep.mubr.f32.mxu0 0.0
        %3586 = vmatmul.mubr.f32.gmra.mxu0 %v3519
        %v3587 = vpop.f32.mrf.mxu0
        %v3588 = vadd.f32 %v3514, %v3587
        %v3589 = vpop.f32.mrf.mxu0
        %v3590 = vadd.f32 %v3516, %v3589
        %3591 = vdwg.mxu0
        %v3592 = vmul.f32 %v3425, %v652
        %v3593 = vmul.f32 %v3421, %v656
        %v3594 = vmul.f32 %v3426, %v654
        %s3595 = scalar_lea.vmem [#allocation2], 8
        %v3596 = vld [vmem:[%s3595] sm:$0xf]
        %3600 = vrot.lane.b32.xlu0 %v3592, 126
        %v3601 = vpop.permute.xlu0 %3600
        %3602 = vrot.lane.b32.xlu0 %v3593, 126
        %v3603 = vpop.permute.xlu0 %3602
        %3604 = vrot.lane.b32.xlu0 %v3594, 126
        %v3605 = vpop.permute.xlu0 %3604
        %v3606 = vsel %vm674, %v3601, %v3603
        %v3607 = vsel %vm674, %v3603, %v3605
        %v3611 = vsel %vm1527, %v3596, 0
        %3613 = vmatprep.subr.mxu0 0.0
        %3614 = vmatpush1.msra.mxu0 0.0
        %3615 = vmatprep.subr.mxu0 0.0
        %3616 = vmatpush1.msra.mxu0 0.0
        %3617 = vmatprep.subr.mxu0 0.0
        %3618 = vmatpush1.msra.mxu0 0.0
        %3619 = vmatprep.subr.mxu0 0.0
        %3620 = vmatpush1.msra.mxu0 0.0
        %3621 = vmatprep.subr.mxu0 0.0
        %3622 = vmatpush1.msra.mxu0 0.0
        %3623 = vmatprep.subr.mxu0 0.0
        %3624 = vmatpush1.msra.mxu0 0.0
        %3625 = vmatprep.subr.mxu0 0.0
        %3626 = vmatpush1.msra.mxu0 0.0
        %3627 = vmatprep.subr.mxu0 0.0
        %3628 = vmatpush1.msra.mxu0 0.0
        %3629 = vmatprep.subr.mxu0 0.0
        %3630 = vmatpush1.msra.mxu0 0.0
        %3631 = vmatprep.subr.mxu0 0.0
        %3632 = vmatpush1.msra.mxu0 0.0
        %3633 = vmatprep.subr.mxu0 0.0
        %3634 = vmatpush1.msra.mxu0 0.0
        %3635 = vmatprep.subr.mxu0 0.0
        %3636 = vmatpush1.msra.mxu0 0.0
        %3637 = vmatprep.subr.mxu0 0.0
        %3638 = vmatpush1.msra.mxu0 0.0
        %3639 = vmatprep.subr.mxu0 0.0
        %3640 = vmatpush1.msra.mxu0 0.0
        %3641 = vmatprep.subr.mxu0 0.0
        %3642 = vmatpush1.msra.mxu0 0.0
        %3643 = vmatprep.subr.mxu0 %v3607
        %3644 = vmatpush1.msra.mxu0 %v3606
        %3645 = vmatprep.subr.mxu0 0.0
        %3646 = vmatpush2.msra.mxu0 0.0
        %3647 = vmatprep.subr.mxu0 0.0
        %3648 = vmatpush2.msra.mxu0 0.0
        %3649 = vmatprep.subr.mxu0 0.0
        %3650 = vmatpush2.msra.mxu0 0.0
        %3651 = vmatprep.subr.mxu0 0.0
        %3652 = vmatpush2.msra.mxu0 0.0
        %3653 = vmatprep.subr.mxu0 0.0
        %3654 = vmatpush2.msra.mxu0 0.0
        %3655 = vmatprep.subr.mxu0 0.0
        %3656 = vmatpush2.msra.mxu0 0.0
        %3657 = vmatprep.subr.mxu0 0.0
        %3658 = vmatpush2.msra.mxu0 0.0
        %3659 = vmatprep.subr.mxu0 0.0
        %3660 = vmatpush2.msra.mxu0 0.0
        %3661 = vmatprep.subr.mxu0 0.0
        %3662 = vmatpush2.msra.mxu0 0.0
        %3663 = vmatprep.subr.mxu0 0.0
        %3664 = vmatpush2.msra.mxu0 0.0
        %3665 = vmatprep.subr.mxu0 0.0
        %3666 = vmatpush2.msra.mxu0 0.0
        %3667 = vmatprep.subr.mxu0 0.0
        %3668 = vmatpush2.msra.mxu0 0.0
        %3669 = vmatprep.subr.mxu0 0.0
        %3670 = vmatpush2.msra.mxu0 0.0
        %3671 = vmatprep.subr.mxu0 0.0
        %3672 = vmatpush2.msra.mxu0 0.0
        %3673 = vmatprep.subr.mxu0 0.0
        %3674 = vmatpush2.msra.mxu0 0.0
        %3675 = vmatprep.subr.mxu0 0.0
        %3676 = vmatpush2.msra.mxu0 0.0
        %3677 = vmatprep.mubr.f32.mxu0 0.0
        %3678 = vmatmul.mubr.f32.gmra.mxu0 %v3611
        %v3679 = vpop.f32.mrf.mxu0
        %v3680 = vadd.f32 0.0, %v3679
        %v3681 = vpop.f32.mrf.mxu0
        %v3682 = vadd.f32 0.0, %v3681
        %3683 = vdwg.mxu0
        %v3684 = vadd.f32 %v3588, %v3680
        %v3685 = vadd.f32 %v3590, %v3682
        %v3686 = vmul.f32 %v3425, %v760
        %v3687 = vmul.f32 %v3421, %v764
        %v3688 = vmul.f32 %v3426, %v762
        %s3689 = scalar_lea.vmem [#allocation2], 12
        %v3690 = vld [vmem:[%s3689] sm:$0xf]
        %3694 = vrot.lane.b32.xlu0 %v3686, 112
        %v3695 = vpop.permute.xlu0 %3694
        %3696 = vrot.lane.b32.xlu0 %v3687, 112
        %v3697 = vpop.permute.xlu0 %3696
        %3698 = vrot.lane.b32.xlu0 %v3688, 112
        %v3699 = vpop.permute.xlu0 %3698
        %v3700 = vsel %vm782, %v3695, %v3697
        %v3701 = vsel %vm782, %v3697, %v3699
        %v3705 = vsel %vm1527, %v3690, 0
        %3707 = vmatprep.subr.mxu0 0.0
        %3708 = vmatpush1.msra.mxu0 0.0
        %3709 = vmatprep.subr.mxu0 0.0
        %3710 = vmatpush1.msra.mxu0 0.0
        %3711 = vmatprep.subr.mxu0 0.0
        %3712 = vmatpush1.msra.mxu0 0.0
        %3713 = vmatprep.subr.mxu0 0.0
        %3714 = vmatpush1.msra.mxu0 0.0
        %3715 = vmatprep.subr.mxu0 0.0
        %3716 = vmatpush1.msra.mxu0 0.0
        %3717 = vmatprep.subr.mxu0 0.0
        %3718 = vmatpush1.msra.mxu0 0.0
        %3719 = vmatprep.subr.mxu0 0.0
        %3720 = vmatpush1.msra.mxu0 0.0
        %3721 = vmatprep.subr.mxu0 0.0
        %3722 = vmatpush1.msra.mxu0 0.0
        %3723 = vmatprep.subr.mxu0 0.0
        %3724 = vmatpush1.msra.mxu0 0.0
        %3725 = vmatprep.subr.mxu0 0.0
        %3726 = vmatpush1.msra.mxu0 0.0
        %3727 = vmatprep.subr.mxu0 0.0
        %3728 = vmatpush1.msra.mxu0 0.0
        %3729 = vmatprep.subr.mxu0 0.0
        %3730 = vmatpush1.msra.mxu0 0.0
        %3731 = vmatprep.subr.mxu0 0.0
        %3732 = vmatpush1.msra.mxu0 0.0
        %3733 = vmatprep.subr.mxu0 0.0
        %3734 = vmatpush1.msra.mxu0 0.0
        %3735 = vmatprep.subr.mxu0 0.0
        %3736 = vmatpush1.msra.mxu0 0.0
        %3737 = vmatprep.subr.mxu0 %v3701
        %3738 = vmatpush1.msra.mxu0 %v3700
        %3739 = vmatprep.subr.mxu0 0.0
        %3740 = vmatpush2.msra.mxu0 0.0
        %3741 = vmatprep.subr.mxu0 0.0
        %3742 = vmatpush2.msra.mxu0 0.0
        %3743 = vmatprep.subr.mxu0 0.0
        %3744 = vmatpush2.msra.mxu0 0.0
        %3745 = vmatprep.subr.mxu0 0.0
        %3746 = vmatpush2.msra.mxu0 0.0
        %3747 = vmatprep.subr.mxu0 0.0
        %3748 = vmatpush2.msra.mxu0 0.0
        %3749 = vmatprep.subr.mxu0 0.0
        %3750 = vmatpush2.msra.mxu0 0.0
        %3751 = vmatprep.subr.mxu0 0.0
        %3752 = vmatpush2.msra.mxu0 0.0
        %3753 = vmatprep.subr.mxu0 0.0
        %3754 = vmatpush2.msra.mxu0 0.0
        %3755 = vmatprep.subr.mxu0 0.0
        %3756 = vmatpush2.msra.mxu0 0.0
        %3757 = vmatprep.subr.mxu0 0.0
        %3758 = vmatpush2.msra.mxu0 0.0
        %3759 = vmatprep.subr.mxu0 0.0
        %3760 = vmatpush2.msra.mxu0 0.0
        %3761 = vmatprep.subr.mxu0 0.0
        %3762 = vmatpush2.msra.mxu0 0.0
        %3763 = vmatprep.subr.mxu0 0.0
        %3764 = vmatpush2.msra.mxu0 0.0
        %3765 = vmatprep.subr.mxu0 0.0
        %3766 = vmatpush2.msra.mxu0 0.0
        %3767 = vmatprep.subr.mxu0 0.0
        %3768 = vmatpush2.msra.mxu0 0.0
        %3769 = vmatprep.subr.mxu0 0.0
        %3770 = vmatpush2.msra.mxu0 0.0
        %3771 = vmatprep.mubr.f32.mxu0 0.0
        %3772 = vmatmul.mubr.f32.gmra.mxu0 %v3705
        %v3773 = vpop.f32.mrf.mxu0
        %v3774 = vadd.f32 0.0, %v3773
        %v3775 = vpop.f32.mrf.mxu0
        %v3776 = vadd.f32 0.0, %v3775
        %3777 = vdwg.mxu0
        %v3778 = vadd.f32 %v3684, %v3774
        %v3779 = vadd.f32 %v3685, %v3776
        %s3780 = scalar_lea.vmem [#allocation2], 16
        %v3781 = vld [vmem:[%s3780] sm:$0xf]
        %3782 = vrot.lane.b32.xlu0 %v3425, 111
        %v3783 = vpop.permute.xlu0 %3782
        %3784 = vrot.lane.b32.xlu0 %v3421, 111
        %v3785 = vpop.permute.xlu0 %3784
        %3786 = vrot.lane.b32.xlu0 %v3426, 111
        %v3787 = vpop.permute.xlu0 %3786
        %v3788 = vsel %vm873, %v3783, %v3785
        %v3789 = vsel %vm873, %v3785, %v3787
        %v3793 = vsel %vm1527, %v3781, 0
        %3795 = vmatprep.subr.mxu0 0.0
        %3796 = vmatpush1.msra.mxu0 0.0
        %3797 = vmatprep.subr.mxu0 0.0
        %3798 = vmatpush1.msra.mxu0 0.0
        %3799 = vmatprep.subr.mxu0 0.0
        %3800 = vmatpush1.msra.mxu0 0.0
        %3801 = vmatprep.subr.mxu0 0.0
        %3802 = vmatpush1.msra.mxu0 0.0
        %3803 = vmatprep.subr.mxu0 0.0
        %3804 = vmatpush1.msra.mxu0 0.0
        %3805 = vmatprep.subr.mxu0 0.0
        %3806 = vmatpush1.msra.mxu0 0.0
        %3807 = vmatprep.subr.mxu0 0.0
        %3808 = vmatpush1.msra.mxu0 0.0
        %3809 = vmatprep.subr.mxu0 0.0
        %3810 = vmatpush1.msra.mxu0 0.0
        %3811 = vmatprep.subr.mxu0 0.0
        %3812 = vmatpush1.msra.mxu0 0.0
        %3813 = vmatprep.subr.mxu0 0.0
        %3814 = vmatpush1.msra.mxu0 0.0
        %3815 = vmatprep.subr.mxu0 0.0
        %3816 = vmatpush1.msra.mxu0 0.0
        %3817 = vmatprep.subr.mxu0 0.0
        %3818 = vmatpush1.msra.mxu0 0.0
        %3819 = vmatprep.subr.mxu0 0.0
        %3820 = vmatpush1.msra.mxu0 0.0
        %3821 = vmatprep.subr.mxu0 0.0
        %3822 = vmatpush1.msra.mxu0 0.0
        %3823 = vmatprep.subr.mxu0 0.0
        %3824 = vmatpush1.msra.mxu0 0.0
        %3825 = vmatprep.subr.mxu0 %v3789
        %3826 = vmatpush1.msra.mxu0 %v3788
        %3827 = vmatprep.subr.mxu0 0.0
        %3828 = vmatpush2.msra.mxu0 0.0
        %3829 = vmatprep.subr.mxu0 0.0
        %3830 = vmatpush2.msra.mxu0 0.0
        %3831 = vmatprep.subr.mxu0 0.0
        %3832 = vmatpush2.msra.mxu0 0.0
        %3833 = vmatprep.subr.mxu0 0.0
        %3834 = vmatpush2.msra.mxu0 0.0
        %3835 = vmatprep.subr.mxu0 0.0
        %3836 = vmatpush2.msra.mxu0 0.0
        %3837 = vmatprep.subr.mxu0 0.0
        %3838 = vmatpush2.msra.mxu0 0.0
        %3839 = vmatprep.subr.mxu0 0.0
        %3840 = vmatpush2.msra.mxu0 0.0
        %3841 = vmatprep.subr.mxu0 0.0
        %3842 = vmatpush2.msra.mxu0 0.0
        %3843 = vmatprep.subr.mxu0 0.0
        %3844 = vmatpush2.msra.mxu0 0.0
        %3845 = vmatprep.subr.mxu0 0.0
        %3846 = vmatpush2.msra.mxu0 0.0
        %3847 = vmatprep.subr.mxu0 0.0
        %3848 = vmatpush2.msra.mxu0 0.0
        %3849 = vmatprep.subr.mxu0 0.0
        %3850 = vmatpush2.msra.mxu0 0.0
        %3851 = vmatprep.subr.mxu0 0.0
        %3852 = vmatpush2.msra.mxu0 0.0
        %3853 = vmatprep.subr.mxu0 0.0
        %3854 = vmatpush2.msra.mxu0 0.0
        %3855 = vmatprep.subr.mxu0 0.0
        %3856 = vmatpush2.msra.mxu0 0.0
        %3857 = vmatprep.subr.mxu0 0.0
        %3858 = vmatpush2.msra.mxu0 0.0
        %3859 = vmatprep.mubr.f32.mxu0 0.0
        %3860 = vmatmul.mubr.f32.gmra.mxu0 %v3793
        %v3861 = vpop.f32.mrf.mxu0
        %v3862 = vadd.f32 0.0, %v3861
        %v3863 = vpop.f32.mrf.mxu0
        %v3864 = vadd.f32 0.0, %v3863
        %3865 = vdwg.mxu0
        %v3866 = vadd.f32 %v3778, %v3862
        %v3867 = vadd.f32 %v3779, %v3864
        %v3868 = vmul.f32 %v3425, %v957
        %v3869 = vmul.f32 %v3421, %v961
        %v3870 = vmul.f32 %v3426, %v959
        %s3871 = scalar_lea.vmem [#allocation2], 20
        %v3872 = vld [vmem:[%s3871] sm:$0xf]
        %3876 = vrot.lane.b32.xlu0 %v3868, 110
        %v3877 = vpop.permute.xlu0 %3876
        %3878 = vrot.lane.b32.xlu0 %v3869, 110
        %v3879 = vpop.permute.xlu0 %3878
        %3880 = vrot.lane.b32.xlu0 %v3870, 110
        %v3881 = vpop.permute.xlu0 %3880
        %v3882 = vsel %vm979, %v3877, %v3879
        %v3883 = vsel %vm979, %v3879, %v3881
        %v3887 = vsel %vm1527, %v3872, 0
        %3889 = vmatprep.subr.mxu0 0.0
        %3890 = vmatpush1.msra.mxu0 0.0
        %3891 = vmatprep.subr.mxu0 0.0
        %3892 = vmatpush1.msra.mxu0 0.0
        %3893 = vmatprep.subr.mxu0 0.0
        %3894 = vmatpush1.msra.mxu0 0.0
        %3895 = vmatprep.subr.mxu0 0.0
        %3896 = vmatpush1.msra.mxu0 0.0
        %3897 = vmatprep.subr.mxu0 0.0
        %3898 = vmatpush1.msra.mxu0 0.0
        %3899 = vmatprep.subr.mxu0 0.0
        %3900 = vmatpush1.msra.mxu0 0.0
        %3901 = vmatprep.subr.mxu0 0.0
        %3902 = vmatpush1.msra.mxu0 0.0
        %3903 = vmatprep.subr.mxu0 0.0
        %3904 = vmatpush1.msra.mxu0 0.0
        %3905 = vmatprep.subr.mxu0 0.0
        %3906 = vmatpush1.msra.mxu0 0.0
        %3907 = vmatprep.subr.mxu0 0.0
        %3908 = vmatpush1.msra.mxu0 0.0
        %3909 = vmatprep.subr.mxu0 0.0
        %3910 = vmatpush1.msra.mxu0 0.0
        %3911 = vmatprep.subr.mxu0 0.0
        %3912 = vmatpush1.msra.mxu0 0.0
        %3913 = vmatprep.subr.mxu0 0.0
        %3914 = vmatpush1.msra.mxu0 0.0
        %3915 = vmatprep.subr.mxu0 0.0
        %3916 = vmatpush1.msra.mxu0 0.0
        %3917 = vmatprep.subr.mxu0 0.0
        %3918 = vmatpush1.msra.mxu0 0.0
        %3919 = vmatprep.subr.mxu0 %v3883
        %3920 = vmatpush1.msra.mxu0 %v3882
        %3921 = vmatprep.subr.mxu0 0.0
        %3922 = vmatpush2.msra.mxu0 0.0
        %3923 = vmatprep.subr.mxu0 0.0
        %3924 = vmatpush2.msra.mxu0 0.0
        %3925 = vmatprep.subr.mxu0 0.0
        %3926 = vmatpush2.msra.mxu0 0.0
        %3927 = vmatprep.subr.mxu0 0.0
        %3928 = vmatpush2.msra.mxu0 0.0
        %3929 = vmatprep.subr.mxu0 0.0
        %3930 = vmatpush2.msra.mxu0 0.0
        %3931 = vmatprep.subr.mxu0 0.0
        %3932 = vmatpush2.msra.mxu0 0.0
        %3933 = vmatprep.subr.mxu0 0.0
        %3934 = vmatpush2.msra.mxu0 0.0
        %3935 = vmatprep.subr.mxu0 0.0
        %3936 = vmatpush2.msra.mxu0 0.0
        %3937 = vmatprep.subr.mxu0 0.0
        %3938 = vmatpush2.msra.mxu0 0.0
        %3939 = vmatprep.subr.mxu0 0.0
        %3940 = vmatpush2.msra.mxu0 0.0
        %3941 = vmatprep.subr.mxu0 0.0
        %3942 = vmatpush2.msra.mxu0 0.0
        %3943 = vmatprep.subr.mxu0 0.0
        %3944 = vmatpush2.msra.mxu0 0.0
        %3945 = vmatprep.subr.mxu0 0.0
        %3946 = vmatpush2.msra.mxu0 0.0
        %3947 = vmatprep.subr.mxu0 0.0
        %3948 = vmatpush2.msra.mxu0 0.0
        %3949 = vmatprep.subr.mxu0 0.0
        %3950 = vmatpush2.msra.mxu0 0.0
        %3951 = vmatprep.subr.mxu0 0.0
        %3952 = vmatpush2.msra.mxu0 0.0
        %3953 = vmatprep.mubr.f32.mxu0 0.0
        %3954 = vmatmul.mubr.f32.gmra.mxu0 %v3887
        %v3955 = vpop.f32.mrf.mxu0
        %v3956 = vadd.f32 0.0, %v3955
        %v3957 = vpop.f32.mrf.mxu0
        %v3958 = vadd.f32 0.0, %v3957
        %3959 = vdwg.mxu0
        %v3960 = vadd.f32 %v3866, %v3956
        %v3961 = vadd.f32 %v3867, %v3958
        %v3962 = vmul.f32 %v3425, %v1063
        %v3963 = vmul.f32 %v3421, %v1067
        %v3964 = vmul.f32 %v3426, %v1065
        %s3965 = scalar_lea.vmem [#allocation2], 24
        %v3966 = vld [vmem:[%s3965] sm:$0xf]
        %3970 = vrot.lane.b32.xlu0 %v3962, 96
        %v3971 = vpop.permute.xlu0 %3970
        %3972 = vrot.lane.b32.xlu0 %v3963, 96
        %v3973 = vpop.permute.xlu0 %3972
        %3974 = vrot.lane.b32.xlu0 %v3964, 96
        %v3975 = vpop.permute.xlu0 %3974
        %v3976 = vsel %vm1085, %v3971, %v3973
        %v3977 = vsel %vm1085, %v3973, %v3975
        %v3981 = vsel %vm1527, %v3966, 0
        %3983 = vmatprep.subr.mxu0 0.0
        %3984 = vmatpush1.msra.mxu0 0.0
        %3985 = vmatprep.subr.mxu0 0.0
        %3986 = vmatpush1.msra.mxu0 0.0
        %3987 = vmatprep.subr.mxu0 0.0
        %3988 = vmatpush1.msra.mxu0 0.0
        %3989 = vmatprep.subr.mxu0 0.0
        %3990 = vmatpush1.msra.mxu0 0.0
        %3991 = vmatprep.subr.mxu0 0.0
        %3992 = vmatpush1.msra.mxu0 0.0
        %3993 = vmatprep.subr.mxu0 0.0
        %3994 = vmatpush1.msra.mxu0 0.0
        %3995 = vmatprep.subr.mxu0 0.0
        %3996 = vmatpush1.msra.mxu0 0.0
        %3997 = vmatprep.subr.mxu0 0.0
        %3998 = vmatpush1.msra.mxu0 0.0
        %3999 = vmatprep.subr.mxu0 0.0
        %4000 = vmatpush1.msra.mxu0 0.0
        %4001 = vmatprep.subr.mxu0 0.0
        %4002 = vmatpush1.msra.mxu0 0.0
        %4003 = vmatprep.subr.mxu0 0.0
        %4004 = vmatpush1.msra.mxu0 0.0
        %4005 = vmatprep.subr.mxu0 0.0
        %4006 = vmatpush1.msra.mxu0 0.0
        %4007 = vmatprep.subr.mxu0 0.0
        %4008 = vmatpush1.msra.mxu0 0.0
        %4009 = vmatprep.subr.mxu0 0.0
        %4010 = vmatpush1.msra.mxu0 0.0
        %4011 = vmatprep.subr.mxu0 0.0
        %4012 = vmatpush1.msra.mxu0 0.0
        %4013 = vmatprep.subr.mxu0 %v3977
        %4014 = vmatpush1.msra.mxu0 %v3976
        %4015 = vmatprep.subr.mxu0 0.0
        %4016 = vmatpush2.msra.mxu0 0.0
        %4017 = vmatprep.subr.mxu0 0.0
        %4018 = vmatpush2.msra.mxu0 0.0
        %4019 = vmatprep.subr.mxu0 0.0
        %4020 = vmatpush2.msra.mxu0 0.0
        %4021 = vmatprep.subr.mxu0 0.0
        %4022 = vmatpush2.msra.mxu0 0.0
        %4023 = vmatprep.subr.mxu0 0.0
        %4024 = vmatpush2.msra.mxu0 0.0
        %4025 = vmatprep.subr.mxu0 0.0
        %4026 = vmatpush2.msra.mxu0 0.0
        %4027 = vmatprep.subr.mxu0 0.0
        %4028 = vmatpush2.msra.mxu0 0.0
        %4029 = vmatprep.subr.mxu0 0.0
        %4030 = vmatpush2.msra.mxu0 0.0
        %4031 = vmatprep.subr.mxu0 0.0
        %4032 = vmatpush2.msra.mxu0 0.0
        %4033 = vmatprep.subr.mxu0 0.0
        %4034 = vmatpush2.msra.mxu0 0.0
        %4035 = vmatprep.subr.mxu0 0.0
        %4036 = vmatpush2.msra.mxu0 0.0
        %4037 = vmatprep.subr.mxu0 0.0
        %4038 = vmatpush2.msra.mxu0 0.0
        %4039 = vmatprep.subr.mxu0 0.0
        %4040 = vmatpush2.msra.mxu0 0.0
        %4041 = vmatprep.subr.mxu0 0.0
        %4042 = vmatpush2.msra.mxu0 0.0
        %4043 = vmatprep.subr.mxu0 0.0
        %4044 = vmatpush2.msra.mxu0 0.0
        %4045 = vmatprep.subr.mxu0 0.0
        %4046 = vmatpush2.msra.mxu0 0.0
        %4047 = vmatprep.mubr.f32.mxu0 0.0
        %4048 = vmatmul.mubr.f32.gmra.mxu0 %v3981
        %v4049 = vpop.f32.mrf.mxu0
        %v4050 = vadd.f32 0.0, %v4049
        %v4051 = vpop.f32.mrf.mxu0
        %v4052 = vadd.f32 0.0, %v4051
        %4053 = vdwg.mxu0
        %v4054 = vadd.f32 %v3960, %v4050
        %v4055 = vadd.f32 %v3961, %v4052
        %s4056 = scalar_lea.vmem [#allocation2], 28
        %v4057 = vld [vmem:[%s4056] sm:$0xf]
        %4058 = vrot.lane.b32.xlu0 %v3425, 95
        %v4059 = vpop.permute.xlu0 %4058
        %4060 = vrot.lane.b32.xlu0 %v3421, 95
        %v4061 = vpop.permute.xlu0 %4060
        %4062 = vrot.lane.b32.xlu0 %v3426, 95
        %v4063 = vpop.permute.xlu0 %4062
        %v4064 = vsel %vm1176, %v4059, %v4061
        %v4065 = vsel %vm1176, %v4061, %v4063
        %v4069 = vsel %vm1527, %v4057, 0
        %4071 = vmatprep.subr.mxu0 0.0
        %4072 = vmatpush1.msra.mxu0 0.0
        %4073 = vmatprep.subr.mxu0 0.0
        %4074 = vmatpush1.msra.mxu0 0.0
        %4075 = vmatprep.subr.mxu0 0.0
        %4076 = vmatpush1.msra.mxu0 0.0
        %4077 = vmatprep.subr.mxu0 0.0
        %4078 = vmatpush1.msra.mxu0 0.0
        %4079 = vmatprep.subr.mxu0 0.0
        %4080 = vmatpush1.msra.mxu0 0.0
        %4081 = vmatprep.subr.mxu0 0.0
        %4082 = vmatpush1.msra.mxu0 0.0
        %4083 = vmatprep.subr.mxu0 0.0
        %4084 = vmatpush1.msra.mxu0 0.0
        %4085 = vmatprep.subr.mxu0 0.0
        %4086 = vmatpush1.msra.mxu0 0.0
        %4087 = vmatprep.subr.mxu0 0.0
        %4088 = vmatpush1.msra.mxu0 0.0
        %4089 = vmatprep.subr.mxu0 0.0
        %4090 = vmatpush1.msra.mxu0 0.0
        %4091 = vmatprep.subr.mxu0 0.0
        %4092 = vmatpush1.msra.mxu0 0.0
        %4093 = vmatprep.subr.mxu0 0.0
        %4094 = vmatpush1.msra.mxu0 0.0
        %4095 = vmatprep.subr.mxu0 0.0
        %4096 = vmatpush1.msra.mxu0 0.0
        %4097 = vmatprep.subr.mxu0 0.0
        %4098 = vmatpush1.msra.mxu0 0.0
        %4099 = vmatprep.subr.mxu0 0.0
        %4100 = vmatpush1.msra.mxu0 0.0
        %4101 = vmatprep.subr.mxu0 %v4065
        %4102 = vmatpush1.msra.mxu0 %v4064
        %4103 = vmatprep.subr.mxu0 0.0
        %4104 = vmatpush2.msra.mxu0 0.0
        %4105 = vmatprep.subr.mxu0 0.0
        %4106 = vmatpush2.msra.mxu0 0.0
        %4107 = vmatprep.subr.mxu0 0.0
        %4108 = vmatpush2.msra.mxu0 0.0
        %4109 = vmatprep.subr.mxu0 0.0
        %4110 = vmatpush2.msra.mxu0 0.0
        %4111 = vmatprep.subr.mxu0 0.0
        %4112 = vmatpush2.msra.mxu0 0.0
        %4113 = vmatprep.subr.mxu0 0.0
        %4114 = vmatpush2.msra.mxu0 0.0
        %4115 = vmatprep.subr.mxu0 0.0
        %4116 = vmatpush2.msra.mxu0 0.0
        %4117 = vmatprep.subr.mxu0 0.0
        %4118 = vmatpush2.msra.mxu0 0.0
        %4119 = vmatprep.subr.mxu0 0.0
        %4120 = vmatpush2.msra.mxu0 0.0
        %4121 = vmatprep.subr.mxu0 0.0
        %4122 = vmatpush2.msra.mxu0 0.0
        %4123 = vmatprep.subr.mxu0 0.0
        %4124 = vmatpush2.msra.mxu0 0.0
        %4125 = vmatprep.subr.mxu0 0.0
        %4126 = vmatpush2.msra.mxu0 0.0
        %4127 = vmatprep.subr.mxu0 0.0
        %4128 = vmatpush2.msra.mxu0 0.0
        %4129 = vmatprep.subr.mxu0 0.0
        %4130 = vmatpush2.msra.mxu0 0.0
        %4131 = vmatprep.subr.mxu0 0.0
        %4132 = vmatpush2.msra.mxu0 0.0
        %4133 = vmatprep.subr.mxu0 0.0
        %4134 = vmatpush2.msra.mxu0 0.0
        %4135 = vmatprep.mubr.f32.mxu0 0.0
        %4136 = vmatmul.mubr.f32.gmra.mxu0 %v4069
        %v4137 = vpop.f32.mrf.mxu0
        %v4138 = vadd.f32 0.0, %v4137
        %v4139 = vpop.f32.mrf.mxu0
        %v4140 = vadd.f32 0.0, %v4139
        %4141 = vdwg.mxu0
        %v4142 = vadd.f32 %v4054, %v4138
        %v4143 = vadd.f32 %v4055, %v4140
        %v4144 = vmul.f32 %v3425, %v1260
        %v4145 = vmul.f32 %v3421, %v1264
        %v4146 = vmul.f32 %v3426, %v1262
        %s4147 = scalar_lea.vmem [#allocation2], 32
        %v4148 = vld [vmem:[%s4147] sm:$0xf]
        %4152 = vrot.lane.b32.xlu0 %v4144, 94
        %v4153 = vpop.permute.xlu0 %4152
        %4154 = vrot.lane.b32.xlu0 %v4145, 94
        %v4155 = vpop.permute.xlu0 %4154
        %4156 = vrot.lane.b32.xlu0 %v4146, 94
        %v4157 = vpop.permute.xlu0 %4156
        %v4158 = vsel %vm1282, %v4153, %v4155
        %v4159 = vsel %vm1282, %v4155, %v4157
        %v4163 = vsel %vm1527, %v4148, 0
        %4165 = vmatprep.subr.mxu0 0.0
        %4166 = vmatpush1.msra.mxu0 0.0
        %4167 = vmatprep.subr.mxu0 0.0
        %4168 = vmatpush1.msra.mxu0 0.0
        %4169 = vmatprep.subr.mxu0 0.0
        %4170 = vmatpush1.msra.mxu0 0.0
        %4171 = vmatprep.subr.mxu0 0.0
        %4172 = vmatpush1.msra.mxu0 0.0
        %4173 = vmatprep.subr.mxu0 0.0
        %4174 = vmatpush1.msra.mxu0 0.0
        %4175 = vmatprep.subr.mxu0 0.0
        %4176 = vmatpush1.msra.mxu0 0.0
        %4177 = vmatprep.subr.mxu0 0.0
        %4178 = vmatpush1.msra.mxu0 0.0
        %4179 = vmatprep.subr.mxu0 0.0
        %4180 = vmatpush1.msra.mxu0 0.0
        %4181 = vmatprep.subr.mxu0 0.0
        %4182 = vmatpush1.msra.mxu0 0.0
        %4183 = vmatprep.subr.mxu0 0.0
        %4184 = vmatpush1.msra.mxu0 0.0
        %4185 = vmatprep.subr.mxu0 0.0
        %4186 = vmatpush1.msra.mxu0 0.0
        %4187 = vmatprep.subr.mxu0 0.0
        %4188 = vmatpush1.msra.mxu0 0.0
        %4189 = vmatprep.subr.mxu0 0.0
        %4190 = vmatpush1.msra.mxu0 0.0
        %4191 = vmatprep.subr.mxu0 0.0
        %4192 = vmatpush1.msra.mxu0 0.0
        %4193 = vmatprep.subr.mxu0 0.0
        %4194 = vmatpush1.msra.mxu0 0.0
        %4195 = vmatprep.subr.mxu0 %v4159
        %4196 = vmatpush1.msra.mxu0 %v4158
        %4197 = vmatprep.subr.mxu0 0.0
        %4198 = vmatpush2.msra.mxu0 0.0
        %4199 = vmatprep.subr.mxu0 0.0
        %4200 = vmatpush2.msra.mxu0 0.0
        %4201 = vmatprep.subr.mxu0 0.0
        %4202 = vmatpush2.msra.mxu0 0.0
        %4203 = vmatprep.subr.mxu0 0.0
        %4204 = vmatpush2.msra.mxu0 0.0
        %4205 = vmatprep.subr.mxu0 0.0
        %4206 = vmatpush2.msra.mxu0 0.0
        %4207 = vmatprep.subr.mxu0 0.0
        %4208 = vmatpush2.msra.mxu0 0.0
        %4209 = vmatprep.subr.mxu0 0.0
        %4210 = vmatpush2.msra.mxu0 0.0
        %4211 = vmatprep.subr.mxu0 0.0
        %4212 = vmatpush2.msra.mxu0 0.0
        %4213 = vmatprep.subr.mxu0 0.0
        %4214 = vmatpush2.msra.mxu0 0.0
        %4215 = vmatprep.subr.mxu0 0.0
        %4216 = vmatpush2.msra.mxu0 0.0
        %4217 = vmatprep.subr.mxu0 0.0
        %4218 = vmatpush2.msra.mxu0 0.0
        %4219 = vmatprep.subr.mxu0 0.0
        %4220 = vmatpush2.msra.mxu0 0.0
        %4221 = vmatprep.subr.mxu0 0.0
        %4222 = vmatpush2.msra.mxu0 0.0
        %4223 = vmatprep.subr.mxu0 0.0
        %4224 = vmatpush2.msra.mxu0 0.0
        %4225 = vmatprep.subr.mxu0 0.0
        %4226 = vmatpush2.msra.mxu0 0.0
        %4227 = vmatprep.subr.mxu0 0.0
        %4228 = vmatpush2.msra.mxu0 0.0
        %4229 = vmatprep.mubr.f32.mxu0 0.0
        %4230 = vmatmul.mubr.f32.gmra.mxu0 %v4163
        %v4231 = vpop.f32.mrf.mxu0
        %v4232 = vadd.f32 0.0, %v4231
        %v4233 = vpop.f32.mrf.mxu0
        %v4234 = vadd.f32 0.0, %v4233
        %4235 = vdwg.mxu0
        %v4236 = vadd.f32 %v4142, %v4232
        %v4237 = vadd.f32 %v4143, %v4234
        %v4238 = vld [vmem:[%s8] sm:$0xf]
        %4240 = vset.pattern.permute.xlu0 0
        %4241 = vperm.xlu0 %4240, %v4238
        %v4242 = vpop.permute.xlu0 %4241
        %v4244 = vadd.f32 %v4236, %v4242
        %v4245 = vadd.f32 %v4237, %v4242
        %v4248 = vcombine.low %v4244, %v4245
        %4250 = vst [vmem:[%s401] sm:$0xff] %v4248
        %p4251 = scmp.lt.s32.totalorder %s23, 1
        %s4252 = scalar_select %p4251, %s23, 1
        %s4253 = smul.addr %s4252, 2
        %s4254 = smul.addr %s4253, 4
        %s4255 = scalar_lea.vmem %s11, %s4254
        // Predicated region
        $region69: #{unet_forward.1} parent=63 // pred_check
          %p4256 = pneg %p277
        $region70: #{unet_forward.1} parent=63 // pred_check_branch
          %4258 = sbr.rel (%p4256) target = $region72
        $region71: #{unet_forward.1} parent=63 // pred_region
          _
        $region72: #{unet_forward.1} parent=63 // pred_fallthru
          _
      $region64: #{unet_forward.1} parent=5 // pred_fallthru
        _
      %p4259 = scmp.le.s32.totalorder 2, %s18
      // Predicated region
      $region73: #{unet_forward.1} parent=5 // pred_check
        %p4260 = pneg %p4259
      $region74: #{unet_forward.1} parent=5 // pred_check_branch
        %4262 = sbr.rel (%p4260) target = $region76
      $region75: #{unet_forward.1} parent=5 // pred_region
        %s4263 = ssub.s32 %s18, 2
        // Predicated region
        $region77: #{unet_forward.1} parent=75 // pred_check
          %p4264 = pneg %p283
        $region78: #{unet_forward.1} parent=75 // pred_check_branch
          %4266 = sbr.rel (%p4264) target = $region80
        $region79: #{unet_forward.1} parent=75 // pred_region
          %p4267 = scmp.lt.s32.totalorder %s24, 1
          %s4268 = scalar_select %p4267, %s24, 1
          %s4269 = smul.addr %s4268, 2
          %s4270 = smul.addr %s4269, 4
          %s4271 = scalar_lea.vmem %s11, %s4270
        $region80: #{unet_forward.1} parent=75 // pred_fallthru
          _
      $region76: #{unet_forward.1} parent=5 // pred_fallthru
        _
    $region6: #{unet_forward.1} parent=1 // loop_footer
      %s22 = sadd.s32 1, %s18
    $region7: #{unet_forward.1} parent=1 // loop_footer_branch
      %17 = sbr.rel target = $region3
    $region8: #{unet_forward.1} parent=1 // loop_exit
      _
    %4272 = vsyncpa [#allocation3], 1
    %s4273 = scalar_lea.sflag [#allocation3], 1
    %4274 = vsyncpa %s4273, 1

</llo_original>
